<compile_context>
chip_gen: v7x
topology: tpu7x:2x2x1
jax: 0.10.0
libtpu: 0.0.40
codegen_flags: <defaults>
</compile_context>

<pallas_src>
import functools
import math

import jax
import jax.numpy as jnp
from jax.experimental import pallas as pl
from jax.experimental.pallas import tpu as pltpu


# ----------------------------- in-kernel helpers -----------------------------

def _layernorm(x, w, b, eps=1e-5):
    mu = jnp.mean(x, axis=-1, keepdims=True)
    xc = x - mu
    var = jnp.mean(xc * xc, axis=-1, keepdims=True)
    return xc * jax.lax.rsqrt(var + eps) * w + b


def _erf(x):
    # Abramowitz & Stegun 7.1.26, |abs err| < 1.5e-7 — built from exp/mul/add/where so the
    # exact-GELU path stays on ops with guaranteed Mosaic lowering (exp uses the EUP slot).
    a1, a2, a3, a4, a5 = 0.254829592, -0.284496736, 1.421413741, -1.453152027, 1.061405429
    p = 0.3275911
    s = jnp.where(x < 0.0, -1.0, 1.0)
    z = jnp.abs(x)
    t = 1.0 / (1.0 + p * z)
    poly = ((((a5 * t + a4) * t + a3) * t + a2) * t + a1) * t
    return s * (1.0 - poly * jnp.exp(-z * z))


def _gelu_exact(x):
    # matches torch.nn.GELU() default (erf-based, not the tanh approximation)
    return 0.5 * x * (1.0 + _erf(x * (1.0 / math.sqrt(2.0))))


# ------------------------- fused transformer kernel --------------------------
# grid = (B // Bb, depth): batch tiles are "parallel" (megacore), depth is the carried
# ("arbitrary") axis.  The (Bb, N, D) activation lives in the resident output block across
# all layers; per-layer bf16 weights stream in with default double buffering.

def _stack_kernel(num_heads,
                  x_ref, wqkv_ref, woutT_ref, bout_ref,
                  ln1w_ref, ln1b_ref, ln2w_ref, ln2b_ref,
                  w1_ref, b1_ref, w2_ref, b2_ref,
                  o_ref):
    layer = pl.program_id(1)

    @pl.when(layer == 0)
    def _():
        o_ref[...] = x_ref[...]            # load the input slab for this batch tile

    Bb, N, D = o_ref.shape
    H = num_heads
    E = D // H
    M = Bb * N
    bf16 = jnp.bfloat16
    f32 = jnp.float32

    x = o_ref[...].reshape(M, D)           # (Bb*N, D) f32, resident across the depth axis

    # ---------------- attention branch: x + Attn(LN1(x)) ----------------
    xn = _layernorm(x, ln1w_ref[0], ln1b_ref[0])
    # single lane-dense QKV projection; 1/sqrt(E) already folded into the Q columns
    qkv = jnp.dot(xn.astype(bf16), wqkv_ref[0],
                  preferred_element_type=f32)                       # (M, 3D) f32 acc
    qkv = qkv.reshape(Bb, N, 3 * D)        # feature order (num_qkv=3, heads, e) per Rearrange

    # per-head logits (contraction over E is inherent to head attention); batch dim = Bb
    scores = []
    for h in range(H):
        qh = qkv[:, :, h * E:(h + 1) * E].astype(bf16)              # (Bb, N, E)
        kh = qkv[:, :, D + h * E:D + (h + 1) * E].astype(bf16)      # (Bb, N, E)
        scores.append(jnp.einsum('bne,bme->bnm', qh, kh,
                                 preferred_element_type=f32))       # (Bb, N, N)

    # softmax over the *heads* axis (nn.Softmax(dim=1)) via a running max / sum
    m = scores[0]
    for h in range(1, H):
        m = jnp.maximum(m, scores[h])
    p = [jnp.exp(s - m) for s in scores]
    denom = p[0]
    for h in range(1, H):
        denom = denom + p[h]
    inv = pl.reciprocal(denom, approx=True)                         # EUP reciprocal

    # attn @ V per head; concatenation along lanes == Rearrange('b h n e -> b n (h e)')
    ctx_heads = []
    for h in range(H):
        ah = (p[h] * inv).astype(bf16)                              # (Bb, N, N)
        vh = qkv[:, :, 2 * D + h * E:2 * D + (h + 1) * E].astype(bf16)
        ctx_heads.append(jnp.einsum('bnm,bme->bne', ah, vh,
                                    preferred_element_type=f32))    # (Bb, N, E)
    ctx = jnp.concatenate(ctx_heads, axis=-1).reshape(M, D)         # (M, D), (h e) order

    # single full-depth output projection
    attn_out = jnp.dot(ctx.astype(bf16), woutT_ref[0],
                       preferred_element_type=f32) + bout_ref[0]
    x1 = x + attn_out

    # ---------------- MLP branch: x + MLP(LN2(x)) ----------------
    xn2 = _layernorm(x1, ln2w_ref[0], ln2b_ref[0])
    h1 = jnp.dot(xn2.astype(bf16), w1_ref[0],
                 preferred_element_type=f32) + b1_ref[0]            # (M, hidden)
    h1 = _gelu_exact(h1)                                            # exact (erf) GELU, f32
    y = x1 + jnp.dot(h1.astype(bf16), w2_ref[0],
                     preferred_element_type=f32) + b2_ref[0]

    o_ref[...] = y.reshape(Bb, N, D)       # carry to next layer (write-back on batch change)


# --------------------------------- wrapper -----------------------------------

def transformer_forward_pallas(x, blocks_params, num_heads, batch_tile=None):
    B, N, D = x.shape
    H = num_heads
    assert D % H == 0
    E = D // H
    depth = len(blocks_params)
    hidden = blocks_params[0]["w1"].shape[0]
    scale = E ** (-0.5)

    if batch_tile is None:
        # amortize per-layer weight DMA over several batch elements per grid step
        batch_tile = next(bb for bb in (8, 4, 2, 1) if B % bb == 0)
    Bb = batch_tile
    assert B % Bb == 0

    def prep(p):
        # torch Linear weight is (out_features, in_features); qkv out-features are ordered
        # (num_qkv=3, heads, e) per the Rearrange.  Fold 1/sqrt(E) into the Q out-features
        # (exact because qkv_bias=False), then pre-transpose so all matmuls are plain A @ B.
        wqkv = p["wqkv"].at[:D].multiply(scale)
        return (
            wqkv.T.astype(jnp.bfloat16),                             # (D, 3D)
            p["wout"].T.astype(jnp.bfloat16),                        # (D, D), rows = (h e)
            p["bout"].reshape(1, D).astype(jnp.float32),
            p["ln1_w"].reshape(1, D), p["ln1_b"].reshape(1, D),
            p["ln2_w"].reshape(1, D), p["ln2_b"].reshape(1, D),
            p["w1"].T.astype(jnp.bfloat16), p["b1"].reshape(1, hidden),
            p["w2"].T.astype(jnp.bfloat16), p["b2"].reshape(1, D),
        )

    prepped = [prep(p) for p in blocks_params]
    stacked = [jnp.stack(parts, axis=0) for parts in zip(*prepped)]  # leading depth axis

    in_specs = [pl.BlockSpec((Bb, N, D), lambda b, d: (b, 0, 0))]
    for a in stacked:
        nd = a.ndim
        in_specs.append(pl.BlockSpec(
            (1,) + a.shape[1:],
            lambda b, d, _nd=nd: (d,) + (0,) * (_nd - 1)))

    kernel = functools.partial(_stack_kernel, H)
    return pl.pallas_call(
        kernel,
        out_shape=jax.ShapeDtypeStruct((B, N, D), jnp.float32),
        grid=(B // Bb, depth),
        in_specs=in_specs,
        out_specs=pl.BlockSpec((Bb, N, D), lambda b, d: (b, 0, 0)),
        compiler_params=pltpu.CompilerParams(
            dimension_semantics=("parallel", "arbitrary"),
            # 48 MiB is safe on all generations (v7x physical VMEM is 64 MiB);
            # on v5e/v6e this can be raised towards ~100 MiB to allow a larger Bb.
            vmem_limit_bytes=48 * 1024 * 1024),
    )(x, *stacked)


# ------------------------- pure-JAX reference (check) -------------------------

def block_forward_ref(x, p, num_heads):
    B, N, D = x.shape
    H = num_heads
    E = D // H

    def ln(y, w, b):
        mu = jnp.mean(y, -1, keepdims=True)
        var = jnp.mean((y - mu) ** 2, -1, keepdims=True)
        return (y - mu) / jnp.sqrt(var + 1e-5) * w + b

    xn = ln(x, p["ln1_w"], p["ln1_b"])
    qkv = xn @ p["wqkv"].T                                           # (B, N, 3D)
    qkv = qkv.reshape(B, N, 3, H, E).transpose(2, 0, 3, 1, 4)        # (3, B, H, N, E)
    q, k, v = qkv[0], qkv[1], qkv[2]
    s = jnp.einsum("bhne,bhme->bhnm", q, k) * (E ** -0.5)
    a = jax.nn.softmax(s, axis=1)                                    # softmax over heads
    ctx = jnp.einsum("bhnm,bhme->bhne", a, v)
    ctx = ctx.transpose(0, 2, 1, 3).reshape(B, N, D)
    x1 = x + ctx @ p["wout"].T + p["bout"]
    xn2 = ln(x1, p["ln2_w"], p["ln2_b"])
    h1 = jax.nn.gelu(xn2 @ p["w1"].T + p["b1"], approximate=False)
    return x1 + h1 @ p["w2"].T + p["b2"]


# --------------------------------- params ------------------------------------

def init_block(key, dim, num_heads, mlp_ratio):
    hidden = dim * mlp_ratio
    ks = list(jax.random.split(key, 11))
    k = iter(ks)

    def lin_w(kk, out_f, in_f):
        bound = 1.0 / math.sqrt(in_f)
        return jax.random.uniform(kk, (out_f, in_f), jnp.float32, -bound, bound)

    return dict(
        ln1_w=1.0 + 0.1 * jax.random.normal(next(k), (dim,), jnp.float32),
        ln1_b=0.1 * jax.random.normal(next(k), (dim,), jnp.float32),
        wqkv=lin_w(next(k), 3 * dim, dim),                 # qkv_bias=False
        wout=lin_w(next(k), dim, dim),
        bout=0.1 * jax.random.normal(next(k), (dim,), jnp.float32),
        ln2_w=1.0 + 0.1 * jax.random.normal(next(k), (dim,), jnp.float32),
        ln2_b=0.1 * jax.random.normal(next(k), (dim,), jnp.float32),
        w1=lin_w(next(k), hidden, dim),
        b1=0.1 * jax.random.normal(next(k), (hidden,), jnp.float32),
        w2=lin_w(next(k), dim, hidden),
        b2=0.1 * jax.random.normal(next(k), (dim,), jnp.float32),
    )


# ----------------------------------- main -------------------------------------

if __name__ == "__main__":
    DEPTH, DIM, HEADS, MLP_RATIO = 2, 32, 8, 4      # head_dim = 4, mlp hidden = 128
    B, N = 2, 8

    key = jax.random.PRNGKey(0)
    kx, kp = jax.random.split(key)
    x = jax.random.normal(kx, (B, N, DIM), jnp.float32)

    blocks_params = []
    for _ in range(DEPTH):
        kp, sub = jax.random.split(kp)
        blocks_params.append(init_block(sub, DIM, HEADS, MLP_RATIO))

    @jax.jit
    def fwd(inp):
        return transformer_forward_pallas(inp, blocks_params, HEADS)

    y = jax.block_until_ready(fwd(x))

    # reference check (pure JAX, exact f32 math)
    y_ref = x
    for p in blocks_params:
        y_ref = block_forward_ref(y_ref, p, HEADS)

    assert y.shape == (B, N, DIM)
    assert bool(jnp.all(jnp.isfinite(y)))
    # Tolerance covers bf16 matmul operands (f32 accumulation), the A&S erf approximation
    # (~1.5e-7) and the approximate EUP reciprocal in the softmax denominator.  Structural
    # bugs (wrong softmax axis, wrong head layout, missing residual) would be O(1).
    max_err = float(jnp.max(jnp.abs(y - y_ref)))
    assert max_err < 5e-2, f"mismatch vs reference: max abs err = {max_err}"

    print("KERNEL_OK")
</pallas_src>

<mosaic_0001>
module attributes {stable_mosaic.version = 11 : i64} {
  func.func @_stack_kernel(%arg0: i32, %arg1: i32, %arg2: memref<2x8x32xf32, #tpu.memory_space<vmem>>, %arg3: memref<1x32x96xbf16, #tpu.memory_space<vmem>>, %arg4: memref<1x32x32xbf16, #tpu.memory_space<vmem>>, %arg5: memref<1x1x32xf32, #tpu.memory_space<vmem>>, %arg6: memref<1x1x32xf32, #tpu.memory_space<vmem>>, %arg7: memref<1x1x32xf32, #tpu.memory_space<vmem>>, %arg8: memref<1x1x32xf32, #tpu.memory_space<vmem>>, %arg9: memref<1x1x32xf32, #tpu.memory_space<vmem>>, %arg10: memref<1x32x128xbf16, #tpu.memory_space<vmem>>, %arg11: memref<1x1x128xf32, #tpu.memory_space<vmem>>, %arg12: memref<1x128x32xbf16, #tpu.memory_space<vmem>>, %arg13: memref<1x1x32xf32, #tpu.memory_space<vmem>>, %arg14: memref<2x8x32xf32, #tpu.memory_space<vmem>>) attributes {dimension_semantics = [#tpu.dimension_semantics<parallel>, #tpu.dimension_semantics<arbitrary>], iteration_bounds = array<i64: 1, 2>, scalar_prefetch = 0 : i64, scratch_operands = 0 : i64, tpu.core_type = #tpu.core_type<tc>, window_params = [{transform_indices = @transform_0, window_bounds = array<i64: 2, 8, 32>}, {transform_indices = @transform_1, window_bounds = array<i64: 1, 32, 96>}, {transform_indices = @transform_2, window_bounds = array<i64: 1, 32, 32>}, {transform_indices = @transform_3, window_bounds = array<i64: 1, 1, 32>}, {transform_indices = @transform_4, window_bounds = array<i64: 1, 1, 32>}, {transform_indices = @transform_5, window_bounds = array<i64: 1, 1, 32>}, {transform_indices = @transform_6, window_bounds = array<i64: 1, 1, 32>}, {transform_indices = @transform_7, window_bounds = array<i64: 1, 1, 32>}, {transform_indices = @transform_8, window_bounds = array<i64: 1, 32, 128>}, {transform_indices = @transform_9, window_bounds = array<i64: 1, 1, 128>}, {transform_indices = @transform_10, window_bounds = array<i64: 1, 128, 32>}, {transform_indices = @transform_11, window_bounds = array<i64: 1, 1, 32>}, {transform_indices = @transform_12, window_bounds = array<i64: 2, 8, 32>}]} {
    %c0_i32 = arith.constant 0 : i32
    %0 = arith.cmpi eq, %arg1, %c0_i32 : i32
    %1 = arith.extui %0 : i1 to i32
    %c0_i32_0 = arith.constant 0 : i32
    %2 = arith.cmpi ne, %1, %c0_i32_0 : i32
    scf.if %2 {
      %c0_84 = arith.constant 0 : index
      %c0_85 = arith.constant 0 : index
      %c0_86 = arith.constant 0 : index
      %240 = vector.load %arg2[%c0_84, %c0_85, %c0_86] : memref<2x8x32xf32, #tpu.memory_space<vmem>>, vector<2x8x32xf32>
      %c0_87 = arith.constant 0 : index
      %c0_88 = arith.constant 0 : index
      %c0_89 = arith.constant 0 : index
      %241 = vector.load %arg14[%c0_87, %c0_88, %c0_89] : memref<2x8x32xf32, #tpu.memory_space<vmem>>, vector<2x8x32xf32>
      tpu.vector_store %arg14[%c0_87, %c0_88, %c0_89], %240 {strides = array<i32>} : memref<2x8x32xf32, #tpu.memory_space<vmem>>, vector<2x8x32xf32>,
    } else {
    }
    %c0 = arith.constant 0 : index
    %c0_1 = arith.constant 0 : index
    %c0_2 = arith.constant 0 : index
    %3 = vector.load %arg14[%c0, %c0_1, %c0_2] : memref<2x8x32xf32, #tpu.memory_space<vmem>>, vector<2x8x32xf32>
    %4 = vector.shape_cast %3 : vector<2x8x32xf32> to vector<16x32xf32>
    %c0_3 = arith.constant 0 : index
    %c0_4 = arith.constant 0 : index
    %c0_5 = arith.constant 0 : index
    %5 = vector.load %arg6[%c0_3, %c0_4, %c0_5] : memref<1x1x32xf32, #tpu.memory_space<vmem>>, vector<1x1x32xf32>
    %6 = vector.shape_cast %5 : vector<1x1x32xf32> to vector<1x32xf32>
    %c0_6 = arith.constant 0 : index
    %c0_7 = arith.constant 0 : index
    %c0_8 = arith.constant 0 : index
    %7 = vector.load %arg7[%c0_6, %c0_7, %c0_8] : memref<1x1x32xf32, #tpu.memory_space<vmem>>, vector<1x1x32xf32>
    %8 = vector.shape_cast %7 : vector<1x1x32xf32> to vector<1x32xf32>
    %cst = arith.constant dense<0.000000e+00> : vector<16xf32>
    %9 = vector.multi_reduction <add>, %4, %cst [1] : vector<16x32xf32> to vector<16xf32>
    %10 = vector.shape_cast %9 : vector<16xf32> to vector<16x1xf32>
    %cst_9 = arith.constant 3.200000e+01 : f32
    %11 = vector.broadcast %cst_9 : f32 to vector<16x1xf32>
    %12 = arith.divf %10, %11 : vector<16x1xf32>
    %13 = vector.broadcast %12 : vector<16x1xf32> to vector<16x32xf32>
    %14 = arith.subf %4, %13 : vector<16x32xf32>
    %15 = arith.mulf %14, %14 : vector<16x32xf32>
    %cst_10 = arith.constant dense<0.000000e+00> : vector<16xf32>
    %16 = vector.multi_reduction <add>, %15, %cst_10 [1] : vector<16x32xf32> to vector<16xf32>
    %17 = vector.shape_cast %16 : vector<16xf32> to vector<16x1xf32>
    %cst_11 = arith.constant 3.200000e+01 : f32
    %18 = vector.broadcast %cst_11 : f32 to vector<16x1xf32>
    %19 = arith.divf %17, %18 : vector<16x1xf32>
    %cst_12 = arith.constant 9.99999974E-6 : f32
    %20 = vector.broadcast %cst_12 : f32 to vector<16x1xf32>
    %21 = arith.addf %19, %20 : vector<16x1xf32>
    %22 = math.rsqrt %21 : vector<16x1xf32>
    %23 = vector.broadcast %22 : vector<16x1xf32> to vector<16x32xf32>
    %24 = arith.mulf %14, %23 : vector<16x32xf32>
    %25 = vector.broadcast %6 : vector<1x32xf32> to vector<16x32xf32>
    %26 = arith.mulf %24, %25 : vector<16x32xf32>
    %27 = vector.broadcast %8 : vector<1x32xf32> to vector<16x32xf32>
    %28 = arith.addf %26, %27 : vector<16x32xf32>
    %29 = arith.truncf %28 : vector<16x32xf32> to vector<16x32xbf16>
    %c0_13 = arith.constant 0 : index
    %c0_14 = arith.constant 0 : index
    %c0_15 = arith.constant 0 : index
    %30 = vector.load %arg3[%c0_13, %c0_14, %c0_15] : memref<1x32x96xbf16, #tpu.memory_space<vmem>>, vector<1x32x96xbf16>
    %31 = vector.shape_cast %30 : vector<1x32x96xbf16> to vector<32x96xbf16>
    %cst_16 = arith.constant dense<0.000000e+00> : vector<16x96xf32>
    %32 = tpu.matmul %29, %31, %cst_16 {dimension_numbers = #tpu.dot_dimension_numbers<[1], [0], [0], [1], [0, 0, 1, 1], [], []>} : vector<16x32xbf16>, vector<32x96xbf16>, vector<16x96xf32> -> vector<16x96xf32>
    %33 = vector.shape_cast %32 : vector<16x96xf32> to vector<2x8x96xf32>
    %34 = vector.extract_strided_slice %33 {offsets = [0, 0, 0], sizes = [2, 8, 4], strides = [1, 1, 1]} : vector<2x8x96xf32> to vector<2x8x4xf32>
    %35 = arith.truncf %34 : vector<2x8x4xf32> to vector<2x8x4xbf16>
    %36 = vector.extract_strided_slice %33 {offsets = [0, 0, 32], sizes = [2, 8, 4], strides = [1, 1, 1]} : vector<2x8x96xf32> to vector<2x8x4xf32>
    %37 = arith.truncf %36 : vector<2x8x4xf32> to vector<2x8x4xbf16>
    "tpu.trace_start"() <{level = 10 : i32, message = "bne,bme->bnm"}> : () -> ()
    %cst_17 = arith.constant dense<0.000000e+00> : vector<2x8x8xf32>
    %38 = tpu.matmul %35, %37, %cst_17 {dimension_numbers = #tpu.dot_dimension_numbers<[2], [2], [1], [1], [0, 0, 0, 1, 1, 1], [0], [0]>} : vector<2x8x4xbf16>, vector<2x8x4xbf16>, vector<2x8x8xf32> -> vector<2x8x8xf32>
    "tpu.trace_stop"() : () -> ()
    %39 = vector.extract_strided_slice %33 {offsets = [0, 0, 4], sizes = [2, 8, 4], strides = [1, 1, 1]} : vector<2x8x96xf32> to vector<2x8x4xf32>
    %40 = arith.truncf %39 : vector<2x8x4xf32> to vector<2x8x4xbf16>
    %41 = vector.extract_strided_slice %33 {offsets = [0, 0, 36], sizes = [2, 8, 4], strides = [1, 1, 1]} : vector<2x8x96xf32> to vector<2x8x4xf32>
    %42 = arith.truncf %41 : vector<2x8x4xf32> to vector<2x8x4xbf16>
    "tpu.trace_start"() <{level = 10 : i32, message = "bne,bme->bnm"}> : () -> ()
    %cst_18 = arith.constant dense<0.000000e+00> : vector<2x8x8xf32>
    %43 = tpu.matmul %40, %42, %cst_18 {dimension_numbers = #tpu.dot_dimension_numbers<[2], [2], [1], [1], [0, 0, 0, 1, 1, 1], [0], [0]>} : vector<2x8x4xbf16>, vector<2x8x4xbf16>, vector<2x8x8xf32> -> vector<2x8x8xf32>
    "tpu.trace_stop"() : () -> ()
    %44 = vector.extract_strided_slice %33 {offsets = [0, 0, 8], sizes = [2, 8, 4], strides = [1, 1, 1]} : vector<2x8x96xf32> to vector<2x8x4xf32>
    %45 = arith.truncf %44 : vector<2x8x4xf32> to vector<2x8x4xbf16>
    %46 = vector.extract_strided_slice %33 {offsets = [0, 0, 40], sizes = [2, 8, 4], strides = [1, 1, 1]} : vector<2x8x96xf32> to vector<2x8x4xf32>
    %47 = arith.truncf %46 : vector<2x8x4xf32> to vector<2x8x4xbf16>
    "tpu.trace_start"() <{level = 10 : i32, message = "bne,bme->bnm"}> : () -> ()
    %cst_19 = arith.constant dense<0.000000e+00> : vector<2x8x8xf32>
    %48 = tpu.matmul %45, %47, %cst_19 {dimension_numbers = #tpu.dot_dimension_numbers<[2], [2], [1], [1], [0, 0, 0, 1, 1, 1], [0], [0]>} : vector<2x8x4xbf16>, vector<2x8x4xbf16>, vector<2x8x8xf32> -> vector<2x8x8xf32>
    "tpu.trace_stop"() : () -> ()
    %49 = vector.extract_strided_slice %33 {offsets = [0, 0, 12], sizes = [2, 8, 4], strides = [1, 1, 1]} : vector<2x8x96xf32> to vector<2x8x4xf32>
    %50 = arith.truncf %49 : vector<2x8x4xf32> to vector<2x8x4xbf16>
    %51 = vector.extract_strided_slice %33 {offsets = [0, 0, 44], sizes = [2, 8, 4], strides = [1, 1, 1]} : vector<2x8x96xf32> to vector<2x8x4xf32>
    %52 = arith.truncf %51 : vector<2x8x4xf32> to vector<2x8x4xbf16>
    "tpu.trace_start"() <{level = 10 : i32, message = "bne,bme->bnm"}> : () -> ()
    %cst_20 = arith.constant dense<0.000000e+00> : vector<2x8x8xf32>
    %53 = tpu.matmul %50, %52, %cst_20 {dimension_numbers = #tpu.dot_dimension_numbers<[2], [2], [1], [1], [0, 0, 0, 1, 1, 1], [0], [0]>} : vector<2x8x4xbf16>, vector<2x8x4xbf16>, vector<2x8x8xf32> -> vector<2x8x8xf32>
    "tpu.trace_stop"() : () -> ()
    %54 = vector.extract_strided_slice %33 {offsets = [0, 0, 16], sizes = [2, 8, 4], strides = [1, 1, 1]} : vector<2x8x96xf32> to vector<2x8x4xf32>
    %55 = arith.truncf %54 : vector<2x8x4xf32> to vector<2x8x4xbf16>
    %56 = vector.extract_strided_slice %33 {offsets = [0, 0, 48], sizes = [2, 8, 4], strides = [1, 1, 1]} : vector<2x8x96xf32> to vector<2x8x4xf32>
    %57 = arith.truncf %56 : vector<2x8x4xf32> to vector<2x8x4xbf16>
    "tpu.trace_start"() <{level = 10 : i32, message = "bne,bme->bnm"}> : () -> ()
    %cst_21 = arith.constant dense<0.000000e+00> : vector<2x8x8xf32>
    %58 = tpu.matmul %55, %57, %cst_21 {dimension_numbers = #tpu.dot_dimension_numbers<[2], [2], [1], [1], [0, 0, 0, 1, 1, 1], [0], [0]>} : vector<2x8x4xbf16>, vector<2x8x4xbf16>, vector<2x8x8xf32> -> vector<2x8x8xf32>
    "tpu.trace_stop"() : () -> ()
    %59 = vector.extract_strided_slice %33 {offsets = [0, 0, 20], sizes = [2, 8, 4], strides = [1, 1, 1]} : vector<2x8x96xf32> to vector<2x8x4xf32>
    %60 = arith.truncf %59 : vector<2x8x4xf32> to vector<2x8x4xbf16>
    %61 = vector.extract_strided_slice %33 {offsets = [0, 0, 52], sizes = [2, 8, 4], strides = [1, 1, 1]} : vector<2x8x96xf32> to vector<2x8x4xf32>
    %62 = arith.truncf %61 : vector<2x8x4xf32> to vector<2x8x4xbf16>
    "tpu.trace_start"() <{level = 10 : i32, message = "bne,bme->bnm"}> : () -> ()
    %cst_22 = arith.constant dense<0.000000e+00> : vector<2x8x8xf32>
    %63 = tpu.matmul %60, %62, %cst_22 {dimension_numbers = #tpu.dot_dimension_numbers<[2], [2], [1], [1], [0, 0, 0, 1, 1, 1], [0], [0]>} : vector<2x8x4xbf16>, vector<2x8x4xbf16>, vector<2x8x8xf32> -> vector<2x8x8xf32>
    "tpu.trace_stop"() : () -> ()
    %64 = vector.extract_strided_slice %33 {offsets = [0, 0, 24], sizes = [2, 8, 4], strides = [1, 1, 1]} : vector<2x8x96xf32> to vector<2x8x4xf32>
    %65 = arith.truncf %64 : vector<2x8x4xf32> to vector<2x8x4xbf16>
    %66 = vector.extract_strided_slice %33 {offsets = [0, 0, 56], sizes = [2, 8, 4], strides = [1, 1, 1]} : vector<2x8x96xf32> to vector<2x8x4xf32>
    %67 = arith.truncf %66 : vector<2x8x4xf32> to vector<2x8x4xbf16>
    "tpu.trace_start"() <{level = 10 : i32, message = "bne,bme->bnm"}> : () -> ()
    %cst_23 = arith.constant dense<0.000000e+00> : vector<2x8x8xf32>
    %68 = tpu.matmul %65, %67, %cst_23 {dimension_numbers = #tpu.dot_dimension_numbers<[2], [2], [1], [1], [0, 0, 0, 1, 1, 1], [0], [0]>} : vector<2x8x4xbf16>, vector<2x8x4xbf16>, vector<2x8x8xf32> -> vector<2x8x8xf32>
    "tpu.trace_stop"() : () -> ()
    %69 = vector.extract_strided_slice %33 {offsets = [0, 0, 28], sizes = [2, 8, 4], strides = [1, 1, 1]} : vector<2x8x96xf32> to vector<2x8x4xf32>
    %70 = arith.truncf %69 : vector<2x8x4xf32> to vector<2x8x4xbf16>
    %71 = vector.extract_strided_slice %33 {offsets = [0, 0, 60], sizes = [2, 8, 4], strides = [1, 1, 1]} : vector<2x8x96xf32> to vector<2x8x4xf32>
    %72 = arith.truncf %71 : vector<2x8x4xf32> to vector<2x8x4xbf16>
    "tpu.trace_start"() <{level = 10 : i32, message = "bne,bme->bnm"}> : () -> ()
    %cst_24 = arith.constant dense<0.000000e+00> : vector<2x8x8xf32>
    %73 = tpu.matmul %70, %72, %cst_24 {dimension_numbers = #tpu.dot_dimension_numbers<[2], [2], [1], [1], [0, 0, 0, 1, 1, 1], [0], [0]>} : vector<2x8x4xbf16>, vector<2x8x4xbf16>, vector<2x8x8xf32> -> vector<2x8x8xf32>
    "tpu.trace_stop"() : () -> ()
    %74 = arith.maximumf %38, %43 : vector<2x8x8xf32>
    %75 = arith.maximumf %74, %48 : vector<2x8x8xf32>
    %76 = arith.maximumf %75, %53 : vector<2x8x8xf32>
    %77 = arith.maximumf %76, %58 : vector<2x8x8xf32>
    %78 = arith.maximumf %77, %63 : vector<2x8x8xf32>
    %79 = arith.maximumf %78, %68 : vector<2x8x8xf32>
    %80 = arith.maximumf %79, %73 : vector<2x8x8xf32>
    %81 = arith.subf %38, %80 : vector<2x8x8xf32>
    %82 = math.exp %81 : vector<2x8x8xf32>
    %83 = arith.subf %43, %80 : vector<2x8x8xf32>
    %84 = math.exp %83 : vector<2x8x8xf32>
    %85 = arith.subf %48, %80 : vector<2x8x8xf32>
    %86 = math.exp %85 : vector<2x8x8xf32>
    %87 = arith.subf %53, %80 : vector<2x8x8xf32>
    %88 = math.exp %87 : vector<2x8x8xf32>
    %89 = arith.subf %58, %80 : vector<2x8x8xf32>
    %90 = math.exp %89 : vector<2x8x8xf32>
    %91 = arith.subf %63, %80 : vector<2x8x8xf32>
    %92 = math.exp %91 : vector<2x8x8xf32>
    %93 = arith.subf %68, %80 : vector<2x8x8xf32>
    %94 = math.exp %93 : vector<2x8x8xf32>
    %95 = arith.subf %73, %80 : vector<2x8x8xf32>
    %96 = math.exp %95 : vector<2x8x8xf32>
    %97 = arith.addf %82, %84 : vector<2x8x8xf32>
    %98 = arith.addf %97, %86 : vector<2x8x8xf32>
    %99 = arith.addf %98, %88 : vector<2x8x8xf32>
    %100 = arith.addf %99, %90 : vector<2x8x8xf32>
    %101 = arith.addf %100, %92 : vector<2x8x8xf32>
    %102 = arith.addf %101, %94 : vector<2x8x8xf32>
    %103 = arith.addf %102, %96 : vector<2x8x8xf32>
    %104 = tpu.reciprocal %103 {approx = true} : vector<2x8x8xf32> -> vector<2x8x8xf32>
    %105 = arith.mulf %82, %104 : vector<2x8x8xf32>
    %106 = arith.truncf %105 : vector<2x8x8xf32> to vector<2x8x8xbf16>
    %107 = vector.extract_strided_slice %33 {offsets = [0, 0, 64], sizes = [2, 8, 4], strides = [1, 1, 1]} : vector<2x8x96xf32> to vector<2x8x4xf32>
    %108 = arith.truncf %107 : vector<2x8x4xf32> to vector<2x8x4xbf16>
    "tpu.trace_start"() <{level = 10 : i32, message = "bnm,bme->bne"}> : () -> ()
    %cst_25 = arith.constant dense<0.000000e+00> : vector<2x8x4xf32>
    %109 = tpu.matmul %106, %108, %cst_25 {dimension_numbers = #tpu.dot_dimension_numbers<[2], [1], [1], [2], [0, 0, 0, 1, 1, 2], [0], [0]>} : vector<2x8x8xbf16>, vector<2x8x4xbf16>, vector<2x8x4xf32> -> vector<2x8x4xf32>
    "tpu.trace_stop"() : () -> ()
    %110 = arith.mulf %84, %104 : vector<2x8x8xf32>
    %111 = arith.truncf %110 : vector<2x8x8xf32> to vector<2x8x8xbf16>
    %112 = vector.extract_strided_slice %33 {offsets = [0, 0, 68], sizes = [2, 8, 4], strides = [1, 1, 1]} : vector<2x8x96xf32> to vector<2x8x4xf32>
    %113 = arith.truncf %112 : vector<2x8x4xf32> to vector<2x8x4xbf16>
    "tpu.trace_start"() <{level = 10 : i32, message = "bnm,bme->bne"}> : () -> ()
    %cst_26 = arith.constant dense<0.000000e+00> : vector<2x8x4xf32>
    %114 = tpu.matmul %111, %113, %cst_26 {dimension_numbers = #tpu.dot_dimension_numbers<[2], [1], [1], [2], [0, 0, 0, 1, 1, 2], [0], [0]>} : vector<2x8x8xbf16>, vector<2x8x4xbf16>, vector<2x8x4xf32> -> vector<2x8x4xf32>
    "tpu.trace_stop"() : () -> ()
    %115 = arith.mulf %86, %104 : vector<2x8x8xf32>
    %116 = arith.truncf %115 : vector<2x8x8xf32> to vector<2x8x8xbf16>
    %117 = vector.extract_strided_slice %33 {offsets = [0, 0, 72], sizes = [2, 8, 4], strides = [1, 1, 1]} : vector<2x8x96xf32> to vector<2x8x4xf32>
    %118 = arith.truncf %117 : vector<2x8x4xf32> to vector<2x8x4xbf16>
    "tpu.trace_start"() <{level = 10 : i32, message = "bnm,bme->bne"}> : () -> ()
    %cst_27 = arith.constant dense<0.000000e+00> : vector<2x8x4xf32>
    %119 = tpu.matmul %116, %118, %cst_27 {dimension_numbers = #tpu.dot_dimension_numbers<[2], [1], [1], [2], [0, 0, 0, 1, 1, 2], [0], [0]>} : vector<2x8x8xbf16>, vector<2x8x4xbf16>, vector<2x8x4xf32> -> vector<2x8x4xf32>
    "tpu.trace_stop"() : () -> ()
    %120 = arith.mulf %88, %104 : vector<2x8x8xf32>
    %121 = arith.truncf %120 : vector<2x8x8xf32> to vector<2x8x8xbf16>
    %122 = vector.extract_strided_slice %33 {offsets = [0, 0, 76], sizes = [2, 8, 4], strides = [1, 1, 1]} : vector<2x8x96xf32> to vector<2x8x4xf32>
    %123 = arith.truncf %122 : vector<2x8x4xf32> to vector<2x8x4xbf16>
    "tpu.trace_start"() <{level = 10 : i32, message = "bnm,bme->bne"}> : () -> ()
    %cst_28 = arith.constant dense<0.000000e+00> : vector<2x8x4xf32>
    %124 = tpu.matmul %121, %123, %cst_28 {dimension_numbers = #tpu.dot_dimension_numbers<[2], [1], [1], [2], [0, 0, 0, 1, 1, 2], [0], [0]>} : vector<2x8x8xbf16>, vector<2x8x4xbf16>, vector<2x8x4xf32> -> vector<2x8x4xf32>
    "tpu.trace_stop"() : () -> ()
    %125 = arith.mulf %90, %104 : vector<2x8x8xf32>
    %126 = arith.truncf %125 : vector<2x8x8xf32> to vector<2x8x8xbf16>
    %127 = vector.extract_strided_slice %33 {offsets = [0, 0, 80], sizes = [2, 8, 4], strides = [1, 1, 1]} : vector<2x8x96xf32> to vector<2x8x4xf32>
    %128 = arith.truncf %127 : vector<2x8x4xf32> to vector<2x8x4xbf16>
    "tpu.trace_start"() <{level = 10 : i32, message = "bnm,bme->bne"}> : () -> ()
    %cst_29 = arith.constant dense<0.000000e+00> : vector<2x8x4xf32>
    %129 = tpu.matmul %126, %128, %cst_29 {dimension_numbers = #tpu.dot_dimension_numbers<[2], [1], [1], [2], [0, 0, 0, 1, 1, 2], [0], [0]>} : vector<2x8x8xbf16>, vector<2x8x4xbf16>, vector<2x8x4xf32> -> vector<2x8x4xf32>
    "tpu.trace_stop"() : () -> ()
    %130 = arith.mulf %92, %104 : vector<2x8x8xf32>
    %131 = arith.truncf %130 : vector<2x8x8xf32> to vector<2x8x8xbf16>
    %132 = vector.extract_strided_slice %33 {offsets = [0, 0, 84], sizes = [2, 8, 4], strides = [1, 1, 1]} : vector<2x8x96xf32> to vector<2x8x4xf32>
    %133 = arith.truncf %132 : vector<2x8x4xf32> to vector<2x8x4xbf16>
    "tpu.trace_start"() <{level = 10 : i32, message = "bnm,bme->bne"}> : () -> ()
    %cst_30 = arith.constant dense<0.000000e+00> : vector<2x8x4xf32>
    %134 = tpu.matmul %131, %133, %cst_30 {dimension_numbers = #tpu.dot_dimension_numbers<[2], [1], [1], [2], [0, 0, 0, 1, 1, 2], [0], [0]>} : vector<2x8x8xbf16>, vector<2x8x4xbf16>, vector<2x8x4xf32> -> vector<2x8x4xf32>
    "tpu.trace_stop"() : () -> ()
    %135 = arith.mulf %94, %104 : vector<2x8x8xf32>
    %136 = arith.truncf %135 : vector<2x8x8xf32> to vector<2x8x8xbf16>
    %137 = vector.extract_strided_slice %33 {offsets = [0, 0, 88], sizes = [2, 8, 4], strides = [1, 1, 1]} : vector<2x8x96xf32> to vector<2x8x4xf32>
    %138 = arith.truncf %137 : vector<2x8x4xf32> to vector<2x8x4xbf16>
    "tpu.trace_start"() <{level = 10 : i32, message = "bnm,bme->bne"}> : () -> ()
    %cst_31 = arith.constant dense<0.000000e+00> : vector<2x8x4xf32>
    %139 = tpu.matmul %136, %138, %cst_31 {dimension_numbers = #tpu.dot_dimension_numbers<[2], [1], [1], [2], [0, 0, 0, 1, 1, 2], [0], [0]>} : vector<2x8x8xbf16>, vector<2x8x4xbf16>, vector<2x8x4xf32> -> vector<2x8x4xf32>
    "tpu.trace_stop"() : () -> ()
    %140 = arith.mulf %96, %104 : vector<2x8x8xf32>
    %141 = arith.truncf %140 : vector<2x8x8xf32> to vector<2x8x8xbf16>
    %142 = vector.extract_strided_slice %33 {offsets = [0, 0, 92], sizes = [2, 8, 4], strides = [1, 1, 1]} : vector<2x8x96xf32> to vector<2x8x4xf32>
    %143 = arith.truncf %142 : vector<2x8x4xf32> to vector<2x8x4xbf16>
    "tpu.trace_start"() <{level = 10 : i32, message = "bnm,bme->bne"}> : () -> ()
    %cst_32 = arith.constant dense<0.000000e+00> : vector<2x8x4xf32>
    %144 = tpu.matmul %141, %143, %cst_32 {dimension_numbers = #tpu.dot_dimension_numbers<[2], [1], [1], [2], [0, 0, 0, 1, 1, 2], [0], [0]>} : vector<2x8x8xbf16>, vector<2x8x4xbf16>, vector<2x8x4xf32> -> vector<2x8x4xf32>
    "tpu.trace_stop"() : () -> ()
    %145 = tpu.concatenate %109, %114, %119, %124, %129, %134, %139, %144 in 2 : vector<2x8x4xf32>, vector<2x8x4xf32>, vector<2x8x4xf32>, vector<2x8x4xf32>, vector<2x8x4xf32>, vector<2x8x4xf32>, vector<2x8x4xf32>, vector<2x8x4xf32> -> vector<2x8x32xf32>
    %146 = vector.shape_cast %145 : vector<2x8x32xf32> to vector<16x32xf32>
    %147 = arith.truncf %146 : vector<16x32xf32> to vector<16x32xbf16>
    %c0_33 = arith.constant 0 : index
    %c0_34 = arith.constant 0 : index
    %c0_35 = arith.constant 0 : index
    %148 = vector.load %arg4[%c0_33, %c0_34, %c0_35] : memref<1x32x32xbf16, #tpu.memory_space<vmem>>, vector<1x32x32xbf16>
    %149 = vector.shape_cast %148 : vector<1x32x32xbf16> to vector<32x32xbf16>
    %cst_36 = arith.constant dense<0.000000e+00> : vector<16x32xf32>
    %150 = tpu.matmul %147, %149, %cst_36 {dimension_numbers = #tpu.dot_dimension_numbers<[1], [0], [0], [1], [0, 0, 1, 1], [], []>} : vector<16x32xbf16>, vector<32x32xbf16>, vector<16x32xf32> -> vector<16x32xf32>
    %c0_37 = arith.constant 0 : index
    %c0_38 = arith.constant 0 : index
    %c0_39 = arith.constant 0 : index
    %151 = vector.load %arg5[%c0_37, %c0_38, %c0_39] : memref<1x1x32xf32, #tpu.memory_space<vmem>>, vector<1x1x32xf32>
    %152 = vector.shape_cast %151 : vector<1x1x32xf32> to vector<1x32xf32>
    %153 = vector.broadcast %152 : vector<1x32xf32> to vector<16x32xf32>
    %154 = arith.addf %150, %153 : vector<16x32xf32>
    %155 = arith.addf %4, %154 : vector<16x32xf32>
    %c0_40 = arith.constant 0 : index
    %c0_41 = arith.constant 0 : index
    %c0_42 = arith.constant 0 : index
    %156 = vector.load %arg8[%c0_40, %c0_41, %c0_42] : memref<1x1x32xf32, #tpu.memory_space<vmem>>, vector<1x1x32xf32>
    %157 = vector.shape_cast %156 : vector<1x1x32xf32> to vector<1x32xf32>
    %c0_43 = arith.constant 0 : index
    %c0_44 = arith.constant 0 : index
    %c0_45 = arith.constant 0 : index
    %158 = vector.load %arg9[%c0_43, %c0_44, %c0_45] : memref<1x1x32xf32, #tpu.memory_space<vmem>>, vector<1x1x32xf32>
    %159 = vector.shape_cast %158 : vector<1x1x32xf32> to vector<1x32xf32>
    %cst_46 = arith.constant dense<0.000000e+00> : vector<16xf32>
    %160 = vector.multi_reduction <add>, %155, %cst_46 [1] : vector<16x32xf32> to vector<16xf32>
    %161 = vector.shape_cast %160 : vector<16xf32> to vector<16x1xf32>
    %cst_47 = arith.constant 3.200000e+01 : f32
    %162 = vector.broadcast %cst_47 : f32 to vector<16x1xf32>
    %163 = arith.divf %161, %162 : vector<16x1xf32>
    %164 = vector.broadcast %163 : vector<16x1xf32> to vector<16x32xf32>
    %165 = arith.subf %155, %164 : vector<16x32xf32>
    %166 = arith.mulf %165, %165 : vector<16x32xf32>
    %cst_48 = arith.constant dense<0.000000e+00> : vector<16xf32>
    %167 = vector.multi_reduction <add>, %166, %cst_48 [1] : vector<16x32xf32> to vector<16xf32>
    %168 = vector.shape_cast %167 : vector<16xf32> to vector<16x1xf32>
    %cst_49 = arith.constant 3.200000e+01 : f32
    %169 = vector.broadcast %cst_49 : f32 to vector<16x1xf32>
    %170 = arith.divf %168, %169 : vector<16x1xf32>
    %cst_50 = arith.constant 9.99999974E-6 : f32
    %171 = vector.broadcast %cst_50 : f32 to vector<16x1xf32>
    %172 = arith.addf %170, %171 : vector<16x1xf32>
    %173 = math.rsqrt %172 : vector<16x1xf32>
    %174 = vector.broadcast %173 : vector<16x1xf32> to vector<16x32xf32>
    %175 = arith.mulf %165, %174 : vector<16x32xf32>
    %176 = vector.broadcast %157 : vector<1x32xf32> to vector<16x32xf32>
    %177 = arith.mulf %175, %176 : vector<16x32xf32>
    %178 = vector.broadcast %159 : vector<1x32xf32> to vector<16x32xf32>
    %179 = arith.addf %177, %178 : vector<16x32xf32>
    %180 = arith.truncf %179 : vector<16x32xf32> to vector<16x32xbf16>
    %c0_51 = arith.constant 0 : index
    %c0_52 = arith.constant 0 : index
    %c0_53 = arith.constant 0 : index
    %181 = vector.load %arg10[%c0_51, %c0_52, %c0_53] : memref<1x32x128xbf16, #tpu.memory_space<vmem>>, vector<1x32x128xbf16>
    %182 = vector.shape_cast %181 : vector<1x32x128xbf16> to vector<32x128xbf16>
    %cst_54 = arith.constant dense<0.000000e+00> : vector<16x128xf32>
    %183 = tpu.matmul %180, %182, %cst_54 {dimension_numbers = #tpu.dot_dimension_numbers<[1], [0], [0], [1], [0, 0, 1, 1], [], []>} : vector<16x32xbf16>, vector<32x128xbf16>, vector<16x128xf32> -> vector<16x128xf32>
    %c0_55 = arith.constant 0 : index
    %c0_56 = arith.constant 0 : index
    %c0_57 = arith.constant 0 : index
    %184 = vector.load %arg11[%c0_55, %c0_56, %c0_57] : memref<1x1x128xf32, #tpu.memory_space<vmem>>, vector<1x1x128xf32>
    %185 = vector.shape_cast %184 : vector<1x1x128xf32> to vector<1x128xf32>
    %186 = vector.broadcast %185 : vector<1x128xf32> to vector<16x128xf32>
    %187 = arith.addf %183, %186 : vector<16x128xf32>
    %cst_58 = arith.constant 5.000000e-01 : f32
    %188 = vector.broadcast %cst_58 : f32 to vector<16x128xf32>
    %189 = arith.mulf %188, %187 : vector<16x128xf32>
    %cst_59 = arith.constant 0.707106769 : f32
    %190 = vector.broadcast %cst_59 : f32 to vector<16x128xf32>
    %191 = arith.mulf %187, %190 : vector<16x128xf32>
    %cst_60 = arith.constant 0.000000e+00 : f32
    %192 = vector.broadcast %cst_60 : f32 to vector<16x128xf32>
    %193 = arith.cmpf olt, %191, %192 : vector<16x128xf32>
    %cst_61 = arith.constant -1.000000e+00 : f32
    %cst_62 = arith.constant 1.000000e+00 : f32
    %194 = vector.broadcast %cst_61 : f32 to vector<16x128xf32>
    %195 = vector.broadcast %cst_62 : f32 to vector<16x128xf32>
    %196 = arith.select %193, %194, %195 : vector<16x128xi1>, vector<16x128xf32>
    %197 = math.absf %191 : vector<16x128xf32>
    %cst_63 = arith.constant 0.327591091 : f32
    %198 = vector.broadcast %cst_63 : f32 to vector<16x128xf32>
    %199 = arith.mulf %198, %197 : vector<16x128xf32>
    %cst_64 = arith.constant 1.000000e+00 : f32
    %200 = vector.broadcast %cst_64 : f32 to vector<16x128xf32>
    %201 = arith.addf %200, %199 : vector<16x128xf32>
    %cst_65 = arith.constant 1.000000e+00 : f32
    %202 = vector.broadcast %cst_65 : f32 to vector<16x128xf32>
    %203 = arith.divf %202, %201 : vector<16x128xf32>
    %cst_66 = arith.constant 1.06140542 : f32
    %204 = vector.broadcast %cst_66 : f32 to vector<16x128xf32>
    %205 = arith.mulf %204, %203 : vector<16x128xf32>
    %cst_67 = arith.constant -1.45315206 : f32
    %206 = vector.broadcast %cst_67 : f32 to vector<16x128xf32>
    %207 = arith.addf %205, %206 : vector<16x128xf32>
    %208 = arith.mulf %207, %203 : vector<16x128xf32>
    %cst_68 = arith.constant 1.42141378 : f32
    %209 = vector.broadcast %cst_68 : f32 to vector<16x128xf32>
    %210 = arith.addf %208, %209 : vector<16x128xf32>
    %211 = arith.mulf %210, %203 : vector<16x128xf32>
    %cst_69 = arith.constant -0.284496725 : f32
    %212 = vector.broadcast %cst_69 : f32 to vector<16x128xf32>
    %213 = arith.addf %211, %212 : vector<16x128xf32>
    %214 = arith.mulf %213, %203 : vector<16x128xf32>
    %cst_70 = arith.constant 0.254829586 : f32
    %215 = vector.broadcast %cst_70 : f32 to vector<16x128xf32>
    %216 = arith.addf %214, %215 : vector<16x128xf32>
    %217 = arith.mulf %216, %203 : vector<16x128xf32>
    %cst_71 = arith.constant 0.000000e+00 : f32
    %218 = vector.broadcast %cst_71 : f32 to vector<16x128xf32>
    %219 = arith.subf %218, %197 : vector<16x128xf32>
    %220 = arith.mulf %219, %197 : vector<16x128xf32>
    %221 = math.exp %220 : vector<16x128xf32>
    %222 = arith.mulf %217, %221 : vector<16x128xf32>
    %cst_72 = arith.constant 1.000000e+00 : f32
    %223 = vector.broadcast %cst_72 : f32 to vector<16x128xf32>
    %224 = arith.subf %223, %222 : vector<16x128xf32>
    %225 = arith.mulf %196, %224 : vector<16x128xf32>
    %cst_73 = arith.constant 1.000000e+00 : f32
    %226 = vector.broadcast %cst_73 : f32 to vector<16x128xf32>
    %227 = arith.addf %226, %225 : vector<16x128xf32>
    %228 = arith.mulf %189, %227 : vector<16x128xf32>
    %229 = arith.truncf %228 : vector<16x128xf32> to vector<16x128xbf16>
    %c0_74 = arith.constant 0 : index
    %c0_75 = arith.constant 0 : index
    %c0_76 = arith.constant 0 : index
    %230 = vector.load %arg12[%c0_74, %c0_75, %c0_76] : memref<1x128x32xbf16, #tpu.memory_space<vmem>>, vector<1x128x32xbf16>
    %231 = vector.shape_cast %230 : vector<1x128x32xbf16> to vector<128x32xbf16>
    %cst_77 = arith.constant dense<0.000000e+00> : vector<16x32xf32>
    %232 = tpu.matmul %229, %231, %cst_77 {dimension_numbers = #tpu.dot_dimension_numbers<[1], [0], [0], [1], [0, 0, 1, 1], [], []>} : vector<16x128xbf16>, vector<128x32xbf16>, vector<16x32xf32> -> vector<16x32xf32>
    %233 = arith.addf %155, %232 : vector<16x32xf32>
    %c0_78 = arith.constant 0 : index
    %c0_79 = arith.constant 0 : index
    %c0_80 = arith.constant 0 : index
    %234 = vector.load %arg13[%c0_78, %c0_79, %c0_80] : memref<1x1x32xf32, #tpu.memory_space<vmem>>, vector<1x1x32xf32>
    %235 = vector.shape_cast %234 : vector<1x1x32xf32> to vector<1x32xf32>
    %236 = vector.broadcast %235 : vector<1x32xf32> to vector<16x32xf32>
    %237 = arith.addf %233, %236 : vector<16x32xf32>
    %238 = vector.shape_cast %237 : vector<16x32xf32> to vector<2x8x32xf32>
    %c0_81 = arith.constant 0 : index
    %c0_82 = arith.constant 0 : index
    %c0_83 = arith.constant 0 : index
    %239 = vector.load %arg14[%c0_81, %c0_82, %c0_83] : memref<2x8x32xf32, #tpu.memory_space<vmem>>, vector<2x8x32xf32>
    tpu.vector_store %arg14[%c0_81, %c0_82, %c0_83], %238 {strides = array<i32>} : memref<2x8x32xf32, #tpu.memory_space<vmem>>, vector<2x8x32xf32>,
    return
  }
  func.func @transform_0(%arg0: i32, %arg1: i32) -> (i32, i32, i32) {
    %c0_i32 = arith.constant 0 : i32
    %c0_i32_0 = arith.constant 0 : i32
    %c0_i32_1 = arith.constant 0 : i32
    return %arg0, %c0_i32, %c0_i32_0 : i32, i32, i32
  }
  func.func @transform_1(%arg0: i32, %arg1: i32) -> (i32, i32, i32) {
    %c0_i32 = arith.constant 0 : i32
    %c0_i32_0 = arith.constant 0 : i32
    %c0_i32_1 = arith.constant 0 : i32
    return %arg1, %c0_i32, %c0_i32_0 : i32, i32, i32
  }
  func.func @transform_2(%arg0: i32, %arg1: i32) -> (i32, i32, i32) {
    %c0_i32 = arith.constant 0 : i32
    %c0_i32_0 = arith.constant 0 : i32
    %c0_i32_1 = arith.constant 0 : i32
    return %arg1, %c0_i32, %c0_i32_0 : i32, i32, i32
  }
  func.func @transform_3(%arg0: i32, %arg1: i32) -> (i32, i32, i32) {
    %c0_i32 = arith.constant 0 : i32
    %c0_i32_0 = arith.constant 0 : i32
    %c0_i32_1 = arith.constant 0 : i32
    return %arg1, %c0_i32, %c0_i32_0 : i32, i32, i32
  }
  func.func @transform_4(%arg0: i32, %arg1: i32) -> (i32, i32, i32) {
    %c0_i32 = arith.constant 0 : i32
    %c0_i32_0 = arith.constant 0 : i32
    %c0_i32_1 = arith.constant 0 : i32
    return %arg1, %c0_i32, %c0_i32_0 : i32, i32, i32
  }
  func.func @transform_5(%arg0: i32, %arg1: i32) -> (i32, i32, i32) {
    %c0_i32 = arith.constant 0 : i32
    %c0_i32_0 = arith.constant 0 : i32
    %c0_i32_1 = arith.constant 0 : i32
    return %arg1, %c0_i32, %c0_i32_0 : i32, i32, i32
  }
  func.func @transform_6(%arg0: i32, %arg1: i32) -> (i32, i32, i32) {
    %c0_i32 = arith.constant 0 : i32
    %c0_i32_0 = arith.constant 0 : i32
    %c0_i32_1 = arith.constant 0 : i32
    return %arg1, %c0_i32, %c0_i32_0 : i32, i32, i32
  }
  func.func @transform_7(%arg0: i32, %arg1: i32) -> (i32, i32, i32) {
    %c0_i32 = arith.constant 0 : i32
    %c0_i32_0 = arith.constant 0 : i32
    %c0_i32_1 = arith.constant 0 : i32
    return %arg1, %c0_i32, %c0_i32_0 : i32, i32, i32
  }
  func.func @transform_8(%arg0: i32, %arg1: i32) -> (i32, i32, i32) {
    %c0_i32 = arith.constant 0 : i32
    %c0_i32_0 = arith.constant 0 : i32
    %c0_i32_1 = arith.constant 0 : i32
    return %arg1, %c0_i32, %c0_i32_0 : i32, i32, i32
  }
  func.func @transform_9(%arg0: i32, %arg1: i32) -> (i32, i32, i32) {
    %c0_i32 = arith.constant 0 : i32
    %c0_i32_0 = arith.constant 0 : i32
    %c0_i32_1 = arith.constant 0 : i32
    return %arg1, %c0_i32, %c0_i32_0 : i32, i32, i32
  }
  func.func @transform_10(%arg0: i32, %arg1: i32) -> (i32, i32, i32) {
    %c0_i32 = arith.constant 0 : i32
    %c0_i32_0 = arith.constant 0 : i32
    %c0_i32_1 = arith.constant 0 : i32
    return %arg1, %c0_i32, %c0_i32_0 : i32, i32, i32
  }
  func.func @transform_11(%arg0: i32, %arg1: i32) -> (i32, i32, i32) {
    %c0_i32 = arith.constant 0 : i32
    %c0_i32_0 = arith.constant 0 : i32
    %c0_i32_1 = arith.constant 0 : i32
    return %arg1, %c0_i32, %c0_i32_0 : i32, i32, i32
  }
  func.func @transform_12(%arg0: i32, %arg1: i32) -> (i32, i32, i32) {
    %c0_i32 = arith.constant 0 : i32
    %c0_i32_0 = arith.constant 0 : i32
    %c0_i32_1 = arith.constant 0 : i32
    return %arg0, %c0_i32, %c0_i32_0 : i32, i32, i32
  }
}

</mosaic_0001>

<llo_original>
// kernel: fwd.1
$region0: #{fwd.1}
  #allocation0 [shape = 'u32[]', space=smem, size = 0x4, offset = 0x4, fixed_abs, tag = 'smem constant byte address 0x4 - core index']
  #allocation1 [shape = 'u32[144,128]{1,0:T(1,128)}', space=vmem, size = 0x12000, scoped, tag = 'internal scratch']
  %s0 = inlined_call_operand.hbm [shape: f32[2,8,32], index: 0, kind: input, shape index: {}]
  %s1 = inlined_call_operand.vmem [shape: bf16[2,32,96], index: 1, kind: input, shape index: {}]
  %s2 = inlined_call_operand.hbm [shape: bf16[2,32,32], index: 2, kind: input, shape index: {}]
  %s3 = inlined_call_operand.vmem [shape: f32[2,1,32], index: 3, kind: input, shape index: {}]
  %s4 = inlined_call_operand.vmem [shape: f32[2,1,32], index: 4, kind: input, shape index: {}]
  %s5 = inlined_call_operand.vmem [shape: f32[2,1,32], index: 5, kind: input, shape index: {}]
  %s6 = inlined_call_operand.vmem [shape: f32[2,1,32], index: 6, kind: input, shape index: {}]
  %s7 = inlined_call_operand.vmem [shape: f32[2,1,32], index: 7, kind: input, shape index: {}]
  %s8 = inlined_call_operand.hbm [shape: bf16[2,32,128], index: 8, kind: input, shape index: {}]
  %s9 = inlined_call_operand.vmem [shape: f32[2,1,128], index: 9, kind: input, shape index: {}]
  %s10 = inlined_call_operand.hbm [shape: bf16[2,128,32], index: 10, kind: input, shape index: {}]
  %s11 = inlined_call_operand.vmem [shape: f32[2,1,32], index: 11, kind: input, shape index: {}]
  %s12 = inlined_call_operand.hbm [shape: f32[2,8,32], index: 12, kind: output, shape index: {}]
  %s13 = sld [smem:[#allocation0]]
  $region101: #{fwd.1} parent=0
    _
  %s15 = ssub.s32 1, %s13
  %s16 = scalar_select 0, %s15, %s13
  $region1: #{fwd.1} parent=0
    #allocation2 [shape = 'u8[8192]{0}', space=vmem, size = 0x2000, scoped, tag = 'input window, operand 0, single buffered']
    #allocation3 [shape = 's32[2]{0}', space=sflag, size = 0x8, scoped, tag = 'scoped memory for fwd.1']
    #allocation4 [shape = 's32[2]{0}', space=sflag, size = 0x8, scoped, tag = 'scoped memory for fwd.1']
    #allocation5 [shape = 'u8[16384]{0}', space=vmem, size = 0x4000, scoped, tag = 'input window, operand 2']
    #allocation6 [shape = 's32[2]{0}', space=sflag, size = 0x8, scoped, tag = 'scoped memory for fwd.1']
    #allocation7 [shape = 'u8[16384]{0}', space=vmem, size = 0x4000, scoped, tag = 'input window, operand 8']
    #allocation8 [shape = 'u8[65536]{0}', space=vmem, size = 0x10000, scoped, tag = 'input window, operand 10']
    #allocation9 [shape = 's32[2]{0}', space=sflag, size = 0x8, scoped, tag = 'scoped memory for fwd.1']
    #allocation10 [shape = 'u8[8192]{0}', space=vmem, size = 0x2000, scoped, tag = 'output window, operand 0, single buffered']
    %17 = vsyncpa [#allocation3], 0
    %18 = vsyncpa [#allocation6], 0
    %s19 = scalar_lea.sflag [#allocation6], 1
    %20 = vsyncpa %s19, 0
    %21 = vsyncpa [#allocation9], 0
    %s22 = scalar_lea.sflag [#allocation9], 1
    %23 = vsyncpa %s22, 0
    %24 = vsyncpa [#allocation4], 0
    loop: start=0, step=1, limit=4
    $region2: #{fwd.1} parent=1 // loop_pre_header
      _
    $region3: #{fwd.1} parent=1 // loop_header
      %s26 = sphi 0, %s30
      %p27 = scmp.ge.s32.totalorder %s26, 4
      %s33 = sphi 0, %s45
      %s34 = sphi 0, %s41
      %s35 = sphi 0, %s33
      %s36 = sphi 0, %s34
      %s37 = sphi 0, %s35
      %s38 = sphi 0, %s36
      %s48 = sphi 0, %s50
      %s51 = sphi 0, %s48
      %s52 = sphi 0, %s51
      %s68 = sphi 0, %s52
      %s74 = sphi 0, %s76
      %s77 = sphi 0, %s74
      %s78 = sphi 0, %s77
      %s94 = sphi 0, %s78
      %s100 = sphi 0, %s102
      %s103 = sphi 0, %s100
      %s104 = sphi 0, %s103
      %s120 = sphi 0, %s104
      %s126 = sphi 0, %s128
      %s129 = sphi 0, %s126
      %s130 = sphi 0, %s129
      %s146 = sphi 0, %s130
      %s152 = sphi 0, %s154
      %s155 = sphi 0, %s152
      %s156 = sphi 0, %s155
      %s172 = sphi 0, %s156
      %s178 = sphi 0, %s180
      %s181 = sphi 0, %s178
      %s182 = sphi 0, %s181
      %s198 = sphi 0, %s182
      %s204 = sphi 0, %s206
      %s207 = sphi 0, %s204
      %s208 = sphi 0, %s207
      %s224 = sphi 0, %s208
      %s230 = sphi 0, %s232
      %s233 = sphi 0, %s230
      %s234 = sphi 0, %s233
      %s250 = sphi 0, %s234
      %s256 = sphi 0, %s258
      %s259 = sphi 0, %s256
      %s260 = sphi 0, %s259
      %s276 = sphi 0, %s260
      %s282 = sphi 0, %s284
      %s285 = sphi 0, %s282
      %s286 = sphi 0, %s285
      %s302 = sphi 0, %s286
      %s308 = sphi 0, %s310
      %s311 = sphi 0, %s308
      %s312 = sphi 0, %s311
      %s328 = sphi 0, %s312
      %s334 = sphi 0, %s336
      %s337 = sphi 0, %s334
      %s338 = sphi 0, %s337
      %s354 = sphi 0, %s338
      %s360 = sphi 0, %s362
      %s363 = sphi 0, %s360
      %s364 = sphi 0, %s363
      %s380 = sphi 0, %s364
    $region4: #{fwd.1} parent=1 // loop_header_branch
      %29 = sbr.rel (%p27) target = $region8
    $region5: #{fwd.1} parent=1 // loop_body
      %s31 = ssub.s32 %s26, 1
      %s32 = ssub.s32 %s26, 2
      %s39 = sadd.s32 1, %s34
      %p40 = scmp.ge.s32.totalorder %s39, 2
      %s41 = scalar_select %p40, 0, %s39
      %s42 = sadd.s32 1, %s33
      %s43 = scalar_select %p40, %s42, %s33
      %p44 = scmp.ge.s32.totalorder %s43, 1
      %s45 = scalar_select %p44, 0, %s43
      %s46 = ssub.s32 %s33, %s45
      %p47 = scmp.eq.s32.totalorder %s46, 0
      %s49 = sadd.s32 %s48, 1
      %s50 = scalar_select %p47, %s48, %s49
      %p53 = pneg %p47
      %p54 = scmp.eq.s32.totalorder %s26, 1
      %p55 = por %p53, %p54
      %p56 = scmp.ne.s32.totalorder %s48, %s51
      %p57 = scmp.eq.s32.totalorder %s26, 0
      %p58 = por %p56, %p57
      %p59 = scmp.ne.s32.totalorder %s48, %s51
      %p60 = scmp.eq.s32.totalorder %s31, 1
      %p61 = por %p59, %p60
      %p62 = scmp.ne.s32.totalorder %s51, %s52
      %p63 = scmp.eq.s32.totalorder %s31, 0
      %p64 = por %p62, %p63
      %p65 = scmp.ne.s32.totalorder %s51, %s52
      %p66 = scmp.eq.s32.totalorder %s32, 1
      %p67 = por %p65, %p66
      %p69 = scmp.ne.s32.totalorder %s52, %s68
      %p70 = scmp.eq.s32.totalorder %s32, 0
      %p71 = por %p69, %p70
      %s72 = ssub.s32 %s34, %s41
      %p73 = scmp.eq.s32.totalorder %s72, 0
      %s75 = sadd.s32 %s74, 1
      %s76 = scalar_select %p73, %s74, %s75
      %p79 = pneg %p73
      %p80 = scmp.eq.s32.totalorder %s26, 1
      %p81 = por %p79, %p80
      %p82 = scmp.ne.s32.totalorder %s74, %s77
      %p83 = scmp.eq.s32.totalorder %s26, 0
      %p84 = por %p82, %p83
      %p85 = scmp.ne.s32.totalorder %s74, %s77
      %p86 = scmp.eq.s32.totalorder %s31, 1
      %p87 = por %p85, %p86
      %p88 = scmp.ne.s32.totalorder %s77, %s78
      %p89 = scmp.eq.s32.totalorder %s31, 0
      %p90 = por %p88, %p89
      %p91 = scmp.ne.s32.totalorder %s77, %s78
      %p92 = scmp.eq.s32.totalorder %s32, 1
      %p93 = por %p91, %p92
      %p95 = scmp.ne.s32.totalorder %s78, %s94
      %p96 = scmp.eq.s32.totalorder %s32, 0
      %p97 = por %p95, %p96
      %s98 = ssub.s32 %s34, %s41
      %p99 = scmp.eq.s32.totalorder %s98, 0
      %s101 = sadd.s32 %s100, 1
      %s102 = scalar_select %p99, %s100, %s101
      %p105 = pneg %p99
      %p106 = scmp.eq.s32.totalorder %s26, 1
      %p107 = por %p105, %p106
      %p108 = scmp.ne.s32.totalorder %s100, %s103
      %p109 = scmp.eq.s32.totalorder %s26, 0
      %p110 = por %p108, %p109
      %p111 = scmp.ne.s32.totalorder %s100, %s103
      %p112 = scmp.eq.s32.totalorder %s31, 1
      %p113 = por %p111, %p112
      %p114 = scmp.ne.s32.totalorder %s103, %s104
      %p115 = scmp.eq.s32.totalorder %s31, 0
      %p116 = por %p114, %p115
      %p117 = scmp.ne.s32.totalorder %s103, %s104
      %p118 = scmp.eq.s32.totalorder %s32, 1
      %p119 = por %p117, %p118
      %p121 = scmp.ne.s32.totalorder %s104, %s120
      %p122 = scmp.eq.s32.totalorder %s32, 0
      %p123 = por %p121, %p122
      %s124 = ssub.s32 %s34, %s41
      %p125 = scmp.eq.s32.totalorder %s124, 0
      %s127 = sadd.s32 %s126, 1
      %s128 = scalar_select %p125, %s126, %s127
      %p131 = pneg %p125
      %p132 = scmp.eq.s32.totalorder %s26, 1
      %p133 = por %p131, %p132
      %p134 = scmp.ne.s32.totalorder %s126, %s129
      %p135 = scmp.eq.s32.totalorder %s26, 0
      %p136 = por %p134, %p135
      %p137 = scmp.ne.s32.totalorder %s126, %s129
      %p138 = scmp.eq.s32.totalorder %s31, 1
      %p139 = por %p137, %p138
      %p140 = scmp.ne.s32.totalorder %s129, %s130
      %p141 = scmp.eq.s32.totalorder %s31, 0
      %p142 = por %p140, %p141
      %p143 = scmp.ne.s32.totalorder %s129, %s130
      %p144 = scmp.eq.s32.totalorder %s32, 1
      %p145 = por %p143, %p144
      %p147 = scmp.ne.s32.totalorder %s130, %s146
      %p148 = scmp.eq.s32.totalorder %s32, 0
      %p149 = por %p147, %p148
      %s150 = ssub.s32 %s34, %s41
      %p151 = scmp.eq.s32.totalorder %s150, 0
      %s153 = sadd.s32 %s152, 1
      %s154 = scalar_select %p151, %s152, %s153
      %p157 = pneg %p151
      %p158 = scmp.eq.s32.totalorder %s26, 1
      %p159 = por %p157, %p158
      %p160 = scmp.ne.s32.totalorder %s152, %s155
      %p161 = scmp.eq.s32.totalorder %s26, 0
      %p162 = por %p160, %p161
      %p163 = scmp.ne.s32.totalorder %s152, %s155
      %p164 = scmp.eq.s32.totalorder %s31, 1
      %p165 = por %p163, %p164
      %p166 = scmp.ne.s32.totalorder %s155, %s156
      %p167 = scmp.eq.s32.totalorder %s31, 0
      %p168 = por %p166, %p167
      %p169 = scmp.ne.s32.totalorder %s155, %s156
      %p170 = scmp.eq.s32.totalorder %s32, 1
      %p171 = por %p169, %p170
      %p173 = scmp.ne.s32.totalorder %s156, %s172
      %p174 = scmp.eq.s32.totalorder %s32, 0
      %p175 = por %p173, %p174
      %s176 = ssub.s32 %s34, %s41
      %p177 = scmp.eq.s32.totalorder %s176, 0
      %s179 = sadd.s32 %s178, 1
      %s180 = scalar_select %p177, %s178, %s179
      %p183 = pneg %p177
      %p184 = scmp.eq.s32.totalorder %s26, 1
      %p185 = por %p183, %p184
      %p186 = scmp.ne.s32.totalorder %s178, %s181
      %p187 = scmp.eq.s32.totalorder %s26, 0
      %p188 = por %p186, %p187
      %p189 = scmp.ne.s32.totalorder %s178, %s181
      %p190 = scmp.eq.s32.totalorder %s31, 1
      %p191 = por %p189, %p190
      %p192 = scmp.ne.s32.totalorder %s181, %s182
      %p193 = scmp.eq.s32.totalorder %s31, 0
      %p194 = por %p192, %p193
      %p195 = scmp.ne.s32.totalorder %s181, %s182
      %p196 = scmp.eq.s32.totalorder %s32, 1
      %p197 = por %p195, %p196
      %p199 = scmp.ne.s32.totalorder %s182, %s198
      %p200 = scmp.eq.s32.totalorder %s32, 0
      %p201 = por %p199, %p200
      %s202 = ssub.s32 %s34, %s41
      %p203 = scmp.eq.s32.totalorder %s202, 0
      %s205 = sadd.s32 %s204, 1
      %s206 = scalar_select %p203, %s204, %s205
      %p209 = pneg %p203
      %p210 = scmp.eq.s32.totalorder %s26, 1
      %p211 = por %p209, %p210
      %p212 = scmp.ne.s32.totalorder %s204, %s207
      %p213 = scmp.eq.s32.totalorder %s26, 0
      %p214 = por %p212, %p213
      %p215 = scmp.ne.s32.totalorder %s204, %s207
      %p216 = scmp.eq.s32.totalorder %s31, 1
      %p217 = por %p215, %p216
      %p218 = scmp.ne.s32.totalorder %s207, %s208
      %p219 = scmp.eq.s32.totalorder %s31, 0
      %p220 = por %p218, %p219
      %p221 = scmp.ne.s32.totalorder %s207, %s208
      %p222 = scmp.eq.s32.totalorder %s32, 1
      %p223 = por %p221, %p222
      %p225 = scmp.ne.s32.totalorder %s208, %s224
      %p226 = scmp.eq.s32.totalorder %s32, 0
      %p227 = por %p225, %p226
      %s228 = ssub.s32 %s34, %s41
      %p229 = scmp.eq.s32.totalorder %s228, 0
      %s231 = sadd.s32 %s230, 1
      %s232 = scalar_select %p229, %s230, %s231
      %p235 = pneg %p229
      %p236 = scmp.eq.s32.totalorder %s26, 1
      %p237 = por %p235, %p236
      %p238 = scmp.ne.s32.totalorder %s230, %s233
      %p239 = scmp.eq.s32.totalorder %s26, 0
      %p240 = por %p238, %p239
      %p241 = scmp.ne.s32.totalorder %s230, %s233
      %p242 = scmp.eq.s32.totalorder %s31, 1
      %p243 = por %p241, %p242
      %p244 = scmp.ne.s32.totalorder %s233, %s234
      %p245 = scmp.eq.s32.totalorder %s31, 0
      %p246 = por %p244, %p245
      %p247 = scmp.ne.s32.totalorder %s233, %s234
      %p248 = scmp.eq.s32.totalorder %s32, 1
      %p249 = por %p247, %p248
      %p251 = scmp.ne.s32.totalorder %s234, %s250
      %p252 = scmp.eq.s32.totalorder %s32, 0
      %p253 = por %p251, %p252
      %s254 = ssub.s32 %s34, %s41
      %p255 = scmp.eq.s32.totalorder %s254, 0
      %s257 = sadd.s32 %s256, 1
      %s258 = scalar_select %p255, %s256, %s257
      %p261 = pneg %p255
      %p262 = scmp.eq.s32.totalorder %s26, 1
      %p263 = por %p261, %p262
      %p264 = scmp.ne.s32.totalorder %s256, %s259
      %p265 = scmp.eq.s32.totalorder %s26, 0
      %p266 = por %p264, %p265
      %p267 = scmp.ne.s32.totalorder %s256, %s259
      %p268 = scmp.eq.s32.totalorder %s31, 1
      %p269 = por %p267, %p268
      %p270 = scmp.ne.s32.totalorder %s259, %s260
      %p271 = scmp.eq.s32.totalorder %s31, 0
      %p272 = por %p270, %p271
      %p273 = scmp.ne.s32.totalorder %s259, %s260
      %p274 = scmp.eq.s32.totalorder %s32, 1
      %p275 = por %p273, %p274
      %p277 = scmp.ne.s32.totalorder %s260, %s276
      %p278 = scmp.eq.s32.totalorder %s32, 0
      %p279 = por %p277, %p278
      %s280 = ssub.s32 %s34, %s41
      %p281 = scmp.eq.s32.totalorder %s280, 0
      %s283 = sadd.s32 %s282, 1
      %s284 = scalar_select %p281, %s282, %s283
      %p287 = pneg %p281
      %p288 = scmp.eq.s32.totalorder %s26, 1
      %p289 = por %p287, %p288
      %p290 = scmp.ne.s32.totalorder %s282, %s285
      %p291 = scmp.eq.s32.totalorder %s26, 0
      %p292 = por %p290, %p291
      %p293 = scmp.ne.s32.totalorder %s282, %s285
      %p294 = scmp.eq.s32.totalorder %s31, 1
      %p295 = por %p293, %p294
      %p296 = scmp.ne.s32.totalorder %s285, %s286
      %p297 = scmp.eq.s32.totalorder %s31, 0
      %p298 = por %p296, %p297
      %p299 = scmp.ne.s32.totalorder %s285, %s286
      %p300 = scmp.eq.s32.totalorder %s32, 1
      %p301 = por %p299, %p300
      %p303 = scmp.ne.s32.totalorder %s286, %s302
      %p304 = scmp.eq.s32.totalorder %s32, 0
      %p305 = por %p303, %p304
      %s306 = ssub.s32 %s34, %s41
      %p307 = scmp.eq.s32.totalorder %s306, 0
      %s309 = sadd.s32 %s308, 1
      %s310 = scalar_select %p307, %s308, %s309
      %p313 = pneg %p307
      %p314 = scmp.eq.s32.totalorder %s26, 1
      %p315 = por %p313, %p314
      %p316 = scmp.ne.s32.totalorder %s308, %s311
      %p317 = scmp.eq.s32.totalorder %s26, 0
      %p318 = por %p316, %p317
      %p319 = scmp.ne.s32.totalorder %s308, %s311
      %p320 = scmp.eq.s32.totalorder %s31, 1
      %p321 = por %p319, %p320
      %p322 = scmp.ne.s32.totalorder %s311, %s312
      %p323 = scmp.eq.s32.totalorder %s31, 0
      %p324 = por %p322, %p323
      %p325 = scmp.ne.s32.totalorder %s311, %s312
      %p326 = scmp.eq.s32.totalorder %s32, 1
      %p327 = por %p325, %p326
      %p329 = scmp.ne.s32.totalorder %s312, %s328
      %p330 = scmp.eq.s32.totalorder %s32, 0
      %p331 = por %p329, %p330
      %s332 = ssub.s32 %s34, %s41
      %p333 = scmp.eq.s32.totalorder %s332, 0
      %s335 = sadd.s32 %s334, 1
      %s336 = scalar_select %p333, %s334, %s335
      %p339 = pneg %p333
      %p340 = scmp.eq.s32.totalorder %s26, 1
      %p341 = por %p339, %p340
      %p342 = scmp.ne.s32.totalorder %s334, %s337
      %p343 = scmp.eq.s32.totalorder %s26, 0
      %p344 = por %p342, %p343
      %p345 = scmp.ne.s32.totalorder %s334, %s337
      %p346 = scmp.eq.s32.totalorder %s31, 1
      %p347 = por %p345, %p346
      %p348 = scmp.ne.s32.totalorder %s337, %s338
      %p349 = scmp.eq.s32.totalorder %s31, 0
      %p350 = por %p348, %p349
      %p351 = scmp.ne.s32.totalorder %s337, %s338
      %p352 = scmp.eq.s32.totalorder %s32, 1
      %p353 = por %p351, %p352
      %p355 = scmp.ne.s32.totalorder %s338, %s354
      %p356 = scmp.eq.s32.totalorder %s32, 0
      %p357 = por %p355, %p356
      %s358 = ssub.s32 %s33, %s45
      %p359 = scmp.eq.s32.totalorder %s358, 0
      %s361 = sadd.s32 %s360, 1
      %s362 = scalar_select %p359, %s360, %s361
      %p365 = pneg %p359
      %p366 = scmp.eq.s32.totalorder %s26, 1
      %p367 = por %p365, %p366
      %p368 = scmp.ne.s32.totalorder %s360, %s363
      %p369 = scmp.eq.s32.totalorder %s26, 0
      %p370 = por %p368, %p369
      %p371 = scmp.ne.s32.totalorder %s360, %s363
      %p372 = scmp.eq.s32.totalorder %s31, 1
      %p373 = por %p371, %p372
      %p374 = scmp.ne.s32.totalorder %s363, %s364
      %p375 = scmp.eq.s32.totalorder %s31, 0
      %p376 = por %p374, %p375
      %p377 = scmp.ne.s32.totalorder %s363, %s364
      %p378 = scmp.eq.s32.totalorder %s32, 1
      %p379 = por %p377, %p378
      %p381 = scmp.ne.s32.totalorder %s364, %s380
      %p382 = scmp.eq.s32.totalorder %s32, 0
      %p383 = por %p381, %p382
      %p384 = scmp.le.s32.totalorder 1, %s26
      %p385 = scmp.lt.s32.totalorder %s26, 3
      %p386 = pnand %p384, %p385
      %p387 = pneg %p386
      // Predicated region
      $region9: #{fwd.1} parent=5 // pred_check
        _
      $region10: #{fwd.1} parent=5 // pred_check_branch
        %389 = sbr.rel (%p386) target = $region12
      $region11: #{fwd.1} parent=5 // pred_region
        %s390 = ssub.s32 %s26, 1
        // Predicated region
        $region13: #{fwd.1} parent=11 // pred_check
          %p391 = pneg %p64
        $region14: #{fwd.1} parent=11 // pred_check_branch
          %393 = sbr.rel (%p391) target = $region16
        $region15: #{fwd.1} parent=11 // pred_region
          %s394 = smul.u32 2, %s35
          %s396 = ssub.s32 256, 256
          %397 = vsyncadd [#allocation3], %s396
          %s398 = smul.addr %s394, 128
          %s399 = scalar_lea.hbm %s0, %s398
          %s400 = sshll.u32 [#allocation2], 4
          %s401 = int_to_ptr.vmem [resolvable:$true] %s400
          %406 = dma.hbm_to_vmem [thread:$0]  %s399, 256, %s401, [#allocation3], 128, 128, 8
        $region16: #{fwd.1} parent=11 // pred_fallthru
          _
      $region12: #{fwd.1} parent=5 // pred_fallthru
        _
      %p407 = scmp.lt.s32.totalorder %s26, 2
      // Predicated region
      $region17: #{fwd.1} parent=5 // pred_check
        %p408 = pneg %p407
      $region18: #{fwd.1} parent=5 // pred_check_branch
        %410 = sbr.rel (%p408) target = $region20
      $region19: #{fwd.1} parent=5 // pred_region
        // Predicated region
        $region21: #{fwd.1} parent=19 // pred_check
          %p411 = pneg %p84
        $region22: #{fwd.1} parent=19 // pred_check_branch
          %413 = sbr.rel (%p411) target = $region24
        $region23: #{fwd.1} parent=19 // pred_region
          %p414 = scmp.lt.s32.totalorder %s34, 1
          %s415 = scalar_select %p414, %s34, 1
          %s416 = smul.addr %s415, 4
          %s417 = smul.addr %s416, 4
          %s418 = scalar_lea.vmem %s1, %s417
        $region24: #{fwd.1} parent=19 // pred_fallthru
          _
        // Predicated region
        $region25: #{fwd.1} parent=19 // pred_check
          %p419 = pneg %p110
        $region26: #{fwd.1} parent=19 // pred_check_branch
          %421 = sbr.rel (%p419) target = $region28
        $region27: #{fwd.1} parent=19 // pred_region
          %s422 = sand.u32 %s26, 1
          %s423 = scalar_lea.sflag [#allocation6], %s422
          %s424 = sand.u32 %s100, 1
          %s425 = smul.addr %s424, 16
          %s426 = scalar_lea.vmem [#allocation5], %s425
          %s428 = ssub.s32 256, 256
          %429 = vsyncadd %s423, %s428
          %s430 = smul.addr %s34, 4
          %s431 = smul.addr %s430, 64
          %s432 = scalar_lea.hbm %s2, %s431
          %s433 = sshll.u32 %s426, 4
          %s434 = int_to_ptr.vmem [resolvable:$true] %s433
          %439 = dma.hbm_to_vmem [thread:$0]  %s432, 256, %s434, %s423, 64, 64, 4
        $region28: #{fwd.1} parent=19 // pred_fallthru
          _
        // Predicated region
        $region29: #{fwd.1} parent=19 // pred_check
          %p440 = pneg %p136
        $region30: #{fwd.1} parent=19 // pred_check_branch
          %442 = sbr.rel (%p440) target = $region32
        $region31: #{fwd.1} parent=19 // pred_region
          %p443 = scmp.lt.s32.totalorder %s34, 1
          %s444 = scalar_select %p443, %s34, 1
          %s445 = scalar_lea.vmem %s3, %s444
        $region32: #{fwd.1} parent=19 // pred_fallthru
          _
        // Predicated region
        $region33: #{fwd.1} parent=19 // pred_check
          %p446 = pneg %p162
        $region34: #{fwd.1} parent=19 // pred_check_branch
          %448 = sbr.rel (%p446) target = $region36
        $region35: #{fwd.1} parent=19 // pred_region
          %p449 = scmp.lt.s32.totalorder %s34, 1
          %s450 = scalar_select %p449, %s34, 1
          %s451 = scalar_lea.vmem %s4, %s450
        $region36: #{fwd.1} parent=19 // pred_fallthru
          _
        // Predicated region
        $region37: #{fwd.1} parent=19 // pred_check
          %p452 = pneg %p188
        $region38: #{fwd.1} parent=19 // pred_check_branch
          %454 = sbr.rel (%p452) target = $region40
        $region39: #{fwd.1} parent=19 // pred_region
          %p455 = scmp.lt.s32.totalorder %s34, 1
          %s456 = scalar_select %p455, %s34, 1
          %s457 = scalar_lea.vmem %s5, %s456
        $region40: #{fwd.1} parent=19 // pred_fallthru
          _
        // Predicated region
        $region41: #{fwd.1} parent=19 // pred_check
          %p458 = pneg %p214
        $region42: #{fwd.1} parent=19 // pred_check_branch
          %460 = sbr.rel (%p458) target = $region44
        $region43: #{fwd.1} parent=19 // pred_region
          %p461 = scmp.lt.s32.totalorder %s34, 1
          %s462 = scalar_select %p461, %s34, 1
          %s463 = scalar_lea.vmem %s6, %s462
        $region44: #{fwd.1} parent=19 // pred_fallthru
          _
        // Predicated region
        $region45: #{fwd.1} parent=19 // pred_check
          %p464 = pneg %p240
        $region46: #{fwd.1} parent=19 // pred_check_branch
          %466 = sbr.rel (%p464) target = $region48
        $region47: #{fwd.1} parent=19 // pred_region
          %p467 = scmp.lt.s32.totalorder %s34, 1
          %s468 = scalar_select %p467, %s34, 1
          %s469 = scalar_lea.vmem %s7, %s468
        $region48: #{fwd.1} parent=19 // pred_fallthru
          _
        // Predicated region
        $region49: #{fwd.1} parent=19 // pred_check
          %p470 = pneg %p266
        $region50: #{fwd.1} parent=19 // pred_check_branch
          %472 = sbr.rel (%p470) target = $region52
        $region51: #{fwd.1} parent=19 // pred_region
          %s473 = sand.u32 %s26, 1
          %s474 = scalar_lea.sflag [#allocation6], %s473
          %s475 = sand.u32 %s256, 1
          %s476 = smul.addr %s475, 16
          %s477 = scalar_lea.vmem [#allocation7], %s476
          %s479 = ssub.s32 256, 256
          %480 = vsyncadd %s474, %s479
          %s481 = smul.addr %s34, 4
          %s482 = smul.addr %s481, 64
          %s483 = scalar_lea.hbm %s8, %s482
          %s484 = sshll.u32 %s477, 4
          %s485 = int_to_ptr.vmem [resolvable:$true] %s484
          %490 = dma.hbm_to_vmem [thread:$0]  %s483, 256, %s485, %s474, 64, 64, 4
        $region52: #{fwd.1} parent=19 // pred_fallthru
          _
        // Predicated region
        $region53: #{fwd.1} parent=19 // pred_check
          %p491 = pneg %p292
        $region54: #{fwd.1} parent=19 // pred_check_branch
          %493 = sbr.rel (%p491) target = $region56
        $region55: #{fwd.1} parent=19 // pred_region
          %p494 = scmp.lt.s32.totalorder %s34, 1
          %s495 = scalar_select %p494, %s34, 1
          %s496 = scalar_lea.vmem %s9, %s495
        $region56: #{fwd.1} parent=19 // pred_fallthru
          _
        // Predicated region
        $region57: #{fwd.1} parent=19 // pred_check
          %p497 = pneg %p318
        $region58: #{fwd.1} parent=19 // pred_check_branch
          %499 = sbr.rel (%p497) target = $region60
        $region59: #{fwd.1} parent=19 // pred_region
          %s500 = sand.u32 %s308, 1
          %s501 = scalar_lea.sflag [#allocation9], %s500
          %s502 = sand.u32 %s308, 1
          %s503 = smul.addr %s502, 64
          %s504 = scalar_lea.vmem [#allocation8], %s503
          %s506 = ssub.s32 1024, 1024
          %507 = vsyncadd %s501, %s506
          %s508 = smul.addr %s34, 16
          %s509 = smul.addr %s508, 64
          %s510 = scalar_lea.hbm %s10, %s509
          %s511 = sshll.u32 %s504, 4
          %s512 = int_to_ptr.vmem [resolvable:$true] %s511
          %517 = dma.hbm_to_vmem [thread:$0]  %s510, 1024, %s512, %s501, 64, 64, 4
        $region60: #{fwd.1} parent=19 // pred_fallthru
          _
        // Predicated region
        $region61: #{fwd.1} parent=19 // pred_check
          %p518 = pneg %p344
        $region62: #{fwd.1} parent=19 // pred_check_branch
          %520 = sbr.rel (%p518) target = $region64
        $region63: #{fwd.1} parent=19 // pred_region
          %p521 = scmp.lt.s32.totalorder %s34, 1
          %s522 = scalar_select %p521, %s34, 1
          %s523 = scalar_lea.vmem %s11, %s522
        $region64: #{fwd.1} parent=19 // pred_fallthru
          _
      $region20: #{fwd.1} parent=5 // pred_fallthru
        _
      %p524 = scmp.le.s32.totalorder 1, %s26
      %p525 = scmp.lt.s32.totalorder %s26, 3
      %p526 = pnand %p524, %p525
      %p527 = pneg %p526
      // Predicated region
      $region65: #{fwd.1} parent=5 // pred_check
        _
      $region66: #{fwd.1} parent=5 // pred_check_branch
        %529 = sbr.rel (%p526) target = $region68
      $region67: #{fwd.1} parent=5 // pred_region
        %s530 = ssub.s32 %s26, 1
        // Predicated region
        $region69: #{fwd.1} parent=67 // pred_check
          %p531 = pneg %p64
        $region70: #{fwd.1} parent=67 // pred_check_branch
          %533 = sbr.rel (%p531) target = $region72
        $region71: #{fwd.1} parent=67 // pred_region
          %534 = dma.done [#allocation3], 256
        $region72: #{fwd.1} parent=67 // pred_fallthru
          _
        %s535 = sand.u32 %s31, 1
        %s536 = scalar_lea.sflag [#allocation6], %s535
        %s537 = sand.u32 %s103, 1
        %s538 = smul.addr %s537, 16
        %s539 = scalar_lea.vmem [#allocation5], %s538
        // Predicated region
        $region73: #{fwd.1} parent=67 // pred_check
          %p540 = pneg %p116
        $region74: #{fwd.1} parent=67 // pred_check_branch
          %542 = sbr.rel (%p540) target = $region76
        $region75: #{fwd.1} parent=67 // pred_region
          %543 = dma.done %s536, 256
        $region76: #{fwd.1} parent=67 // pred_fallthru
          _
        %s544 = sand.u32 %s31, 1
        %s545 = scalar_lea.sflag [#allocation6], %s544
        %s546 = sand.u32 %s259, 1
        %s547 = smul.addr %s546, 16
        %s548 = scalar_lea.vmem [#allocation7], %s547
        // Predicated region
        $region77: #{fwd.1} parent=67 // pred_check
          %p549 = pneg %p272
        $region78: #{fwd.1} parent=67 // pred_check_branch
          %551 = sbr.rel (%p549) target = $region80
        $region79: #{fwd.1} parent=67 // pred_region
          %552 = dma.done %s545, 256
        $region80: #{fwd.1} parent=67 // pred_fallthru
          _
        %s553 = sand.u32 %s311, 1
        %s554 = scalar_lea.sflag [#allocation9], %s553
        %s555 = sand.u32 %s311, 1
        %s556 = smul.addr %s555, 64
        %s557 = scalar_lea.vmem [#allocation8], %s556
        // Predicated region
        $region81: #{fwd.1} parent=67 // pred_check
          %p558 = pneg %p324
        $region82: #{fwd.1} parent=67 // pred_check_branch
          %560 = sbr.rel (%p558) target = $region84
        $region83: #{fwd.1} parent=67 // pred_region
          %561 = dma.done %s554, 1024
        $region84: #{fwd.1} parent=67 // pred_fallthru
          _
        %p562 = pneg %p64
        %p563 = pneg %p61
        %p564 = scmp.lt.s32.totalorder %s36, 1
        %s565 = scalar_select %p564, %s36, 1
        %s566 = smul.addr %s565, 4
        %s567 = smul.addr %s566, 4
        %s568 = scalar_lea.vmem %s1, %s567
        %p569 = pneg %p90
        %p570 = pneg %p87
        %s571 = sand.u32 %s31, 1
        %s572 = scalar_lea.sflag [#allocation6], %s571
        %s573 = sand.u32 %s103, 1
        %s574 = smul.addr %s573, 16
        %s575 = scalar_lea.vmem [#allocation5], %s574
        %p576 = pneg %p116
        %p577 = pneg %p113
        %p578 = scmp.lt.s32.totalorder %s36, 1
        %s579 = scalar_select %p578, %s36, 1
        %s580 = scalar_lea.vmem %s3, %s579
        %p581 = pneg %p142
        %p582 = pneg %p139
        %p583 = scmp.lt.s32.totalorder %s36, 1
        %s584 = scalar_select %p583, %s36, 1
        %s585 = scalar_lea.vmem %s4, %s584
        %p586 = pneg %p168
        %p587 = pneg %p165
        %p588 = scmp.lt.s32.totalorder %s36, 1
        %s589 = scalar_select %p588, %s36, 1
        %s590 = scalar_lea.vmem %s5, %s589
        %p591 = pneg %p194
        %p592 = pneg %p191
        %p593 = scmp.lt.s32.totalorder %s36, 1
        %s594 = scalar_select %p593, %s36, 1
        %s595 = scalar_lea.vmem %s6, %s594
        %p596 = pneg %p220
        %p597 = pneg %p217
        %p598 = scmp.lt.s32.totalorder %s36, 1
        %s599 = scalar_select %p598, %s36, 1
        %s600 = scalar_lea.vmem %s7, %s599
        %p601 = pneg %p246
        %p602 = pneg %p243
        %s603 = sand.u32 %s31, 1
        %s604 = scalar_lea.sflag [#allocation6], %s603
        %s605 = sand.u32 %s259, 1
        %s606 = smul.addr %s605, 16
        %s607 = scalar_lea.vmem [#allocation7], %s606
        %p608 = pneg %p272
        %p609 = pneg %p269
        %p610 = scmp.lt.s32.totalorder %s36, 1
        %s611 = scalar_select %p610, %s36, 1
        %s612 = scalar_lea.vmem %s9, %s611
        %p613 = pneg %p298
        %p614 = pneg %p295
        %s615 = sand.u32 %s311, 1
        %s616 = scalar_lea.sflag [#allocation9], %s615
        %s617 = sand.u32 %s311, 1
        %s618 = smul.addr %s617, 64
        %s619 = scalar_lea.vmem [#allocation8], %s618
        %p620 = pneg %p324
        %p621 = pneg %p321
        %p622 = scmp.lt.s32.totalorder %s36, 1
        %s623 = scalar_select %p622, %s36, 1
        %s624 = scalar_lea.vmem %s11, %s623
        %p625 = pneg %p350
        %p626 = pneg %p347
        %p627 = pneg %p376
        %p628 = pneg %p373
        %s629 = smul.u32 2, %s35
        %p630 = scmp.lt.s32.totalorder %s36, 1
        %s631 = scalar_select %p630, %s36, 1
        %s632 = smul.addr %s631, 4
        %s633 = smul.addr %s632, 4
        %s634 = scalar_lea.vmem %s1, %s633
        %p635 = scmp.lt.s32.totalorder %s36, 1
        %s636 = scalar_select %p635, %s36, 1
        %s637 = scalar_lea.vmem %s3, %s636
        %p638 = scmp.lt.s32.totalorder %s36, 1
        %s639 = scalar_select %p638, %s36, 1
        %s640 = scalar_lea.vmem %s4, %s639
        %p641 = scmp.lt.s32.totalorder %s36, 1
        %s642 = scalar_select %p641, %s36, 1
        %s643 = scalar_lea.vmem %s5, %s642
        %p644 = scmp.lt.s32.totalorder %s36, 1
        %s645 = scalar_select %p644, %s36, 1
        %s646 = scalar_lea.vmem %s6, %s645
        %p647 = scmp.lt.s32.totalorder %s36, 1
        %s648 = scalar_select %p647, %s36, 1
        %s649 = scalar_lea.vmem %s7, %s648
        %p650 = scmp.lt.s32.totalorder %s36, 1
        %s651 = scalar_select %p650, %s36, 1
        %s652 = scalar_lea.vmem %s9, %s651
        %p653 = scmp.lt.s32.totalorder %s36, 1
        %s654 = scalar_select %p653, %s36, 1
        %s655 = scalar_lea.vmem %s11, %s654
        %s656 = smul.u32 2, %s35
        %p658 = scmp.eq.s32.totalorder %s36, 0
        // Predicated region
        $region85: #{fwd.1} parent=67 // pred_check
          %p659 = pneg %p658
        $region86: #{fwd.1} parent=67 // pred_check_branch
          %661 = sbr.rel (%p659) target = $region88
        $region87: #{fwd.1} parent=67 // pred_region
          %v662 = vld [vmem:[#allocation2] sm:$0xff]
          %v663 = vld [vmem:[#allocation2 + $0x8] sm:$0xff]
          %vm664 = vcmask 261120
          %665 = vst.msk [vmem:[#allocation10] sm:$0xff] %vm664, %v662
          %666 = vst.msk [vmem:[#allocation10 + $0x8] sm:$0xff] %vm664, %v663
        $region88: #{fwd.1} parent=67 // pred_fallthru
          _
        %v667 = vld [vmem:[#allocation10] sm:$0xff]
        %v668 = vld [vmem:[#allocation10 + $0x8] sm:$0xff]
        %v669 = vld [vmem:[%s640] sm:$0x1]
        %v670 = vld [vmem:[%s643] sm:$0x1]
        %vm671 = vcmask 261120
        %v672 = vsel %vm671, %v667, 0.0
        %673 = vadd.xlane.f32.xlu0 %v672
        %v674 = vpop.xlane.xlu0 %673
        %v675 = vsel %vm671, %v668, 0.0
        %676 = vadd.xlane.f32.xlu0 %v675
        %v677 = vpop.xlane.xlu0 %676
        %v678 = vrcp.pop 32.0
        %v679 = vmul.f32 %v674, %v678
        %v680 = vmul.f32 %v677, %v678
        %v681 = vsub.f32 %v667, %v679
        %v682 = vsub.f32 %v668, %v680
        %v683 = vmul.f32 %v681, %v681
        %v684 = vmul.f32 %v682, %v682
        %v685 = vsel %vm671, %v683, 0.0
        %686 = vadd.xlane.f32.xlu0 %v685
        %v687 = vpop.xlane.xlu0 %686
        %v688 = vsel %vm671, %v684, 0.0
        %689 = vadd.xlane.f32.xlu0 %v688
        %v690 = vpop.xlane.xlu0 %689
        %v691 = vmul.f32 %v687, %v678
        %v692 = vmul.f32 %v690, %v678
        %v693 = vadd.f32 %v691, 1e-05
        %v694 = vadd.f32 %v692, 1e-05
        %v695 = vrsqrt.pop %v693
        %v696 = vrsqrt.pop %v694
        %v697 = vmul.f32 %v681, %v695
        %v698 = vmul.f32 %v682, %v696
        %v700 = vlaneseq
        %v701 = vshrl.u32 %v700, 7
        %v702 = vsub.s32 0, %v701
        %v703 = vrot.slane %v669, %v702
        %v705 = vmul.f32 %v697, %v703
        %v706 = vmul.f32 %v698, %v703
        %v708 = vlaneseq
        %v709 = vshrl.u32 %v708, 7
        %v710 = vsub.s32 0, %v709
        %v711 = vrot.slane %v670, %v710
        %v713 = vadd.f32 %v705, %v711
        %v714 = vadd.f32 %v706, %v711
        %v715 = vpack.c.bf16 %v714, %v713
        %v716 = vld [vmem:[%s634] sm:$0xf]
        %v717 = vld [vmem:[%s634 + $0x4] sm:$0xf]
        %v718 = vld [vmem:[%s634 + $0x8] sm:$0xf]
        %v719 = vld [vmem:[%s634 + $0xc] sm:$0xf]
        %v724 = vunpack.c.l.b16 %v716
        %v725 = vunpack.c.l.b16 %v717
        %v726 = vunpack.c.l.b16 %v718
        %v727 = vunpack.c.l.b16 %v719
        %v728 = vpack.c.b16 %v725, %v724
        %v729 = vpack.c.b16 %v727, %v726
        %v733 = vsel %vm671, %v715, 0
        %735 = vmatprep.subr.bf16.mxu0 0
        %736 = vmatpush1.bf16.msra.mxu0 %v728
        %737 = vmatprep.subr.bf16.mxu0 0
        %738 = vmatpush1.bf16.msra.mxu0 %v729
        %739 = vmatprep.subr.bf16.mxu0 0
        %740 = vmatpush1.bf16.msra.mxu0 0
        %741 = vmatprep.subr.bf16.mxu0 0
        %742 = vmatpush1.bf16.msra.mxu0 0
        %743 = vmatprep.subr.bf16.mxu0 0
        %744 = vmatpush1.bf16.msra.mxu0 0
        %745 = vmatprep.subr.bf16.mxu0 0
        %746 = vmatpush1.bf16.msra.mxu0 0
        %747 = vmatprep.subr.bf16.mxu0 0
        %748 = vmatpush1.bf16.msra.mxu0 0
        %749 = vmatprep.subr.bf16.mxu0 0
        %750 = vmatpush1.bf16.msra.mxu0 0
        %751 = vmatprep.subr.bf16.mxu0 0
        %752 = vmatpush1.bf16.msra.mxu0 0
        %753 = vmatprep.subr.bf16.mxu0 0
        %754 = vmatpush1.bf16.msra.mxu0 0
        %755 = vmatprep.subr.bf16.mxu0 0
        %756 = vmatpush1.bf16.msra.mxu0 0
        %757 = vmatprep.subr.bf16.mxu0 0
        %758 = vmatpush1.bf16.msra.mxu0 0
        %759 = vmatprep.subr.bf16.mxu0 0
        %760 = vmatpush1.bf16.msra.mxu0 0
        %761 = vmatprep.subr.bf16.mxu0 0
        %762 = vmatpush1.bf16.msra.mxu0 0
        %763 = vmatprep.subr.bf16.mxu0 0
        %764 = vmatpush1.bf16.msra.mxu0 0
        %765 = vmatprep.subr.bf16.mxu0 0
        %766 = vmatpush1.bf16.msra.mxu0 0
        %767 = vmatprep.mubr.bf16.mxu0 0
        %768 = vmatmul.mubr.bf16.gmra.mrb[0].mxu0 %v733
        %v769 = vpop.f32.mrb[0].mxu0
        %v770 = vadd.f32 0.0, %v769
        %v771 = vpop.f32.mrb[0].mxu0
        %v772 = vpop.f32.mrb[0].mxu0
        %v773 = vadd.f32 0.0, %v772
        %v774 = vpop.f32.mrb[0].mxu0
        %775 = vdwg.mxu0
        %v776 = vpack.c.bf16 %v770, %v770
        %v777 = vpack.c.bf16 %v773, %v773
        %779 = vrot.lane.b32.xlu0 %v776, 96
        %v780 = vpop.permute.xlu0 %779
        %vm781 = vcmask 31744
        %v783 = vsel %vm781, %v776, 0
        %v786 = vsel %vm781, %v780, 0
        %788 = vmatprep.subr.bf16.mxu0 0
        %789 = vmatpush1.bf16.xpose.msra.mxu0 %v786
        %790 = vmatprep.subr.bf16.mxu0 0
        %791 = vmatpush1.bf16.xpose.msra.mxu0 0
        %792 = vmatprep.subr.bf16.mxu0 0
        %793 = vmatpush1.bf16.xpose.msra.mxu0 0
        %794 = vmatprep.subr.bf16.mxu0 0
        %795 = vmatpush1.bf16.xpose.msra.mxu0 0
        %796 = vmatprep.subr.bf16.mxu0 0
        %797 = vmatpush1.bf16.xpose.msra.mxu0 0
        %798 = vmatprep.subr.bf16.mxu0 0
        %799 = vmatpush1.bf16.xpose.msra.mxu0 0
        %800 = vmatprep.subr.bf16.mxu0 0
        %801 = vmatpush1.bf16.xpose.msra.mxu0 0
        %802 = vmatprep.subr.bf16.mxu0 0
        %803 = vmatpush1.bf16.xpose.msra.mxu0 0
        %804 = vmatprep.subr.bf16.mxu0 0
        %805 = vmatpush1.bf16.xpose.msra.mxu0 0
        %806 = vmatprep.subr.bf16.mxu0 0
        %807 = vmatpush1.bf16.xpose.msra.mxu0 0
        %808 = vmatprep.subr.bf16.mxu0 0
        %809 = vmatpush1.bf16.xpose.msra.mxu0 0
        %810 = vmatprep.subr.bf16.mxu0 0
        %811 = vmatpush1.bf16.xpose.msra.mxu0 0
        %812 = vmatprep.subr.bf16.mxu0 0
        %813 = vmatpush1.bf16.xpose.msra.mxu0 0
        %814 = vmatprep.subr.bf16.mxu0 0
        %815 = vmatpush1.bf16.xpose.msra.mxu0 0
        %816 = vmatprep.subr.bf16.mxu0 0
        %817 = vmatpush1.bf16.xpose.msra.mxu0 0
        %818 = vmatprep.subr.bf16.mxu0 0
        %819 = vmatpush1.bf16.xpose.msra.mxu0 0
        %820 = vmatprep.mubr.bf16.mxu0 0
        %821 = vmatmul.mubr.bf16.gmra.mrb[0].mxu0 %v783
        %v822 = vpop.f32.mrb[0].mxu0
        %v823 = vadd.f32 0.0, %v822
        %v824 = vpop.f32.mrb[0].mxu0
        %v825 = vpop.f32.mrb[0].mxu0
        %v826 = vpop.f32.mrb[0].mxu0
        %827 = vdwg.mxu0
        %829 = vrot.lane.b32.xlu0 %v777, 96
        %v830 = vpop.permute.xlu0 %829
        %v832 = vsel %vm781, %v777, 0
        %v835 = vsel %vm781, %v830, 0
        %837 = vmatprep.subr.bf16.mxu0 0
        %838 = vmatpush1.bf16.xpose.msra.mxu0 %v835
        %839 = vmatprep.subr.bf16.mxu0 0
        %840 = vmatpush1.bf16.xpose.msra.mxu0 0
        %841 = vmatprep.subr.bf16.mxu0 0
        %842 = vmatpush1.bf16.xpose.msra.mxu0 0
        %843 = vmatprep.subr.bf16.mxu0 0
        %844 = vmatpush1.bf16.xpose.msra.mxu0 0
        %845 = vmatprep.subr.bf16.mxu0 0
        %846 = vmatpush1.bf16.xpose.msra.mxu0 0
        %847 = vmatprep.subr.bf16.mxu0 0
        %848 = vmatpush1.bf16.xpose.msra.mxu0 0
        %849 = vmatprep.subr.bf16.mxu0 0
        %850 = vmatpush1.bf16.xpose.msra.mxu0 0
        %851 = vmatprep.subr.bf16.mxu0 0
        %852 = vmatpush1.bf16.xpose.msra.mxu0 0
        %853 = vmatprep.subr.bf16.mxu0 0
        %854 = vmatpush1.bf16.xpose.msra.mxu0 0
        %855 = vmatprep.subr.bf16.mxu0 0
        %856 = vmatpush1.bf16.xpose.msra.mxu0 0
        %857 = vmatprep.subr.bf16.mxu0 0
        %858 = vmatpush1.bf16.xpose.msra.mxu0 0
        %859 = vmatprep.subr.bf16.mxu0 0
        %860 = vmatpush1.bf16.xpose.msra.mxu0 0
        %861 = vmatprep.subr.bf16.mxu0 0
        %862 = vmatpush1.bf16.xpose.msra.mxu0 0
        %863 = vmatprep.subr.bf16.mxu0 0
        %864 = vmatpush1.bf16.xpose.msra.mxu0 0
        %865 = vmatprep.subr.bf16.mxu0 0
        %866 = vmatpush1.bf16.xpose.msra.mxu0 0
        %867 = vmatprep.subr.bf16.mxu0 0
        %868 = vmatpush1.bf16.xpose.msra.mxu0 0
        %869 = vmatprep.mubr.bf16.mxu0 0
        %870 = vmatmul.mubr.bf16.gmra.mrb[0].mxu0 %v832
        %v871 = vpop.f32.mrb[0].mxu0
        %v872 = vadd.f32 0.0, %v871
        %v873 = vpop.f32.mrb[0].mxu0
        %v874 = vpop.f32.mrb[0].mxu0
        %v875 = vpop.f32.mrb[0].mxu0
        %876 = vdwg.mxu0
        %877 = vrot.lane.b32.xlu0 %v776, 124
        %v878 = vpop.permute.xlu0 %877
        %879 = vrot.lane.b32.xlu0 %v776, 92
        %v880 = vpop.permute.xlu0 %879
        %v882 = vsel %vm781, %v878, 0
        %v885 = vsel %vm781, %v880, 0
        %887 = vmatprep.subr.bf16.mxu0 0
        %888 = vmatpush1.bf16.xpose.msra.mxu0 %v885
        %889 = vmatprep.subr.bf16.mxu0 0
        %890 = vmatpush1.bf16.xpose.msra.mxu0 0
        %891 = vmatprep.subr.bf16.mxu0 0
        %892 = vmatpush1.bf16.xpose.msra.mxu0 0
        %893 = vmatprep.subr.bf16.mxu0 0
        %894 = vmatpush1.bf16.xpose.msra.mxu0 0
        %895 = vmatprep.subr.bf16.mxu0 0
        %896 = vmatpush1.bf16.xpose.msra.mxu0 0
        %897 = vmatprep.subr.bf16.mxu0 0
        %898 = vmatpush1.bf16.xpose.msra.mxu0 0
        %899 = vmatprep.subr.bf16.mxu0 0
        %900 = vmatpush1.bf16.xpose.msra.mxu0 0
        %901 = vmatprep.subr.bf16.mxu0 0
        %902 = vmatpush1.bf16.xpose.msra.mxu0 0
        %903 = vmatprep.subr.bf16.mxu0 0
        %904 = vmatpush1.bf16.xpose.msra.mxu0 0
        %905 = vmatprep.subr.bf16.mxu0 0
        %906 = vmatpush1.bf16.xpose.msra.mxu0 0
        %907 = vmatprep.subr.bf16.mxu0 0
        %908 = vmatpush1.bf16.xpose.msra.mxu0 0
        %909 = vmatprep.subr.bf16.mxu0 0
        %910 = vmatpush1.bf16.xpose.msra.mxu0 0
        %911 = vmatprep.subr.bf16.mxu0 0
        %912 = vmatpush1.bf16.xpose.msra.mxu0 0
        %913 = vmatprep.subr.bf16.mxu0 0
        %914 = vmatpush1.bf16.xpose.msra.mxu0 0
        %915 = vmatprep.subr.bf16.mxu0 0
        %916 = vmatpush1.bf16.xpose.msra.mxu0 0
        %917 = vmatprep.subr.bf16.mxu0 0
        %918 = vmatpush1.bf16.xpose.msra.mxu0 0
        %919 = vmatprep.mubr.bf16.mxu0 0
        %920 = vmatmul.mubr.bf16.gmra.mrb[0].mxu0 %v882
        %v921 = vpop.f32.mrb[0].mxu0
        %v922 = vadd.f32 0.0, %v921
        %v923 = vpop.f32.mrb[0].mxu0
        %v924 = vpop.f32.mrb[0].mxu0
        %v925 = vpop.f32.mrb[0].mxu0
        %926 = vdwg.mxu0
        %927 = vrot.lane.b32.xlu0 %v777, 124
        %v928 = vpop.permute.xlu0 %927
        %929 = vrot.lane.b32.xlu0 %v777, 92
        %v930 = vpop.permute.xlu0 %929
        %v932 = vsel %vm781, %v928, 0
        %v935 = vsel %vm781, %v930, 0
        %937 = vmatprep.subr.bf16.mxu0 0
        %938 = vmatpush1.bf16.xpose.msra.mxu0 %v935
        %939 = vmatprep.subr.bf16.mxu0 0
        %940 = vmatpush1.bf16.xpose.msra.mxu0 0
        %941 = vmatprep.subr.bf16.mxu0 0
        %942 = vmatpush1.bf16.xpose.msra.mxu0 0
        %943 = vmatprep.subr.bf16.mxu0 0
        %944 = vmatpush1.bf16.xpose.msra.mxu0 0
        %945 = vmatprep.subr.bf16.mxu0 0
        %946 = vmatpush1.bf16.xpose.msra.mxu0 0
        %947 = vmatprep.subr.bf16.mxu0 0
        %948 = vmatpush1.bf16.xpose.msra.mxu0 0
        %949 = vmatprep.subr.bf16.mxu0 0
        %950 = vmatpush1.bf16.xpose.msra.mxu0 0
        %951 = vmatprep.subr.bf16.mxu0 0
        %952 = vmatpush1.bf16.xpose.msra.mxu0 0
        %953 = vmatprep.subr.bf16.mxu0 0
        %954 = vmatpush1.bf16.xpose.msra.mxu0 0
        %955 = vmatprep.subr.bf16.mxu0 0
        %956 = vmatpush1.bf16.xpose.msra.mxu0 0
        %957 = vmatprep.subr.bf16.mxu0 0
        %958 = vmatpush1.bf16.xpose.msra.mxu0 0
        %959 = vmatprep.subr.bf16.mxu0 0
        %960 = vmatpush1.bf16.xpose.msra.mxu0 0
        %961 = vmatprep.subr.bf16.mxu0 0
        %962 = vmatpush1.bf16.xpose.msra.mxu0 0
        %963 = vmatprep.subr.bf16.mxu0 0
        %964 = vmatpush1.bf16.xpose.msra.mxu0 0
        %965 = vmatprep.subr.bf16.mxu0 0
        %966 = vmatpush1.bf16.xpose.msra.mxu0 0
        %967 = vmatprep.subr.bf16.mxu0 0
        %968 = vmatpush1.bf16.xpose.msra.mxu0 0
        %969 = vmatprep.mubr.bf16.mxu0 0
        %970 = vmatmul.mubr.bf16.gmra.mrb[0].mxu0 %v932
        %v971 = vpop.f32.mrb[0].mxu0
        %v972 = vadd.f32 0.0, %v971
        %v973 = vpop.f32.mrb[0].mxu0
        %v974 = vpop.f32.mrb[0].mxu0
        %v975 = vpop.f32.mrb[0].mxu0
        %976 = vdwg.mxu0
        %977 = vrot.lane.b32.xlu0 %v776, 120
        %v978 = vpop.permute.xlu0 %977
        %979 = vrot.lane.b32.xlu0 %v776, 88
        %v980 = vpop.permute.xlu0 %979
        %v982 = vsel %vm781, %v978, 0
        %v985 = vsel %vm781, %v980, 0
        %987 = vmatprep.subr.bf16.mxu0 0
        %988 = vmatpush1.bf16.xpose.msra.mxu0 %v985
        %989 = vmatprep.subr.bf16.mxu0 0
        %990 = vmatpush1.bf16.xpose.msra.mxu0 0
        %991 = vmatprep.subr.bf16.mxu0 0
        %992 = vmatpush1.bf16.xpose.msra.mxu0 0
        %993 = vmatprep.subr.bf16.mxu0 0
        %994 = vmatpush1.bf16.xpose.msra.mxu0 0
        %995 = vmatprep.subr.bf16.mxu0 0
        %996 = vmatpush1.bf16.xpose.msra.mxu0 0
        %997 = vmatprep.subr.bf16.mxu0 0
        %998 = vmatpush1.bf16.xpose.msra.mxu0 0
        %999 = vmatprep.subr.bf16.mxu0 0
        %1000 = vmatpush1.bf16.xpose.msra.mxu0 0
        %1001 = vmatprep.subr.bf16.mxu0 0
        %1002 = vmatpush1.bf16.xpose.msra.mxu0 0
        %1003 = vmatprep.subr.bf16.mxu0 0
        %1004 = vmatpush1.bf16.xpose.msra.mxu0 0
        %1005 = vmatprep.subr.bf16.mxu0 0
        %1006 = vmatpush1.bf16.xpose.msra.mxu0 0
        %1007 = vmatprep.subr.bf16.mxu0 0
        %1008 = vmatpush1.bf16.xpose.msra.mxu0 0
        %1009 = vmatprep.subr.bf16.mxu0 0
        %1010 = vmatpush1.bf16.xpose.msra.mxu0 0
        %1011 = vmatprep.subr.bf16.mxu0 0
        %1012 = vmatpush1.bf16.xpose.msra.mxu0 0
        %1013 = vmatprep.subr.bf16.mxu0 0
        %1014 = vmatpush1.bf16.xpose.msra.mxu0 0
        %1015 = vmatprep.subr.bf16.mxu0 0
        %1016 = vmatpush1.bf16.xpose.msra.mxu0 0
        %1017 = vmatprep.subr.bf16.mxu0 0
        %1018 = vmatpush1.bf16.xpose.msra.mxu0 0
        %1019 = vmatprep.mubr.bf16.mxu0 0
        %1020 = vmatmul.mubr.bf16.gmra.mrb[0].mxu0 %v982
        %v1021 = vpop.f32.mrb[0].mxu0
        %v1022 = vadd.f32 0.0, %v1021
        %v1023 = vpop.f32.mrb[0].mxu0
        %v1024 = vpop.f32.mrb[0].mxu0
        %v1025 = vpop.f32.mrb[0].mxu0
        %1026 = vdwg.mxu0
        %1027 = vrot.lane.b32.xlu0 %v777, 120
        %v1028 = vpop.permute.xlu0 %1027
        %1029 = vrot.lane.b32.xlu0 %v777, 88
        %v1030 = vpop.permute.xlu0 %1029
        %v1032 = vsel %vm781, %v1028, 0
        %v1035 = vsel %vm781, %v1030, 0
        %1037 = vmatprep.subr.bf16.mxu0 0
        %1038 = vmatpush1.bf16.xpose.msra.mxu0 %v1035
        %1039 = vmatprep.subr.bf16.mxu0 0
        %1040 = vmatpush1.bf16.xpose.msra.mxu0 0
        %1041 = vmatprep.subr.bf16.mxu0 0
        %1042 = vmatpush1.bf16.xpose.msra.mxu0 0
        %1043 = vmatprep.subr.bf16.mxu0 0
        %1044 = vmatpush1.bf16.xpose.msra.mxu0 0
        %1045 = vmatprep.subr.bf16.mxu0 0
        %1046 = vmatpush1.bf16.xpose.msra.mxu0 0
        %1047 = vmatprep.subr.bf16.mxu0 0
        %1048 = vmatpush1.bf16.xpose.msra.mxu0 0
        %1049 = vmatprep.subr.bf16.mxu0 0
        %1050 = vmatpush1.bf16.xpose.msra.mxu0 0
        %1051 = vmatprep.subr.bf16.mxu0 0
        %1052 = vmatpush1.bf16.xpose.msra.mxu0 0
        %1053 = vmatprep.subr.bf16.mxu0 0
        %1054 = vmatpush1.bf16.xpose.msra.mxu0 0
        %1055 = vmatprep.subr.bf16.mxu0 0
        %1056 = vmatpush1.bf16.xpose.msra.mxu0 0
        %1057 = vmatprep.subr.bf16.mxu0 0
        %1058 = vmatpush1.bf16.xpose.msra.mxu0 0
        %1059 = vmatprep.subr.bf16.mxu0 0
        %1060 = vmatpush1.bf16.xpose.msra.mxu0 0
        %1061 = vmatprep.subr.bf16.mxu0 0
        %1062 = vmatpush1.bf16.xpose.msra.mxu0 0
        %1063 = vmatprep.subr.bf16.mxu0 0
        %1064 = vmatpush1.bf16.xpose.msra.mxu0 0
        %1065 = vmatprep.subr.bf16.mxu0 0
        %1066 = vmatpush1.bf16.xpose.msra.mxu0 0
        %1067 = vmatprep.subr.bf16.mxu0 0
        %1068 = vmatpush1.bf16.xpose.msra.mxu0 0
        %1069 = vmatprep.mubr.bf16.mxu0 0
        %1070 = vmatmul.mubr.bf16.gmra.mrb[0].mxu0 %v1032
        %v1071 = vpop.f32.mrb[0].mxu0
        %v1072 = vadd.f32 0.0, %v1071
        %v1073 = vpop.f32.mrb[0].mxu0
        %v1074 = vpop.f32.mrb[0].mxu0
        %v1075 = vpop.f32.mrb[0].mxu0
        %1076 = vdwg.mxu0
        %1077 = vrot.lane.b32.xlu0 %v776, 116
        %v1078 = vpop.permute.xlu0 %1077
        %1079 = vrot.lane.b32.xlu0 %v776, 84
        %v1080 = vpop.permute.xlu0 %1079
        %v1082 = vsel %vm781, %v1078, 0
        %v1085 = vsel %vm781, %v1080, 0
        %1087 = vmatprep.subr.bf16.mxu0 0
        %1088 = vmatpush1.bf16.xpose.msra.mxu0 %v1085
        %1089 = vmatprep.subr.bf16.mxu0 0
        %1090 = vmatpush1.bf16.xpose.msra.mxu0 0
        %1091 = vmatprep.subr.bf16.mxu0 0
        %1092 = vmatpush1.bf16.xpose.msra.mxu0 0
        %1093 = vmatprep.subr.bf16.mxu0 0
        %1094 = vmatpush1.bf16.xpose.msra.mxu0 0
        %1095 = vmatprep.subr.bf16.mxu0 0
        %1096 = vmatpush1.bf16.xpose.msra.mxu0 0
        %1097 = vmatprep.subr.bf16.mxu0 0
        %1098 = vmatpush1.bf16.xpose.msra.mxu0 0
        %1099 = vmatprep.subr.bf16.mxu0 0
        %1100 = vmatpush1.bf16.xpose.msra.mxu0 0
        %1101 = vmatprep.subr.bf16.mxu0 0
        %1102 = vmatpush1.bf16.xpose.msra.mxu0 0
        %1103 = vmatprep.subr.bf16.mxu0 0
        %1104 = vmatpush1.bf16.xpose.msra.mxu0 0
        %1105 = vmatprep.subr.bf16.mxu0 0
        %1106 = vmatpush1.bf16.xpose.msra.mxu0 0
        %1107 = vmatprep.subr.bf16.mxu0 0
        %1108 = vmatpush1.bf16.xpose.msra.mxu0 0
        %1109 = vmatprep.subr.bf16.mxu0 0
        %1110 = vmatpush1.bf16.xpose.msra.mxu0 0
        %1111 = vmatprep.subr.bf16.mxu0 0
        %1112 = vmatpush1.bf16.xpose.msra.mxu0 0
        %1113 = vmatprep.subr.bf16.mxu0 0
        %1114 = vmatpush1.bf16.xpose.msra.mxu0 0
        %1115 = vmatprep.subr.bf16.mxu0 0
        %1116 = vmatpush1.bf16.xpose.msra.mxu0 0
        %1117 = vmatprep.subr.bf16.mxu0 0
        %1118 = vmatpush1.bf16.xpose.msra.mxu0 0
        %1119 = vmatprep.mubr.bf16.mxu0 0
        %1120 = vmatmul.mubr.bf16.gmra.mrb[0].mxu0 %v1082
        %v1121 = vpop.f32.mrb[0].mxu0
        %v1122 = vadd.f32 0.0, %v1121
        %v1123 = vpop.f32.mrb[0].mxu0
        %v1124 = vpop.f32.mrb[0].mxu0
        %v1125 = vpop.f32.mrb[0].mxu0
        %1126 = vdwg.mxu0
        %1127 = vrot.lane.b32.xlu0 %v777, 116
        %v1128 = vpop.permute.xlu0 %1127
        %1129 = vrot.lane.b32.xlu0 %v777, 84
        %v1130 = vpop.permute.xlu0 %1129
        %v1132 = vsel %vm781, %v1128, 0
        %v1135 = vsel %vm781, %v1130, 0
        %1137 = vmatprep.subr.bf16.mxu0 0
        %1138 = vmatpush1.bf16.xpose.msra.mxu0 %v1135
        %1139 = vmatprep.subr.bf16.mxu0 0
        %1140 = vmatpush1.bf16.xpose.msra.mxu0 0
        %1141 = vmatprep.subr.bf16.mxu0 0
        %1142 = vmatpush1.bf16.xpose.msra.mxu0 0
        %1143 = vmatprep.subr.bf16.mxu0 0
        %1144 = vmatpush1.bf16.xpose.msra.mxu0 0
        %1145 = vmatprep.subr.bf16.mxu0 0
        %1146 = vmatpush1.bf16.xpose.msra.mxu0 0
        %1147 = vmatprep.subr.bf16.mxu0 0
        %1148 = vmatpush1.bf16.xpose.msra.mxu0 0
        %1149 = vmatprep.subr.bf16.mxu0 0
        %1150 = vmatpush1.bf16.xpose.msra.mxu0 0
        %1151 = vmatprep.subr.bf16.mxu0 0
        %1152 = vmatpush1.bf16.xpose.msra.mxu0 0
        %1153 = vmatprep.subr.bf16.mxu0 0
        %1154 = vmatpush1.bf16.xpose.msra.mxu0 0
        %1155 = vmatprep.subr.bf16.mxu0 0
        %1156 = vmatpush1.bf16.xpose.msra.mxu0 0
        %1157 = vmatprep.subr.bf16.mxu0 0
        %1158 = vmatpush1.bf16.xpose.msra.mxu0 0
        %1159 = vmatprep.subr.bf16.mxu0 0
        %1160 = vmatpush1.bf16.xpose.msra.mxu0 0
        %1161 = vmatprep.subr.bf16.mxu0 0
        %1162 = vmatpush1.bf16.xpose.msra.mxu0 0
        %1163 = vmatprep.subr.bf16.mxu0 0
        %1164 = vmatpush1.bf16.xpose.msra.mxu0 0
        %1165 = vmatprep.subr.bf16.mxu0 0
        %1166 = vmatpush1.bf16.xpose.msra.mxu0 0
        %1167 = vmatprep.subr.bf16.mxu0 0
        %1168 = vmatpush1.bf16.xpose.msra.mxu0 0
        %1169 = vmatprep.mubr.bf16.mxu0 0
        %1170 = vmatmul.mubr.bf16.gmra.mrb[0].mxu0 %v1132
        %v1171 = vpop.f32.mrb[0].mxu0
        %v1172 = vadd.f32 0.0, %v1171
        %v1173 = vpop.f32.mrb[0].mxu0
        %v1174 = vpop.f32.mrb[0].mxu0
        %v1175 = vpop.f32.mrb[0].mxu0
        %1176 = vdwg.mxu0
        %1177 = vrot.lane.b32.xlu0 %v776, 112
        %v1178 = vpop.permute.xlu0 %1177
        %1179 = vrot.lane.b32.xlu0 %v776, 80
        %v1180 = vpop.permute.xlu0 %1179
        %v1182 = vsel %vm781, %v1178, 0
        %v1185 = vsel %vm781, %v1180, 0
        %1187 = vmatprep.subr.bf16.mxu0 0
        %1188 = vmatpush1.bf16.xpose.msra.mxu0 %v1185
        %1189 = vmatprep.subr.bf16.mxu0 0
        %1190 = vmatpush1.bf16.xpose.msra.mxu0 0
        %1191 = vmatprep.subr.bf16.mxu0 0
        %1192 = vmatpush1.bf16.xpose.msra.mxu0 0
        %1193 = vmatprep.subr.bf16.mxu0 0
        %1194 = vmatpush1.bf16.xpose.msra.mxu0 0
        %1195 = vmatprep.subr.bf16.mxu0 0
        %1196 = vmatpush1.bf16.xpose.msra.mxu0 0
        %1197 = vmatprep.subr.bf16.mxu0 0
        %1198 = vmatpush1.bf16.xpose.msra.mxu0 0
        %1199 = vmatprep.subr.bf16.mxu0 0
        %1200 = vmatpush1.bf16.xpose.msra.mxu0 0
        %1201 = vmatprep.subr.bf16.mxu0 0
        %1202 = vmatpush1.bf16.xpose.msra.mxu0 0
        %1203 = vmatprep.subr.bf16.mxu0 0
        %1204 = vmatpush1.bf16.xpose.msra.mxu0 0
        %1205 = vmatprep.subr.bf16.mxu0 0
        %1206 = vmatpush1.bf16.xpose.msra.mxu0 0
        %1207 = vmatprep.subr.bf16.mxu0 0
        %1208 = vmatpush1.bf16.xpose.msra.mxu0 0
        %1209 = vmatprep.subr.bf16.mxu0 0
        %1210 = vmatpush1.bf16.xpose.msra.mxu0 0
        %1211 = vmatprep.subr.bf16.mxu0 0
        %1212 = vmatpush1.bf16.xpose.msra.mxu0 0
        %1213 = vmatprep.subr.bf16.mxu0 0
        %1214 = vmatpush1.bf16.xpose.msra.mxu0 0
        %1215 = vmatprep.subr.bf16.mxu0 0
        %1216 = vmatpush1.bf16.xpose.msra.mxu0 0
        %1217 = vmatprep.subr.bf16.mxu0 0
        %1218 = vmatpush1.bf16.xpose.msra.mxu0 0
        %1219 = vmatprep.mubr.bf16.mxu0 0
        %1220 = vmatmul.mubr.bf16.gmra.mrb[0].mxu0 %v1182
        %v1221 = vpop.f32.mrb[0].mxu0
        %v1222 = vadd.f32 0.0, %v1221
        %v1223 = vpop.f32.mrb[0].mxu0
        %v1224 = vpop.f32.mrb[0].mxu0
        %v1225 = vpop.f32.mrb[0].mxu0
        %1226 = vdwg.mxu0
        %1227 = vrot.lane.b32.xlu0 %v777, 112
        %v1228 = vpop.permute.xlu0 %1227
        %1229 = vrot.lane.b32.xlu0 %v777, 80
        %v1230 = vpop.permute.xlu0 %1229
        %v1232 = vsel %vm781, %v1228, 0
        %v1235 = vsel %vm781, %v1230, 0
        %1237 = vmatprep.subr.bf16.mxu0 0
        %1238 = vmatpush1.bf16.xpose.msra.mxu0 %v1235
        %1239 = vmatprep.subr.bf16.mxu0 0
        %1240 = vmatpush1.bf16.xpose.msra.mxu0 0
        %1241 = vmatprep.subr.bf16.mxu0 0
        %1242 = vmatpush1.bf16.xpose.msra.mxu0 0
        %1243 = vmatprep.subr.bf16.mxu0 0
        %1244 = vmatpush1.bf16.xpose.msra.mxu0 0
        %1245 = vmatprep.subr.bf16.mxu0 0
        %1246 = vmatpush1.bf16.xpose.msra.mxu0 0
        %1247 = vmatprep.subr.bf16.mxu0 0
        %1248 = vmatpush1.bf16.xpose.msra.mxu0 0
        %1249 = vmatprep.subr.bf16.mxu0 0
        %1250 = vmatpush1.bf16.xpose.msra.mxu0 0
        %1251 = vmatprep.subr.bf16.mxu0 0
        %1252 = vmatpush1.bf16.xpose.msra.mxu0 0
        %1253 = vmatprep.subr.bf16.mxu0 0
        %1254 = vmatpush1.bf16.xpose.msra.mxu0 0
        %1255 = vmatprep.subr.bf16.mxu0 0
        %1256 = vmatpush1.bf16.xpose.msra.mxu0 0
        %1257 = vmatprep.subr.bf16.mxu0 0
        %1258 = vmatpush1.bf16.xpose.msra.mxu0 0
        %1259 = vmatprep.subr.bf16.mxu0 0
        %1260 = vmatpush1.bf16.xpose.msra.mxu0 0
        %1261 = vmatprep.subr.bf16.mxu0 0
        %1262 = vmatpush1.bf16.xpose.msra.mxu0 0
        %1263 = vmatprep.subr.bf16.mxu0 0
        %1264 = vmatpush1.bf16.xpose.msra.mxu0 0
        %1265 = vmatprep.subr.bf16.mxu0 0
        %1266 = vmatpush1.bf16.xpose.msra.mxu0 0
        %1267 = vmatprep.subr.bf16.mxu0 0
        %1268 = vmatpush1.bf16.xpose.msra.mxu0 0
        %1269 = vmatprep.mubr.bf16.mxu0 0
        %1270 = vmatmul.mubr.bf16.gmra.mrb[0].mxu0 %v1232
        %v1271 = vpop.f32.mrb[0].mxu0
        %v1272 = vadd.f32 0.0, %v1271
        %v1273 = vpop.f32.mrb[0].mxu0
        %v1274 = vpop.f32.mrb[0].mxu0
        %v1275 = vpop.f32.mrb[0].mxu0
        %1276 = vdwg.mxu0
        %1277 = vrot.lane.b32.xlu0 %v776, 108
        %v1278 = vpop.permute.xlu0 %1277
        %1279 = vrot.lane.b32.xlu0 %v776, 76
        %v1280 = vpop.permute.xlu0 %1279
        %v1282 = vsel %vm781, %v1278, 0
        %v1285 = vsel %vm781, %v1280, 0
        %1287 = vmatprep.subr.bf16.mxu0 0
        %1288 = vmatpush1.bf16.xpose.msra.mxu0 %v1285
        %1289 = vmatprep.subr.bf16.mxu0 0
        %1290 = vmatpush1.bf16.xpose.msra.mxu0 0
        %1291 = vmatprep.subr.bf16.mxu0 0
        %1292 = vmatpush1.bf16.xpose.msra.mxu0 0
        %1293 = vmatprep.subr.bf16.mxu0 0
        %1294 = vmatpush1.bf16.xpose.msra.mxu0 0
        %1295 = vmatprep.subr.bf16.mxu0 0
        %1296 = vmatpush1.bf16.xpose.msra.mxu0 0
        %1297 = vmatprep.subr.bf16.mxu0 0
        %1298 = vmatpush1.bf16.xpose.msra.mxu0 0
        %1299 = vmatprep.subr.bf16.mxu0 0
        %1300 = vmatpush1.bf16.xpose.msra.mxu0 0
        %1301 = vmatprep.subr.bf16.mxu0 0
        %1302 = vmatpush1.bf16.xpose.msra.mxu0 0
        %1303 = vmatprep.subr.bf16.mxu0 0
        %1304 = vmatpush1.bf16.xpose.msra.mxu0 0
        %1305 = vmatprep.subr.bf16.mxu0 0
        %1306 = vmatpush1.bf16.xpose.msra.mxu0 0
        %1307 = vmatprep.subr.bf16.mxu0 0
        %1308 = vmatpush1.bf16.xpose.msra.mxu0 0
        %1309 = vmatprep.subr.bf16.mxu0 0
        %1310 = vmatpush1.bf16.xpose.msra.mxu0 0
        %1311 = vmatprep.subr.bf16.mxu0 0
        %1312 = vmatpush1.bf16.xpose.msra.mxu0 0
        %1313 = vmatprep.subr.bf16.mxu0 0
        %1314 = vmatpush1.bf16.xpose.msra.mxu0 0
        %1315 = vmatprep.subr.bf16.mxu0 0
        %1316 = vmatpush1.bf16.xpose.msra.mxu0 0
        %1317 = vmatprep.subr.bf16.mxu0 0
        %1318 = vmatpush1.bf16.xpose.msra.mxu0 0
        %1319 = vmatprep.mubr.bf16.mxu0 0
        %1320 = vmatmul.mubr.bf16.gmra.mrb[0].mxu0 %v1282
        %v1321 = vpop.f32.mrb[0].mxu0
        %v1322 = vadd.f32 0.0, %v1321
        %v1323 = vpop.f32.mrb[0].mxu0
        %v1324 = vpop.f32.mrb[0].mxu0
        %v1325 = vpop.f32.mrb[0].mxu0
        %1326 = vdwg.mxu0
        %1327 = vrot.lane.b32.xlu0 %v777, 108
        %v1328 = vpop.permute.xlu0 %1327
        %1329 = vrot.lane.b32.xlu0 %v777, 76
        %v1330 = vpop.permute.xlu0 %1329
        %v1332 = vsel %vm781, %v1328, 0
        %v1335 = vsel %vm781, %v1330, 0
        %1337 = vmatprep.subr.bf16.mxu0 0
        %1338 = vmatpush1.bf16.xpose.msra.mxu0 %v1335
        %1339 = vmatprep.subr.bf16.mxu0 0
        %1340 = vmatpush1.bf16.xpose.msra.mxu0 0
        %1341 = vmatprep.subr.bf16.mxu0 0
        %1342 = vmatpush1.bf16.xpose.msra.mxu0 0
        %1343 = vmatprep.subr.bf16.mxu0 0
        %1344 = vmatpush1.bf16.xpose.msra.mxu0 0
        %1345 = vmatprep.subr.bf16.mxu0 0
        %1346 = vmatpush1.bf16.xpose.msra.mxu0 0
        %1347 = vmatprep.subr.bf16.mxu0 0
        %1348 = vmatpush1.bf16.xpose.msra.mxu0 0
        %1349 = vmatprep.subr.bf16.mxu0 0
        %1350 = vmatpush1.bf16.xpose.msra.mxu0 0
        %1351 = vmatprep.subr.bf16.mxu0 0
        %1352 = vmatpush1.bf16.xpose.msra.mxu0 0
        %1353 = vmatprep.subr.bf16.mxu0 0
        %1354 = vmatpush1.bf16.xpose.msra.mxu0 0
        %1355 = vmatprep.subr.bf16.mxu0 0
        %1356 = vmatpush1.bf16.xpose.msra.mxu0 0
        %1357 = vmatprep.subr.bf16.mxu0 0
        %1358 = vmatpush1.bf16.xpose.msra.mxu0 0
        %1359 = vmatprep.subr.bf16.mxu0 0
        %1360 = vmatpush1.bf16.xpose.msra.mxu0 0
        %1361 = vmatprep.subr.bf16.mxu0 0
        %1362 = vmatpush1.bf16.xpose.msra.mxu0 0
        %1363 = vmatprep.subr.bf16.mxu0 0
        %1364 = vmatpush1.bf16.xpose.msra.mxu0 0
        %1365 = vmatprep.subr.bf16.mxu0 0
        %1366 = vmatpush1.bf16.xpose.msra.mxu0 0
        %1367 = vmatprep.subr.bf16.mxu0 0
        %1368 = vmatpush1.bf16.xpose.msra.mxu0 0
        %1369 = vmatprep.mubr.bf16.mxu0 0
        %1370 = vmatmul.mubr.bf16.gmra.mrb[0].mxu0 %v1332
        %v1371 = vpop.f32.mrb[0].mxu0
        %v1372 = vadd.f32 0.0, %v1371
        %v1373 = vpop.f32.mrb[0].mxu0
        %v1374 = vpop.f32.mrb[0].mxu0
        %v1375 = vpop.f32.mrb[0].mxu0
        %1376 = vdwg.mxu0
        %1377 = vrot.lane.b32.xlu0 %v776, 104
        %v1378 = vpop.permute.xlu0 %1377
        %1379 = vrot.lane.b32.xlu0 %v776, 72
        %v1380 = vpop.permute.xlu0 %1379
        %v1382 = vsel %vm781, %v1378, 0
        %v1385 = vsel %vm781, %v1380, 0
        %1387 = vmatprep.subr.bf16.mxu0 0
        %1388 = vmatpush1.bf16.xpose.msra.mxu0 %v1385
        %1389 = vmatprep.subr.bf16.mxu0 0
        %1390 = vmatpush1.bf16.xpose.msra.mxu0 0
        %1391 = vmatprep.subr.bf16.mxu0 0
        %1392 = vmatpush1.bf16.xpose.msra.mxu0 0
        %1393 = vmatprep.subr.bf16.mxu0 0
        %1394 = vmatpush1.bf16.xpose.msra.mxu0 0
        %1395 = vmatprep.subr.bf16.mxu0 0
        %1396 = vmatpush1.bf16.xpose.msra.mxu0 0
        %1397 = vmatprep.subr.bf16.mxu0 0
        %1398 = vmatpush1.bf16.xpose.msra.mxu0 0
        %1399 = vmatprep.subr.bf16.mxu0 0
        %1400 = vmatpush1.bf16.xpose.msra.mxu0 0
        %1401 = vmatprep.subr.bf16.mxu0 0
        %1402 = vmatpush1.bf16.xpose.msra.mxu0 0
        %1403 = vmatprep.subr.bf16.mxu0 0
        %1404 = vmatpush1.bf16.xpose.msra.mxu0 0
        %1405 = vmatprep.subr.bf16.mxu0 0
        %1406 = vmatpush1.bf16.xpose.msra.mxu0 0
        %1407 = vmatprep.subr.bf16.mxu0 0
        %1408 = vmatpush1.bf16.xpose.msra.mxu0 0
        %1409 = vmatprep.subr.bf16.mxu0 0
        %1410 = vmatpush1.bf16.xpose.msra.mxu0 0
        %1411 = vmatprep.subr.bf16.mxu0 0
        %1412 = vmatpush1.bf16.xpose.msra.mxu0 0
        %1413 = vmatprep.subr.bf16.mxu0 0
        %1414 = vmatpush1.bf16.xpose.msra.mxu0 0
        %1415 = vmatprep.subr.bf16.mxu0 0
        %1416 = vmatpush1.bf16.xpose.msra.mxu0 0
        %1417 = vmatprep.subr.bf16.mxu0 0
        %1418 = vmatpush1.bf16.xpose.msra.mxu0 0
        %1419 = vmatprep.mubr.bf16.mxu0 0
        %1420 = vmatmul.mubr.bf16.gmra.mrb[0].mxu0 %v1382
        %v1421 = vpop.f32.mrb[0].mxu0
        %v1422 = vadd.f32 0.0, %v1421
        %v1423 = vpop.f32.mrb[0].mxu0
        %v1424 = vpop.f32.mrb[0].mxu0
        %v1425 = vpop.f32.mrb[0].mxu0
        %1426 = vdwg.mxu0
        %1427 = vrot.lane.b32.xlu0 %v777, 104
        %v1428 = vpop.permute.xlu0 %1427
        %1429 = vrot.lane.b32.xlu0 %v777, 72
        %v1430 = vpop.permute.xlu0 %1429
        %v1432 = vsel %vm781, %v1428, 0
        %v1435 = vsel %vm781, %v1430, 0
        %1437 = vmatprep.subr.bf16.mxu0 0
        %1438 = vmatpush1.bf16.xpose.msra.mxu0 %v1435
        %1439 = vmatprep.subr.bf16.mxu0 0
        %1440 = vmatpush1.bf16.xpose.msra.mxu0 0
        %1441 = vmatprep.subr.bf16.mxu0 0
        %1442 = vmatpush1.bf16.xpose.msra.mxu0 0
        %1443 = vmatprep.subr.bf16.mxu0 0
        %1444 = vmatpush1.bf16.xpose.msra.mxu0 0
        %1445 = vmatprep.subr.bf16.mxu0 0
        %1446 = vmatpush1.bf16.xpose.msra.mxu0 0
        %1447 = vmatprep.subr.bf16.mxu0 0
        %1448 = vmatpush1.bf16.xpose.msra.mxu0 0
        %1449 = vmatprep.subr.bf16.mxu0 0
        %1450 = vmatpush1.bf16.xpose.msra.mxu0 0
        %1451 = vmatprep.subr.bf16.mxu0 0
        %1452 = vmatpush1.bf16.xpose.msra.mxu0 0
        %1453 = vmatprep.subr.bf16.mxu0 0
        %1454 = vmatpush1.bf16.xpose.msra.mxu0 0
        %1455 = vmatprep.subr.bf16.mxu0 0
        %1456 = vmatpush1.bf16.xpose.msra.mxu0 0
        %1457 = vmatprep.subr.bf16.mxu0 0
        %1458 = vmatpush1.bf16.xpose.msra.mxu0 0
        %1459 = vmatprep.subr.bf16.mxu0 0
        %1460 = vmatpush1.bf16.xpose.msra.mxu0 0
        %1461 = vmatprep.subr.bf16.mxu0 0
        %1462 = vmatpush1.bf16.xpose.msra.mxu0 0
        %1463 = vmatprep.subr.bf16.mxu0 0
        %1464 = vmatpush1.bf16.xpose.msra.mxu0 0
        %1465 = vmatprep.subr.bf16.mxu0 0
        %1466 = vmatpush1.bf16.xpose.msra.mxu0 0
        %1467 = vmatprep.subr.bf16.mxu0 0
        %1468 = vmatpush1.bf16.xpose.msra.mxu0 0
        %1469 = vmatprep.mubr.bf16.mxu0 0
        %1470 = vmatmul.mubr.bf16.gmra.mrb[0].mxu0 %v1432
        %v1471 = vpop.f32.mrb[0].mxu0
        %v1472 = vadd.f32 0.0, %v1471
        %v1473 = vpop.f32.mrb[0].mxu0
        %v1474 = vpop.f32.mrb[0].mxu0
        %v1475 = vpop.f32.mrb[0].mxu0
        %1476 = vdwg.mxu0
        %1477 = vrot.lane.b32.xlu0 %v776, 100
        %v1478 = vpop.permute.xlu0 %1477
        %1479 = vrot.lane.b32.xlu0 %v776, 68
        %v1480 = vpop.permute.xlu0 %1479
        %v1482 = vsel %vm781, %v1478, 0
        %v1485 = vsel %vm781, %v1480, 0
        %1487 = vmatprep.subr.bf16.mxu0 0
        %1488 = vmatpush1.bf16.xpose.msra.mxu0 %v1485
        %1489 = vmatprep.subr.bf16.mxu0 0
        %1490 = vmatpush1.bf16.xpose.msra.mxu0 0
        %1491 = vmatprep.subr.bf16.mxu0 0
        %1492 = vmatpush1.bf16.xpose.msra.mxu0 0
        %1493 = vmatprep.subr.bf16.mxu0 0
        %1494 = vmatpush1.bf16.xpose.msra.mxu0 0
        %1495 = vmatprep.subr.bf16.mxu0 0
        %1496 = vmatpush1.bf16.xpose.msra.mxu0 0
        %1497 = vmatprep.subr.bf16.mxu0 0
        %1498 = vmatpush1.bf16.xpose.msra.mxu0 0
        %1499 = vmatprep.subr.bf16.mxu0 0
        %1500 = vmatpush1.bf16.xpose.msra.mxu0 0
        %1501 = vmatprep.subr.bf16.mxu0 0
        %1502 = vmatpush1.bf16.xpose.msra.mxu0 0
        %1503 = vmatprep.subr.bf16.mxu0 0
        %1504 = vmatpush1.bf16.xpose.msra.mxu0 0
        %1505 = vmatprep.subr.bf16.mxu0 0
        %1506 = vmatpush1.bf16.xpose.msra.mxu0 0
        %1507 = vmatprep.subr.bf16.mxu0 0
        %1508 = vmatpush1.bf16.xpose.msra.mxu0 0
        %1509 = vmatprep.subr.bf16.mxu0 0
        %1510 = vmatpush1.bf16.xpose.msra.mxu0 0
        %1511 = vmatprep.subr.bf16.mxu0 0
        %1512 = vmatpush1.bf16.xpose.msra.mxu0 0
        %1513 = vmatprep.subr.bf16.mxu0 0
        %1514 = vmatpush1.bf16.xpose.msra.mxu0 0
        %1515 = vmatprep.subr.bf16.mxu0 0
        %1516 = vmatpush1.bf16.xpose.msra.mxu0 0
        %1517 = vmatprep.subr.bf16.mxu0 0
        %1518 = vmatpush1.bf16.xpose.msra.mxu0 0
        %1519 = vmatprep.mubr.bf16.mxu0 0
        %1520 = vmatmul.mubr.bf16.gmra.mrb[0].mxu0 %v1482
        %v1521 = vpop.f32.mrb[0].mxu0
        %v1522 = vadd.f32 0.0, %v1521
        %v1523 = vpop.f32.mrb[0].mxu0
        %v1524 = vpop.f32.mrb[0].mxu0
        %v1525 = vpop.f32.mrb[0].mxu0
        %1526 = vdwg.mxu0
        %1527 = vrot.lane.b32.xlu0 %v777, 100
        %v1528 = vpop.permute.xlu0 %1527
        %1529 = vrot.lane.b32.xlu0 %v777, 68
        %v1530 = vpop.permute.xlu0 %1529
        %v1532 = vsel %vm781, %v1528, 0
        %v1535 = vsel %vm781, %v1530, 0
        %1537 = vmatprep.subr.bf16.mxu0 0
        %1538 = vmatpush1.bf16.xpose.msra.mxu0 %v1535
        %1539 = vmatprep.subr.bf16.mxu0 0
        %1540 = vmatpush1.bf16.xpose.msra.mxu0 0
        %1541 = vmatprep.subr.bf16.mxu0 0
        %1542 = vmatpush1.bf16.xpose.msra.mxu0 0
        %1543 = vmatprep.subr.bf16.mxu0 0
        %1544 = vmatpush1.bf16.xpose.msra.mxu0 0
        %1545 = vmatprep.subr.bf16.mxu0 0
        %1546 = vmatpush1.bf16.xpose.msra.mxu0 0
        %1547 = vmatprep.subr.bf16.mxu0 0
        %1548 = vmatpush1.bf16.xpose.msra.mxu0 0
        %1549 = vmatprep.subr.bf16.mxu0 0
        %1550 = vmatpush1.bf16.xpose.msra.mxu0 0
        %1551 = vmatprep.subr.bf16.mxu0 0
        %1552 = vmatpush1.bf16.xpose.msra.mxu0 0
        %1553 = vmatprep.subr.bf16.mxu0 0
        %1554 = vmatpush1.bf16.xpose.msra.mxu0 0
        %1555 = vmatprep.subr.bf16.mxu0 0
        %1556 = vmatpush1.bf16.xpose.msra.mxu0 0
        %1557 = vmatprep.subr.bf16.mxu0 0
        %1558 = vmatpush1.bf16.xpose.msra.mxu0 0
        %1559 = vmatprep.subr.bf16.mxu0 0
        %1560 = vmatpush1.bf16.xpose.msra.mxu0 0
        %1561 = vmatprep.subr.bf16.mxu0 0
        %1562 = vmatpush1.bf16.xpose.msra.mxu0 0
        %1563 = vmatprep.subr.bf16.mxu0 0
        %1564 = vmatpush1.bf16.xpose.msra.mxu0 0
        %1565 = vmatprep.subr.bf16.mxu0 0
        %1566 = vmatpush1.bf16.xpose.msra.mxu0 0
        %1567 = vmatprep.subr.bf16.mxu0 0
        %1568 = vmatpush1.bf16.xpose.msra.mxu0 0
        %1569 = vmatprep.mubr.bf16.mxu0 0
        %1570 = vmatmul.mubr.bf16.gmra.mrb[0].mxu0 %v1532
        %v1571 = vpop.f32.mrb[0].mxu0
        %v1572 = vadd.f32 0.0, %v1571
        %v1573 = vpop.f32.mrb[0].mxu0
        %v1574 = vpop.f32.mrb[0].mxu0
        %v1575 = vpop.f32.mrb[0].mxu0
        %1576 = vdwg.mxu0
        %v1577 = vmax.f32 %v823, %v922
        %v1578 = vmax.f32 %v872, %v972
        %v1579 = vmax.f32 %v1577, %v1022
        %v1580 = vmax.f32 %v1578, %v1072
        %v1581 = vmax.f32 %v1579, %v1122
        %v1582 = vmax.f32 %v1580, %v1172
        %v1583 = vmax.f32 %v1581, %v1222
        %v1584 = vmax.f32 %v1582, %v1272
        %v1585 = vmax.f32 %v1583, %v1322
        %v1586 = vmax.f32 %v1584, %v1372
        %v1587 = vmax.f32 %v1585, %v1422
        %v1588 = vmax.f32 %v1586, %v1472
        %v1589 = vmax.f32 %v1587, %v1522
        %v1590 = vmax.f32 %v1588, %v1572
        %v1591 = vsub.f32 %v823, %v1589
        %v1592 = vsub.f32 %v872, %v1590
        %v1593 = vmul.f32 %v1591, 1.442695
        %v1594 = vpow.pop %v1593
        %v1595 = vmul.f32 %v1592, 1.442695
        %v1596 = vpow.pop %v1595
        %v1597 = vsub.f32 %v922, %v1589
        %v1598 = vsub.f32 %v972, %v1590
        %v1599 = vmul.f32 %v1597, 1.442695
        %v1600 = vpow.pop %v1599
        %v1601 = vmul.f32 %v1598, 1.442695
        %v1602 = vpow.pop %v1601
        %v1603 = vsub.f32 %v1022, %v1589
        %v1604 = vsub.f32 %v1072, %v1590
        %v1605 = vmul.f32 %v1603, 1.442695
        %v1606 = vpow.pop %v1605
        %v1607 = vmul.f32 %v1604, 1.442695
        %v1608 = vpow.pop %v1607
        %v1609 = vsub.f32 %v1122, %v1589
        %v1610 = vsub.f32 %v1172, %v1590
        %v1611 = vmul.f32 %v1609, 1.442695
        %v1612 = vpow.pop %v1611
        %v1613 = vmul.f32 %v1610, 1.442695
        %v1614 = vpow.pop %v1613
        %v1615 = vsub.f32 %v1222, %v1589
        %v1616 = vsub.f32 %v1272, %v1590
        %v1617 = vmul.f32 %v1615, 1.442695
        %v1618 = vpow.pop %v1617
        %v1619 = vmul.f32 %v1616, 1.442695
        %v1620 = vpow.pop %v1619
        %v1621 = vsub.f32 %v1322, %v1589
        %v1622 = vsub.f32 %v1372, %v1590
        %v1623 = vmul.f32 %v1621, 1.442695
        %v1624 = vpow.pop %v1623
        %v1625 = vmul.f32 %v1622, 1.442695
        %v1626 = vpow.pop %v1625
        %v1627 = vsub.f32 %v1422, %v1589
        %v1628 = vsub.f32 %v1472, %v1590
        %v1629 = vmul.f32 %v1627, 1.442695
        %v1630 = vpow.pop %v1629
        %v1631 = vmul.f32 %v1628, 1.442695
        %v1632 = vpow.pop %v1631
        %v1633 = vsub.f32 %v1522, %v1589
        %v1634 = vsub.f32 %v1572, %v1590
        %v1635 = vmul.f32 %v1633, 1.442695
        %v1636 = vpow.pop %v1635
        %v1637 = vmul.f32 %v1634, 1.442695
        %v1638 = vpow.pop %v1637
        %v1639 = vadd.f32 %v1594, %v1600
        %v1640 = vadd.f32 %v1596, %v1602
        %v1641 = vadd.f32 %v1639, %v1606
        %v1642 = vadd.f32 %v1640, %v1608
        %v1643 = vadd.f32 %v1641, %v1612
        %v1644 = vadd.f32 %v1642, %v1614
        %v1645 = vadd.f32 %v1643, %v1618
        %v1646 = vadd.f32 %v1644, %v1620
        %v1647 = vadd.f32 %v1645, %v1624
        %v1648 = vadd.f32 %v1646, %v1626
        %v1649 = vadd.f32 %v1647, %v1630
        %v1650 = vadd.f32 %v1648, %v1632
        %v1651 = vadd.f32 %v1649, %v1636
        %v1652 = vadd.f32 %v1650, %v1638
        %v1653 = vrcp.pop %v1651
        %v1654 = vrcp.pop %v1652
        %v1655 = vmul.f32 %v1594, %v1653
        %v1656 = vmul.f32 %v1596, %v1654
        %v1657 = vpack.c.bf16 %v1655, %v1655
        %v1658 = vpack.c.bf16 %v1656, %v1656
        %1659 = vrot.lane.b32.xlu0 %v776, 64
        %v1660 = vpop.permute.xlu0 %1659
        %vm1661 = vcmask 64512
        %v1663 = vsel %vm1661, %v1657, 0
        %vm1665 = vcmask 1043456
        %v1667 = vsel %vm1665, %v1660, 0
        %1669 = vmatprep.subr.bf16.mxu0 0
        %1670 = vmatpush1.bf16.msra.mxu0 %v1667
        %1671 = vmatprep.subr.bf16.mxu0 0
        %1672 = vmatpush1.bf16.msra.mxu0 0
        %1673 = vmatprep.subr.bf16.mxu0 0
        %1674 = vmatpush1.bf16.msra.mxu0 0
        %1675 = vmatprep.subr.bf16.mxu0 0
        %1676 = vmatpush1.bf16.msra.mxu0 0
        %1677 = vmatprep.subr.bf16.mxu0 0
        %1678 = vmatpush1.bf16.msra.mxu0 0
        %1679 = vmatprep.subr.bf16.mxu0 0
        %1680 = vmatpush1.bf16.msra.mxu0 0
        %1681 = vmatprep.subr.bf16.mxu0 0
        %1682 = vmatpush1.bf16.msra.mxu0 0
        %1683 = vmatprep.subr.bf16.mxu0 0
        %1684 = vmatpush1.bf16.msra.mxu0 0
        %1685 = vmatprep.subr.bf16.mxu0 0
        %1686 = vmatpush1.bf16.msra.mxu0 0
        %1687 = vmatprep.subr.bf16.mxu0 0
        %1688 = vmatpush1.bf16.msra.mxu0 0
        %1689 = vmatprep.subr.bf16.mxu0 0
        %1690 = vmatpush1.bf16.msra.mxu0 0
        %1691 = vmatprep.subr.bf16.mxu0 0
        %1692 = vmatpush1.bf16.msra.mxu0 0
        %1693 = vmatprep.subr.bf16.mxu0 0
        %1694 = vmatpush1.bf16.msra.mxu0 0
        %1695 = vmatprep.subr.bf16.mxu0 0
        %1696 = vmatpush1.bf16.msra.mxu0 0
        %1697 = vmatprep.subr.bf16.mxu0 0
        %1698 = vmatpush1.bf16.msra.mxu0 0
        %1699 = vmatprep.subr.bf16.mxu0 0
        %1700 = vmatpush1.bf16.msra.mxu0 0
        %1701 = vmatprep.mubr.bf16.mxu0 0
        %1702 = vmatmul.mubr.bf16.gmra.mrb[0].mxu0 %v1663
        %v1703 = vpop.f32.mrb[0].mxu0
        %v1704 = vadd.f32 0.0, %v1703
        %v1705 = vpop.f32.mrb[0].mxu0
        %v1706 = vpop.f32.mrb[0].mxu0
        %v1707 = vpop.f32.mrb[0].mxu0
        %1708 = vdwg.mxu0
        %1709 = vrot.lane.b32.xlu0 %v777, 64
        %v1710 = vpop.permute.xlu0 %1709
        %v1712 = vsel %vm1661, %v1658, 0
        %v1715 = vsel %vm1665, %v1710, 0
        %1717 = vmatprep.subr.bf16.mxu0 0
        %1718 = vmatpush1.bf16.msra.mxu0 %v1715
        %1719 = vmatprep.subr.bf16.mxu0 0
        %1720 = vmatpush1.bf16.msra.mxu0 0
        %1721 = vmatprep.subr.bf16.mxu0 0
        %1722 = vmatpush1.bf16.msra.mxu0 0
        %1723 = vmatprep.subr.bf16.mxu0 0
        %1724 = vmatpush1.bf16.msra.mxu0 0
        %1725 = vmatprep.subr.bf16.mxu0 0
        %1726 = vmatpush1.bf16.msra.mxu0 0
        %1727 = vmatprep.subr.bf16.mxu0 0
        %1728 = vmatpush1.bf16.msra.mxu0 0
        %1729 = vmatprep.subr.bf16.mxu0 0
        %1730 = vmatpush1.bf16.msra.mxu0 0
        %1731 = vmatprep.subr.bf16.mxu0 0
        %1732 = vmatpush1.bf16.msra.mxu0 0
        %1733 = vmatprep.subr.bf16.mxu0 0
        %1734 = vmatpush1.bf16.msra.mxu0 0
        %1735 = vmatprep.subr.bf16.mxu0 0
        %1736 = vmatpush1.bf16.msra.mxu0 0
        %1737 = vmatprep.subr.bf16.mxu0 0
        %1738 = vmatpush1.bf16.msra.mxu0 0
        %1739 = vmatprep.subr.bf16.mxu0 0
        %1740 = vmatpush1.bf16.msra.mxu0 0
        %1741 = vmatprep.subr.bf16.mxu0 0
        %1742 = vmatpush1.bf16.msra.mxu0 0
        %1743 = vmatprep.subr.bf16.mxu0 0
        %1744 = vmatpush1.bf16.msra.mxu0 0
        %1745 = vmatprep.subr.bf16.mxu0 0
        %1746 = vmatpush1.bf16.msra.mxu0 0
        %1747 = vmatprep.subr.bf16.mxu0 0
        %1748 = vmatpush1.bf16.msra.mxu0 0
        %1749 = vmatprep.mubr.bf16.mxu0 0
        %1750 = vmatmul.mubr.bf16.gmra.mrb[0].mxu0 %v1712
        %v1751 = vpop.f32.mrb[0].mxu0
        %v1752 = vadd.f32 0.0, %v1751
        %v1753 = vpop.f32.mrb[0].mxu0
        %v1754 = vpop.f32.mrb[0].mxu0
        %v1755 = vpop.f32.mrb[0].mxu0
        %1756 = vdwg.mxu0
        %v1757 = vmul.f32 %v1600, %v1653
        %v1758 = vmul.f32 %v1602, %v1654
        %v1759 = vpack.c.bf16 %v1757, %v1757
        %v1760 = vpack.c.bf16 %v1758, %v1758
        %1761 = vrot.lane.b32.xlu0 %v776, 60
        %v1762 = vpop.permute.xlu0 %1761
        %v1764 = vsel %vm1661, %v1759, 0
        %v1767 = vsel %vm1665, %v1762, 0
        %1769 = vmatprep.subr.bf16.mxu0 0
        %1770 = vmatpush1.bf16.msra.mxu0 %v1767
        %1771 = vmatprep.subr.bf16.mxu0 0
        %1772 = vmatpush1.bf16.msra.mxu0 0
        %1773 = vmatprep.subr.bf16.mxu0 0
        %1774 = vmatpush1.bf16.msra.mxu0 0
        %1775 = vmatprep.subr.bf16.mxu0 0
        %1776 = vmatpush1.bf16.msra.mxu0 0
        %1777 = vmatprep.subr.bf16.mxu0 0
        %1778 = vmatpush1.bf16.msra.mxu0 0
        %1779 = vmatprep.subr.bf16.mxu0 0
        %1780 = vmatpush1.bf16.msra.mxu0 0
        %1781 = vmatprep.subr.bf16.mxu0 0
        %1782 = vmatpush1.bf16.msra.mxu0 0
        %1783 = vmatprep.subr.bf16.mxu0 0
        %1784 = vmatpush1.bf16.msra.mxu0 0
        %1785 = vmatprep.subr.bf16.mxu0 0
        %1786 = vmatpush1.bf16.msra.mxu0 0
        %1787 = vmatprep.subr.bf16.mxu0 0
        %1788 = vmatpush1.bf16.msra.mxu0 0
        %1789 = vmatprep.subr.bf16.mxu0 0
        %1790 = vmatpush1.bf16.msra.mxu0 0
        %1791 = vmatprep.subr.bf16.mxu0 0
        %1792 = vmatpush1.bf16.msra.mxu0 0
        %1793 = vmatprep.subr.bf16.mxu0 0
        %1794 = vmatpush1.bf16.msra.mxu0 0
        %1795 = vmatprep.subr.bf16.mxu0 0
        %1796 = vmatpush1.bf16.msra.mxu0 0
        %1797 = vmatprep.subr.bf16.mxu0 0
        %1798 = vmatpush1.bf16.msra.mxu0 0
        %1799 = vmatprep.subr.bf16.mxu0 0
        %1800 = vmatpush1.bf16.msra.mxu0 0
        %1801 = vmatprep.mubr.bf16.mxu0 0
        %1802 = vmatmul.mubr.bf16.gmra.mrb[0].mxu0 %v1764
        %v1803 = vpop.f32.mrb[0].mxu0
        %v1804 = vadd.f32 0.0, %v1803
        %v1805 = vpop.f32.mrb[0].mxu0
        %v1806 = vpop.f32.mrb[0].mxu0
        %v1807 = vpop.f32.mrb[0].mxu0
        %1808 = vdwg.mxu0
        %1809 = vrot.lane.b32.xlu0 %v777, 60
        %v1810 = vpop.permute.xlu0 %1809
        %v1812 = vsel %vm1661, %v1760, 0
        %v1815 = vsel %vm1665, %v1810, 0
        %1817 = vmatprep.subr.bf16.mxu0 0
        %1818 = vmatpush1.bf16.msra.mxu0 %v1815
        %1819 = vmatprep.subr.bf16.mxu0 0
        %1820 = vmatpush1.bf16.msra.mxu0 0
        %1821 = vmatprep.subr.bf16.mxu0 0
        %1822 = vmatpush1.bf16.msra.mxu0 0
        %1823 = vmatprep.subr.bf16.mxu0 0
        %1824 = vmatpush1.bf16.msra.mxu0 0
        %1825 = vmatprep.subr.bf16.mxu0 0
        %1826 = vmatpush1.bf16.msra.mxu0 0
        %1827 = vmatprep.subr.bf16.mxu0 0
        %1828 = vmatpush1.bf16.msra.mxu0 0
        %1829 = vmatprep.subr.bf16.mxu0 0
        %1830 = vmatpush1.bf16.msra.mxu0 0
        %1831 = vmatprep.subr.bf16.mxu0 0
        %1832 = vmatpush1.bf16.msra.mxu0 0
        %1833 = vmatprep.subr.bf16.mxu0 0
        %1834 = vmatpush1.bf16.msra.mxu0 0
        %1835 = vmatprep.subr.bf16.mxu0 0
        %1836 = vmatpush1.bf16.msra.mxu0 0
        %1837 = vmatprep.subr.bf16.mxu0 0
        %1838 = vmatpush1.bf16.msra.mxu0 0
        %1839 = vmatprep.subr.bf16.mxu0 0
        %1840 = vmatpush1.bf16.msra.mxu0 0
        %1841 = vmatprep.subr.bf16.mxu0 0
        %1842 = vmatpush1.bf16.msra.mxu0 0
        %1843 = vmatprep.subr.bf16.mxu0 0
        %1844 = vmatpush1.bf16.msra.mxu0 0
        %1845 = vmatprep.subr.bf16.mxu0 0
        %1846 = vmatpush1.bf16.msra.mxu0 0
        %1847 = vmatprep.subr.bf16.mxu0 0
        %1848 = vmatpush1.bf16.msra.mxu0 0
        %1849 = vmatprep.mubr.bf16.mxu0 0
        %1850 = vmatmul.mubr.bf16.gmra.mrb[0].mxu0 %v1812
        %v1851 = vpop.f32.mrb[0].mxu0
        %v1852 = vadd.f32 0.0, %v1851
        %v1853 = vpop.f32.mrb[0].mxu0
        %v1854 = vpop.f32.mrb[0].mxu0
        %v1855 = vpop.f32.mrb[0].mxu0
        %1856 = vdwg.mxu0
        %v1857 = vmul.f32 %v1606, %v1653
        %v1858 = vmul.f32 %v1608, %v1654
        %v1859 = vpack.c.bf16 %v1857, %v1857
        %v1860 = vpack.c.bf16 %v1858, %v1858
        %1861 = vrot.lane.b32.xlu0 %v776, 56
        %v1862 = vpop.permute.xlu0 %1861
        %v1864 = vsel %vm1661, %v1859, 0
        %v1867 = vsel %vm1665, %v1862, 0
        %1869 = vmatprep.subr.bf16.mxu0 0
        %1870 = vmatpush1.bf16.msra.mxu0 %v1867
        %1871 = vmatprep.subr.bf16.mxu0 0
        %1872 = vmatpush1.bf16.msra.mxu0 0
        %1873 = vmatprep.subr.bf16.mxu0 0
        %1874 = vmatpush1.bf16.msra.mxu0 0
        %1875 = vmatprep.subr.bf16.mxu0 0
        %1876 = vmatpush1.bf16.msra.mxu0 0
        %1877 = vmatprep.subr.bf16.mxu0 0
        %1878 = vmatpush1.bf16.msra.mxu0 0
        %1879 = vmatprep.subr.bf16.mxu0 0
        %1880 = vmatpush1.bf16.msra.mxu0 0
        %1881 = vmatprep.subr.bf16.mxu0 0
        %1882 = vmatpush1.bf16.msra.mxu0 0
        %1883 = vmatprep.subr.bf16.mxu0 0
        %1884 = vmatpush1.bf16.msra.mxu0 0
        %1885 = vmatprep.subr.bf16.mxu0 0
        %1886 = vmatpush1.bf16.msra.mxu0 0
        %1887 = vmatprep.subr.bf16.mxu0 0
        %1888 = vmatpush1.bf16.msra.mxu0 0
        %1889 = vmatprep.subr.bf16.mxu0 0
        %1890 = vmatpush1.bf16.msra.mxu0 0
        %1891 = vmatprep.subr.bf16.mxu0 0
        %1892 = vmatpush1.bf16.msra.mxu0 0
        %1893 = vmatprep.subr.bf16.mxu0 0
        %1894 = vmatpush1.bf16.msra.mxu0 0
        %1895 = vmatprep.subr.bf16.mxu0 0
        %1896 = vmatpush1.bf16.msra.mxu0 0
        %1897 = vmatprep.subr.bf16.mxu0 0
        %1898 = vmatpush1.bf16.msra.mxu0 0
        %1899 = vmatprep.subr.bf16.mxu0 0
        %1900 = vmatpush1.bf16.msra.mxu0 0
        %1901 = vmatprep.mubr.bf16.mxu0 0
        %1902 = vmatmul.mubr.bf16.gmra.mrb[0].mxu0 %v1864
        %v1903 = vpop.f32.mrb[0].mxu0
        %v1904 = vadd.f32 0.0, %v1903
        %v1905 = vpop.f32.mrb[0].mxu0
        %v1906 = vpop.f32.mrb[0].mxu0
        %v1907 = vpop.f32.mrb[0].mxu0
        %1908 = vdwg.mxu0
        %1909 = vrot.lane.b32.xlu0 %v777, 56
        %v1910 = vpop.permute.xlu0 %1909
        %v1912 = vsel %vm1661, %v1860, 0
        %v1915 = vsel %vm1665, %v1910, 0
        %1917 = vmatprep.subr.bf16.mxu0 0
        %1918 = vmatpush1.bf16.msra.mxu0 %v1915
        %1919 = vmatprep.subr.bf16.mxu0 0
        %1920 = vmatpush1.bf16.msra.mxu0 0
        %1921 = vmatprep.subr.bf16.mxu0 0
        %1922 = vmatpush1.bf16.msra.mxu0 0
        %1923 = vmatprep.subr.bf16.mxu0 0
        %1924 = vmatpush1.bf16.msra.mxu0 0
        %1925 = vmatprep.subr.bf16.mxu0 0
        %1926 = vmatpush1.bf16.msra.mxu0 0
        %1927 = vmatprep.subr.bf16.mxu0 0
        %1928 = vmatpush1.bf16.msra.mxu0 0
        %1929 = vmatprep.subr.bf16.mxu0 0
        %1930 = vmatpush1.bf16.msra.mxu0 0
        %1931 = vmatprep.subr.bf16.mxu0 0
        %1932 = vmatpush1.bf16.msra.mxu0 0
        %1933 = vmatprep.subr.bf16.mxu0 0
        %1934 = vmatpush1.bf16.msra.mxu0 0
        %1935 = vmatprep.subr.bf16.mxu0 0
        %1936 = vmatpush1.bf16.msra.mxu0 0
        %1937 = vmatprep.subr.bf16.mxu0 0
        %1938 = vmatpush1.bf16.msra.mxu0 0
        %1939 = vmatprep.subr.bf16.mxu0 0
        %1940 = vmatpush1.bf16.msra.mxu0 0
        %1941 = vmatprep.subr.bf16.mxu0 0
        %1942 = vmatpush1.bf16.msra.mxu0 0
        %1943 = vmatprep.subr.bf16.mxu0 0
        %1944 = vmatpush1.bf16.msra.mxu0 0
        %1945 = vmatprep.subr.bf16.mxu0 0
        %1946 = vmatpush1.bf16.msra.mxu0 0
        %1947 = vmatprep.subr.bf16.mxu0 0
        %1948 = vmatpush1.bf16.msra.mxu0 0
        %1949 = vmatprep.mubr.bf16.mxu0 0
        %1950 = vmatmul.mubr.bf16.gmra.mrb[0].mxu0 %v1912
        %v1951 = vpop.f32.mrb[0].mxu0
        %v1952 = vadd.f32 0.0, %v1951
        %v1953 = vpop.f32.mrb[0].mxu0
        %v1954 = vpop.f32.mrb[0].mxu0
        %v1955 = vpop.f32.mrb[0].mxu0
        %1956 = vdwg.mxu0
        %v1957 = vmul.f32 %v1612, %v1653
        %v1958 = vmul.f32 %v1614, %v1654
        %v1959 = vpack.c.bf16 %v1957, %v1957
        %v1960 = vpack.c.bf16 %v1958, %v1958
        %1961 = vrot.lane.b32.xlu0 %v776, 52
        %v1962 = vpop.permute.xlu0 %1961
        %v1964 = vsel %vm1661, %v1959, 0
        %v1967 = vsel %vm1665, %v1962, 0
        %1969 = vmatprep.subr.bf16.mxu0 0
        %1970 = vmatpush1.bf16.msra.mxu0 %v1967
        %1971 = vmatprep.subr.bf16.mxu0 0
        %1972 = vmatpush1.bf16.msra.mxu0 0
        %1973 = vmatprep.subr.bf16.mxu0 0
        %1974 = vmatpush1.bf16.msra.mxu0 0
        %1975 = vmatprep.subr.bf16.mxu0 0
        %1976 = vmatpush1.bf16.msra.mxu0 0
        %1977 = vmatprep.subr.bf16.mxu0 0
        %1978 = vmatpush1.bf16.msra.mxu0 0
        %1979 = vmatprep.subr.bf16.mxu0 0
        %1980 = vmatpush1.bf16.msra.mxu0 0
        %1981 = vmatprep.subr.bf16.mxu0 0
        %1982 = vmatpush1.bf16.msra.mxu0 0
        %1983 = vmatprep.subr.bf16.mxu0 0
        %1984 = vmatpush1.bf16.msra.mxu0 0
        %1985 = vmatprep.subr.bf16.mxu0 0
        %1986 = vmatpush1.bf16.msra.mxu0 0
        %1987 = vmatprep.subr.bf16.mxu0 0
        %1988 = vmatpush1.bf16.msra.mxu0 0
        %1989 = vmatprep.subr.bf16.mxu0 0
        %1990 = vmatpush1.bf16.msra.mxu0 0
        %1991 = vmatprep.subr.bf16.mxu0 0
        %1992 = vmatpush1.bf16.msra.mxu0 0
        %1993 = vmatprep.subr.bf16.mxu0 0
        %1994 = vmatpush1.bf16.msra.mxu0 0
        %1995 = vmatprep.subr.bf16.mxu0 0
        %1996 = vmatpush1.bf16.msra.mxu0 0
        %1997 = vmatprep.subr.bf16.mxu0 0
        %1998 = vmatpush1.bf16.msra.mxu0 0
        %1999 = vmatprep.subr.bf16.mxu0 0
        %2000 = vmatpush1.bf16.msra.mxu0 0
        %2001 = vmatprep.mubr.bf16.mxu0 0
        %2002 = vmatmul.mubr.bf16.gmra.mrb[0].mxu0 %v1964
        %v2003 = vpop.f32.mrb[0].mxu0
        %v2004 = vadd.f32 0.0, %v2003
        %v2005 = vpop.f32.mrb[0].mxu0
        %v2006 = vpop.f32.mrb[0].mxu0
        %v2007 = vpop.f32.mrb[0].mxu0
        %2008 = vdwg.mxu0
        %2009 = vrot.lane.b32.xlu0 %v777, 52
        %v2010 = vpop.permute.xlu0 %2009
        %v2012 = vsel %vm1661, %v1960, 0
        %v2015 = vsel %vm1665, %v2010, 0
        %2017 = vmatprep.subr.bf16.mxu0 0
        %2018 = vmatpush1.bf16.msra.mxu0 %v2015
        %2019 = vmatprep.subr.bf16.mxu0 0
        %2020 = vmatpush1.bf16.msra.mxu0 0
        %2021 = vmatprep.subr.bf16.mxu0 0
        %2022 = vmatpush1.bf16.msra.mxu0 0
        %2023 = vmatprep.subr.bf16.mxu0 0
        %2024 = vmatpush1.bf16.msra.mxu0 0
        %2025 = vmatprep.subr.bf16.mxu0 0
        %2026 = vmatpush1.bf16.msra.mxu0 0
        %2027 = vmatprep.subr.bf16.mxu0 0
        %2028 = vmatpush1.bf16.msra.mxu0 0
        %2029 = vmatprep.subr.bf16.mxu0 0
        %2030 = vmatpush1.bf16.msra.mxu0 0
        %2031 = vmatprep.subr.bf16.mxu0 0
        %2032 = vmatpush1.bf16.msra.mxu0 0
        %2033 = vmatprep.subr.bf16.mxu0 0
        %2034 = vmatpush1.bf16.msra.mxu0 0
        %2035 = vmatprep.subr.bf16.mxu0 0
        %2036 = vmatpush1.bf16.msra.mxu0 0
        %2037 = vmatprep.subr.bf16.mxu0 0
        %2038 = vmatpush1.bf16.msra.mxu0 0
        %2039 = vmatprep.subr.bf16.mxu0 0
        %2040 = vmatpush1.bf16.msra.mxu0 0
        %2041 = vmatprep.subr.bf16.mxu0 0
        %2042 = vmatpush1.bf16.msra.mxu0 0
        %2043 = vmatprep.subr.bf16.mxu0 0
        %2044 = vmatpush1.bf16.msra.mxu0 0
        %2045 = vmatprep.subr.bf16.mxu0 0
        %2046 = vmatpush1.bf16.msra.mxu0 0
        %2047 = vmatprep.subr.bf16.mxu0 0
        %2048 = vmatpush1.bf16.msra.mxu0 0
        %2049 = vmatprep.mubr.bf16.mxu0 0
        %2050 = vmatmul.mubr.bf16.gmra.mrb[0].mxu0 %v2012
        %v2051 = vpop.f32.mrb[0].mxu0
        %v2052 = vadd.f32 0.0, %v2051
        %v2053 = vpop.f32.mrb[0].mxu0
        %v2054 = vpop.f32.mrb[0].mxu0
        %v2055 = vpop.f32.mrb[0].mxu0
        %2056 = vdwg.mxu0
        %v2057 = vmul.f32 %v1618, %v1653
        %v2058 = vmul.f32 %v1620, %v1654
        %v2059 = vpack.c.bf16 %v2057, %v2057
        %v2060 = vpack.c.bf16 %v2058, %v2058
        %2061 = vrot.lane.b32.xlu0 %v776, 48
        %v2062 = vpop.permute.xlu0 %2061
        %v2064 = vsel %vm1661, %v2059, 0
        %v2067 = vsel %vm1665, %v2062, 0
        %2069 = vmatprep.subr.bf16.mxu0 0
        %2070 = vmatpush1.bf16.msra.mxu0 %v2067
        %2071 = vmatprep.subr.bf16.mxu0 0
        %2072 = vmatpush1.bf16.msra.mxu0 0
        %2073 = vmatprep.subr.bf16.mxu0 0
        %2074 = vmatpush1.bf16.msra.mxu0 0
        %2075 = vmatprep.subr.bf16.mxu0 0
        %2076 = vmatpush1.bf16.msra.mxu0 0
        %2077 = vmatprep.subr.bf16.mxu0 0
        %2078 = vmatpush1.bf16.msra.mxu0 0
        %2079 = vmatprep.subr.bf16.mxu0 0
        %2080 = vmatpush1.bf16.msra.mxu0 0
        %2081 = vmatprep.subr.bf16.mxu0 0
        %2082 = vmatpush1.bf16.msra.mxu0 0
        %2083 = vmatprep.subr.bf16.mxu0 0
        %2084 = vmatpush1.bf16.msra.mxu0 0
        %2085 = vmatprep.subr.bf16.mxu0 0
        %2086 = vmatpush1.bf16.msra.mxu0 0
        %2087 = vmatprep.subr.bf16.mxu0 0
        %2088 = vmatpush1.bf16.msra.mxu0 0
        %2089 = vmatprep.subr.bf16.mxu0 0
        %2090 = vmatpush1.bf16.msra.mxu0 0
        %2091 = vmatprep.subr.bf16.mxu0 0
        %2092 = vmatpush1.bf16.msra.mxu0 0
        %2093 = vmatprep.subr.bf16.mxu0 0
        %2094 = vmatpush1.bf16.msra.mxu0 0
        %2095 = vmatprep.subr.bf16.mxu0 0
        %2096 = vmatpush1.bf16.msra.mxu0 0
        %2097 = vmatprep.subr.bf16.mxu0 0
        %2098 = vmatpush1.bf16.msra.mxu0 0
        %2099 = vmatprep.subr.bf16.mxu0 0
        %2100 = vmatpush1.bf16.msra.mxu0 0
        %2101 = vmatprep.mubr.bf16.mxu0 0
        %2102 = vmatmul.mubr.bf16.gmra.mrb[0].mxu0 %v2064
        %v2103 = vpop.f32.mrb[0].mxu0
        %v2104 = vadd.f32 0.0, %v2103
        %v2105 = vpop.f32.mrb[0].mxu0
        %v2106 = vpop.f32.mrb[0].mxu0
        %v2107 = vpop.f32.mrb[0].mxu0
        %2108 = vdwg.mxu0
        %2109 = vrot.lane.b32.xlu0 %v777, 48
        %v2110 = vpop.permute.xlu0 %2109
        %v2112 = vsel %vm1661, %v2060, 0
        %v2115 = vsel %vm1665, %v2110, 0
        %2117 = vmatprep.subr.bf16.mxu0 0
        %2118 = vmatpush1.bf16.msra.mxu0 %v2115
        %2119 = vmatprep.subr.bf16.mxu0 0
        %2120 = vmatpush1.bf16.msra.mxu0 0
        %2121 = vmatprep.subr.bf16.mxu0 0
        %2122 = vmatpush1.bf16.msra.mxu0 0
        %2123 = vmatprep.subr.bf16.mxu0 0
        %2124 = vmatpush1.bf16.msra.mxu0 0
        %2125 = vmatprep.subr.bf16.mxu0 0
        %2126 = vmatpush1.bf16.msra.mxu0 0
        %2127 = vmatprep.subr.bf16.mxu0 0
        %2128 = vmatpush1.bf16.msra.mxu0 0
        %2129 = vmatprep.subr.bf16.mxu0 0
        %2130 = vmatpush1.bf16.msra.mxu0 0
        %2131 = vmatprep.subr.bf16.mxu0 0
        %2132 = vmatpush1.bf16.msra.mxu0 0
        %2133 = vmatprep.subr.bf16.mxu0 0
        %2134 = vmatpush1.bf16.msra.mxu0 0
        %2135 = vmatprep.subr.bf16.mxu0 0
        %2136 = vmatpush1.bf16.msra.mxu0 0
        %2137 = vmatprep.subr.bf16.mxu0 0
        %2138 = vmatpush1.bf16.msra.mxu0 0
        %2139 = vmatprep.subr.bf16.mxu0 0
        %2140 = vmatpush1.bf16.msra.mxu0 0
        %2141 = vmatprep.subr.bf16.mxu0 0
        %2142 = vmatpush1.bf16.msra.mxu0 0
        %2143 = vmatprep.subr.bf16.mxu0 0
        %2144 = vmatpush1.bf16.msra.mxu0 0
        %2145 = vmatprep.subr.bf16.mxu0 0
        %2146 = vmatpush1.bf16.msra.mxu0 0
        %2147 = vmatprep.subr.bf16.mxu0 0
        %2148 = vmatpush1.bf16.msra.mxu0 0
        %2149 = vmatprep.mubr.bf16.mxu0 0
        %2150 = vmatmul.mubr.bf16.gmra.mrb[0].mxu0 %v2112
        %v2151 = vpop.f32.mrb[0].mxu0
        %v2152 = vadd.f32 0.0, %v2151
        %v2153 = vpop.f32.mrb[0].mxu0
        %v2154 = vpop.f32.mrb[0].mxu0
        %v2155 = vpop.f32.mrb[0].mxu0
        %2156 = vdwg.mxu0
        %v2157 = vmul.f32 %v1624, %v1653
        %v2158 = vmul.f32 %v1626, %v1654
        %v2159 = vpack.c.bf16 %v2157, %v2157
        %v2160 = vpack.c.bf16 %v2158, %v2158
        %2161 = vrot.lane.b32.xlu0 %v776, 44
        %v2162 = vpop.permute.xlu0 %2161
        %v2164 = vsel %vm1661, %v2159, 0
        %v2167 = vsel %vm1665, %v2162, 0
        %2169 = vmatprep.subr.bf16.mxu0 0
        %2170 = vmatpush1.bf16.msra.mxu0 %v2167
        %2171 = vmatprep.subr.bf16.mxu0 0
        %2172 = vmatpush1.bf16.msra.mxu0 0
        %2173 = vmatprep.subr.bf16.mxu0 0
        %2174 = vmatpush1.bf16.msra.mxu0 0
        %2175 = vmatprep.subr.bf16.mxu0 0
        %2176 = vmatpush1.bf16.msra.mxu0 0
        %2177 = vmatprep.subr.bf16.mxu0 0
        %2178 = vmatpush1.bf16.msra.mxu0 0
        %2179 = vmatprep.subr.bf16.mxu0 0
        %2180 = vmatpush1.bf16.msra.mxu0 0
        %2181 = vmatprep.subr.bf16.mxu0 0
        %2182 = vmatpush1.bf16.msra.mxu0 0
        %2183 = vmatprep.subr.bf16.mxu0 0
        %2184 = vmatpush1.bf16.msra.mxu0 0
        %2185 = vmatprep.subr.bf16.mxu0 0
        %2186 = vmatpush1.bf16.msra.mxu0 0
        %2187 = vmatprep.subr.bf16.mxu0 0
        %2188 = vmatpush1.bf16.msra.mxu0 0
        %2189 = vmatprep.subr.bf16.mxu0 0
        %2190 = vmatpush1.bf16.msra.mxu0 0
        %2191 = vmatprep.subr.bf16.mxu0 0
        %2192 = vmatpush1.bf16.msra.mxu0 0
        %2193 = vmatprep.subr.bf16.mxu0 0
        %2194 = vmatpush1.bf16.msra.mxu0 0
        %2195 = vmatprep.subr.bf16.mxu0 0
        %2196 = vmatpush1.bf16.msra.mxu0 0
        %2197 = vmatprep.subr.bf16.mxu0 0
        %2198 = vmatpush1.bf16.msra.mxu0 0
        %2199 = vmatprep.subr.bf16.mxu0 0
        %2200 = vmatpush1.bf16.msra.mxu0 0
        %2201 = vmatprep.mubr.bf16.mxu0 0
        %2202 = vmatmul.mubr.bf16.gmra.mrb[0].mxu0 %v2164
        %v2203 = vpop.f32.mrb[0].mxu0
        %v2204 = vadd.f32 0.0, %v2203
        %v2205 = vpop.f32.mrb[0].mxu0
        %v2206 = vpop.f32.mrb[0].mxu0
        %v2207 = vpop.f32.mrb[0].mxu0
        %2208 = vdwg.mxu0
        %2209 = vrot.lane.b32.xlu0 %v777, 44
        %v2210 = vpop.permute.xlu0 %2209
        %v2212 = vsel %vm1661, %v2160, 0
        %v2215 = vsel %vm1665, %v2210, 0
        %2217 = vmatprep.subr.bf16.mxu0 0
        %2218 = vmatpush1.bf16.msra.mxu0 %v2215
        %2219 = vmatprep.subr.bf16.mxu0 0
        %2220 = vmatpush1.bf16.msra.mxu0 0
        %2221 = vmatprep.subr.bf16.mxu0 0
        %2222 = vmatpush1.bf16.msra.mxu0 0
        %2223 = vmatprep.subr.bf16.mxu0 0
        %2224 = vmatpush1.bf16.msra.mxu0 0
        %2225 = vmatprep.subr.bf16.mxu0 0
        %2226 = vmatpush1.bf16.msra.mxu0 0
        %2227 = vmatprep.subr.bf16.mxu0 0
        %2228 = vmatpush1.bf16.msra.mxu0 0
        %2229 = vmatprep.subr.bf16.mxu0 0
        %2230 = vmatpush1.bf16.msra.mxu0 0
        %2231 = vmatprep.subr.bf16.mxu0 0
        %2232 = vmatpush1.bf16.msra.mxu0 0
        %2233 = vmatprep.subr.bf16.mxu0 0
        %2234 = vmatpush1.bf16.msra.mxu0 0
        %2235 = vmatprep.subr.bf16.mxu0 0
        %2236 = vmatpush1.bf16.msra.mxu0 0
        %2237 = vmatprep.subr.bf16.mxu0 0
        %2238 = vmatpush1.bf16.msra.mxu0 0
        %2239 = vmatprep.subr.bf16.mxu0 0
        %2240 = vmatpush1.bf16.msra.mxu0 0
        %2241 = vmatprep.subr.bf16.mxu0 0
        %2242 = vmatpush1.bf16.msra.mxu0 0
        %2243 = vmatprep.subr.bf16.mxu0 0
        %2244 = vmatpush1.bf16.msra.mxu0 0
        %2245 = vmatprep.subr.bf16.mxu0 0
        %2246 = vmatpush1.bf16.msra.mxu0 0
        %2247 = vmatprep.subr.bf16.mxu0 0
        %2248 = vmatpush1.bf16.msra.mxu0 0
        %2249 = vmatprep.mubr.bf16.mxu0 0
        %2250 = vmatmul.mubr.bf16.gmra.mrb[0].mxu0 %v2212
        %v2251 = vpop.f32.mrb[0].mxu0
        %v2252 = vadd.f32 0.0, %v2251
        %v2253 = vpop.f32.mrb[0].mxu0
        %v2254 = vpop.f32.mrb[0].mxu0
        %v2255 = vpop.f32.mrb[0].mxu0
        %2256 = vdwg.mxu0
        %v2257 = vmul.f32 %v1630, %v1653
        %v2258 = vmul.f32 %v1632, %v1654
        %v2259 = vpack.c.bf16 %v2257, %v2257
        %v2260 = vpack.c.bf16 %v2258, %v2258
        %2261 = vrot.lane.b32.xlu0 %v776, 40
        %v2262 = vpop.permute.xlu0 %2261
        %v2264 = vsel %vm1661, %v2259, 0
        %v2267 = vsel %vm1665, %v2262, 0
        %2269 = vmatprep.subr.bf16.mxu0 0
        %2270 = vmatpush1.bf16.msra.mxu0 %v2267
        %2271 = vmatprep.subr.bf16.mxu0 0
        %2272 = vmatpush1.bf16.msra.mxu0 0
        %2273 = vmatprep.subr.bf16.mxu0 0
        %2274 = vmatpush1.bf16.msra.mxu0 0
        %2275 = vmatprep.subr.bf16.mxu0 0
        %2276 = vmatpush1.bf16.msra.mxu0 0
        %2277 = vmatprep.subr.bf16.mxu0 0
        %2278 = vmatpush1.bf16.msra.mxu0 0
        %2279 = vmatprep.subr.bf16.mxu0 0
        %2280 = vmatpush1.bf16.msra.mxu0 0
        %2281 = vmatprep.subr.bf16.mxu0 0
        %2282 = vmatpush1.bf16.msra.mxu0 0
        %2283 = vmatprep.subr.bf16.mxu0 0
        %2284 = vmatpush1.bf16.msra.mxu0 0
        %2285 = vmatprep.subr.bf16.mxu0 0
        %2286 = vmatpush1.bf16.msra.mxu0 0
        %2287 = vmatprep.subr.bf16.mxu0 0
        %2288 = vmatpush1.bf16.msra.mxu0 0
        %2289 = vmatprep.subr.bf16.mxu0 0
        %2290 = vmatpush1.bf16.msra.mxu0 0
        %2291 = vmatprep.subr.bf16.mxu0 0
        %2292 = vmatpush1.bf16.msra.mxu0 0
        %2293 = vmatprep.subr.bf16.mxu0 0
        %2294 = vmatpush1.bf16.msra.mxu0 0
        %2295 = vmatprep.subr.bf16.mxu0 0
        %2296 = vmatpush1.bf16.msra.mxu0 0
        %2297 = vmatprep.subr.bf16.mxu0 0
        %2298 = vmatpush1.bf16.msra.mxu0 0
        %2299 = vmatprep.subr.bf16.mxu0 0
        %2300 = vmatpush1.bf16.msra.mxu0 0
        %2301 = vmatprep.mubr.bf16.mxu0 0
        %2302 = vmatmul.mubr.bf16.gmra.mrb[0].mxu0 %v2264
        %v2303 = vpop.f32.mrb[0].mxu0
        %v2304 = vadd.f32 0.0, %v2303
        %v2305 = vpop.f32.mrb[0].mxu0
        %v2306 = vpop.f32.mrb[0].mxu0
        %v2307 = vpop.f32.mrb[0].mxu0
        %2308 = vdwg.mxu0
        %2309 = vrot.lane.b32.xlu0 %v777, 40
        %v2310 = vpop.permute.xlu0 %2309
        %v2312 = vsel %vm1661, %v2260, 0
        %v2315 = vsel %vm1665, %v2310, 0
        %2317 = vmatprep.subr.bf16.mxu0 0
        %2318 = vmatpush1.bf16.msra.mxu0 %v2315
        %2319 = vmatprep.subr.bf16.mxu0 0
        %2320 = vmatpush1.bf16.msra.mxu0 0
        %2321 = vmatprep.subr.bf16.mxu0 0
        %2322 = vmatpush1.bf16.msra.mxu0 0
        %2323 = vmatprep.subr.bf16.mxu0 0
        %2324 = vmatpush1.bf16.msra.mxu0 0
        %2325 = vmatprep.subr.bf16.mxu0 0
        %2326 = vmatpush1.bf16.msra.mxu0 0
        %2327 = vmatprep.subr.bf16.mxu0 0
        %2328 = vmatpush1.bf16.msra.mxu0 0
        %2329 = vmatprep.subr.bf16.mxu0 0
        %2330 = vmatpush1.bf16.msra.mxu0 0
        %2331 = vmatprep.subr.bf16.mxu0 0
        %2332 = vmatpush1.bf16.msra.mxu0 0
        %2333 = vmatprep.subr.bf16.mxu0 0
        %2334 = vmatpush1.bf16.msra.mxu0 0
        %2335 = vmatprep.subr.bf16.mxu0 0
        %2336 = vmatpush1.bf16.msra.mxu0 0
        %2337 = vmatprep.subr.bf16.mxu0 0
        %2338 = vmatpush1.bf16.msra.mxu0 0
        %2339 = vmatprep.subr.bf16.mxu0 0
        %2340 = vmatpush1.bf16.msra.mxu0 0
        %2341 = vmatprep.subr.bf16.mxu0 0
        %2342 = vmatpush1.bf16.msra.mxu0 0
        %2343 = vmatprep.subr.bf16.mxu0 0
        %2344 = vmatpush1.bf16.msra.mxu0 0
        %2345 = vmatprep.subr.bf16.mxu0 0
        %2346 = vmatpush1.bf16.msra.mxu0 0
        %2347 = vmatprep.subr.bf16.mxu0 0
        %2348 = vmatpush1.bf16.msra.mxu0 0
        %2349 = vmatprep.mubr.bf16.mxu0 0
        %2350 = vmatmul.mubr.bf16.gmra.mrb[0].mxu0 %v2312
        %v2351 = vpop.f32.mrb[0].mxu0
        %v2352 = vadd.f32 0.0, %v2351
        %v2353 = vpop.f32.mrb[0].mxu0
        %v2354 = vpop.f32.mrb[0].mxu0
        %v2355 = vpop.f32.mrb[0].mxu0
        %2356 = vdwg.mxu0
        %v2357 = vmul.f32 %v1636, %v1653
        %v2358 = vmul.f32 %v1638, %v1654
        %v2359 = vpack.c.bf16 %v2357, %v2357
        %v2360 = vpack.c.bf16 %v2358, %v2358
        %2361 = vrot.lane.b32.xlu0 %v776, 36
        %v2362 = vpop.permute.xlu0 %2361
        %v2364 = vsel %vm1661, %v2359, 0
        %v2367 = vsel %vm1665, %v2362, 0
        %2369 = vmatprep.subr.bf16.mxu0 0
        %2370 = vmatpush1.bf16.msra.mxu0 %v2367
        %2371 = vmatprep.subr.bf16.mxu0 0
        %2372 = vmatpush1.bf16.msra.mxu0 0
        %2373 = vmatprep.subr.bf16.mxu0 0
        %2374 = vmatpush1.bf16.msra.mxu0 0
        %2375 = vmatprep.subr.bf16.mxu0 0
        %2376 = vmatpush1.bf16.msra.mxu0 0
        %2377 = vmatprep.subr.bf16.mxu0 0
        %2378 = vmatpush1.bf16.msra.mxu0 0
        %2379 = vmatprep.subr.bf16.mxu0 0
        %2380 = vmatpush1.bf16.msra.mxu0 0
        %2381 = vmatprep.subr.bf16.mxu0 0
        %2382 = vmatpush1.bf16.msra.mxu0 0
        %2383 = vmatprep.subr.bf16.mxu0 0
        %2384 = vmatpush1.bf16.msra.mxu0 0
        %2385 = vmatprep.subr.bf16.mxu0 0
        %2386 = vmatpush1.bf16.msra.mxu0 0
        %2387 = vmatprep.subr.bf16.mxu0 0
        %2388 = vmatpush1.bf16.msra.mxu0 0
        %2389 = vmatprep.subr.bf16.mxu0 0
        %2390 = vmatpush1.bf16.msra.mxu0 0
        %2391 = vmatprep.subr.bf16.mxu0 0
        %2392 = vmatpush1.bf16.msra.mxu0 0
        %2393 = vmatprep.subr.bf16.mxu0 0
        %2394 = vmatpush1.bf16.msra.mxu0 0
        %2395 = vmatprep.subr.bf16.mxu0 0
        %2396 = vmatpush1.bf16.msra.mxu0 0
        %2397 = vmatprep.subr.bf16.mxu0 0
        %2398 = vmatpush1.bf16.msra.mxu0 0
        %2399 = vmatprep.subr.bf16.mxu0 0
        %2400 = vmatpush1.bf16.msra.mxu0 0
        %2401 = vmatprep.mubr.bf16.mxu0 0
        %2402 = vmatmul.mubr.bf16.gmra.mrb[0].mxu0 %v2364
        %v2403 = vpop.f32.mrb[0].mxu0
        %v2404 = vadd.f32 0.0, %v2403
        %v2405 = vpop.f32.mrb[0].mxu0
        %v2406 = vpop.f32.mrb[0].mxu0
        %v2407 = vpop.f32.mrb[0].mxu0
        %2408 = vdwg.mxu0
        %2409 = vrot.lane.b32.xlu0 %v777, 36
        %v2410 = vpop.permute.xlu0 %2409
        %v2412 = vsel %vm1661, %v2360, 0
        %v2415 = vsel %vm1665, %v2410, 0
        %2417 = vmatprep.subr.bf16.mxu0 0
        %2418 = vmatpush1.bf16.msra.mxu0 %v2415
        %2419 = vmatprep.subr.bf16.mxu0 0
        %2420 = vmatpush1.bf16.msra.mxu0 0
        %2421 = vmatprep.subr.bf16.mxu0 0
        %2422 = vmatpush1.bf16.msra.mxu0 0
        %2423 = vmatprep.subr.bf16.mxu0 0
        %2424 = vmatpush1.bf16.msra.mxu0 0
        %2425 = vmatprep.subr.bf16.mxu0 0
        %2426 = vmatpush1.bf16.msra.mxu0 0
        %2427 = vmatprep.subr.bf16.mxu0 0
        %2428 = vmatpush1.bf16.msra.mxu0 0
        %2429 = vmatprep.subr.bf16.mxu0 0
        %2430 = vmatpush1.bf16.msra.mxu0 0
        %2431 = vmatprep.subr.bf16.mxu0 0
        %2432 = vmatpush1.bf16.msra.mxu0 0
        %2433 = vmatprep.subr.bf16.mxu0 0
        %2434 = vmatpush1.bf16.msra.mxu0 0
        %2435 = vmatprep.subr.bf16.mxu0 0
        %2436 = vmatpush1.bf16.msra.mxu0 0
        %2437 = vmatprep.subr.bf16.mxu0 0
        %2438 = vmatpush1.bf16.msra.mxu0 0
        %2439 = vmatprep.subr.bf16.mxu0 0
        %2440 = vmatpush1.bf16.msra.mxu0 0
        %2441 = vmatprep.subr.bf16.mxu0 0
        %2442 = vmatpush1.bf16.msra.mxu0 0
        %2443 = vmatprep.subr.bf16.mxu0 0
        %2444 = vmatpush1.bf16.msra.mxu0 0
        %2445 = vmatprep.subr.bf16.mxu0 0
        %2446 = vmatpush1.bf16.msra.mxu0 0
        %2447 = vmatprep.subr.bf16.mxu0 0
        %2448 = vmatpush1.bf16.msra.mxu0 0
        %2449 = vmatprep.mubr.bf16.mxu0 0
        %2450 = vmatmul.mubr.bf16.gmra.mrb[0].mxu0 %v2412
        %v2451 = vpop.f32.mrb[0].mxu0
        %v2452 = vadd.f32 0.0, %v2451
        %v2453 = vpop.f32.mrb[0].mxu0
        %v2454 = vpop.f32.mrb[0].mxu0
        %v2455 = vpop.f32.mrb[0].mxu0
        %2456 = vdwg.mxu0
        %2459 = vrot.lane.b32.xlu0 %v1804, 4
        %v2460 = vpop.permute.xlu0 %2459
        %2461 = vrot.lane.b32.xlu0 %v1852, 4
        %v2462 = vpop.permute.xlu0 %2461
        %2467 = vrot.lane.b32.xlu0 %v1904, 8
        %v2468 = vpop.permute.xlu0 %2467
        %2469 = vrot.lane.b32.xlu0 %v1952, 8
        %v2470 = vpop.permute.xlu0 %2469
        %2475 = vrot.lane.b32.xlu0 %v2004, 12
        %v2476 = vpop.permute.xlu0 %2475
        %2477 = vrot.lane.b32.xlu0 %v2052, 12
        %v2478 = vpop.permute.xlu0 %2477
        %2483 = vrot.lane.b32.xlu0 %v2104, 16
        %v2484 = vpop.permute.xlu0 %2483
        %2485 = vrot.lane.b32.xlu0 %v2152, 16
        %v2486 = vpop.permute.xlu0 %2485
        %2491 = vrot.lane.b32.xlu0 %v2204, 20
        %v2492 = vpop.permute.xlu0 %2491
        %2493 = vrot.lane.b32.xlu0 %v2252, 20
        %v2494 = vpop.permute.xlu0 %2493
        %2499 = vrot.lane.b32.xlu0 %v2304, 24
        %v2500 = vpop.permute.xlu0 %2499
        %2501 = vrot.lane.b32.xlu0 %v2352, 24
        %v2502 = vpop.permute.xlu0 %2501
        %2507 = vrot.lane.b32.xlu0 %v2404, 28
        %v2508 = vpop.permute.xlu0 %2507
        %2509 = vrot.lane.b32.xlu0 %v2452, 28
        %v2510 = vpop.permute.xlu0 %2509
        %v2513 = vsel %vm781, %v1704, %v2460
        %v2514 = vsel %vm781, %v1752, %v2462
        %v2515 = vsel %vm1661, %v2513, %v2468
        %v2516 = vsel %vm1661, %v2514, %v2470
        %vm2517 = vcmask 97280
        %v2518 = vsel %vm2517, %v2515, %v2476
        %v2519 = vsel %vm2517, %v2516, %v2478
        %vm2520 = vcmask 130048
        %v2521 = vsel %vm2520, %v2518, %v2484
        %v2522 = vsel %vm2520, %v2519, %v2486
        %vm2523 = vcmask 162816
        %v2524 = vsel %vm2523, %v2521, %v2492
        %v2525 = vsel %vm2523, %v2522, %v2494
        %vm2526 = vcmask 195584
        %v2527 = vsel %vm2526, %v2524, %v2500
        %v2528 = vsel %vm2526, %v2525, %v2502
        %vm2529 = vcmask 228352
        %v2530 = vsel %vm2529, %v2527, %v2508
        %v2531 = vsel %vm2529, %v2528, %v2510
        %v2532 = vpack.c.bf16 %v2531, %v2530
        %v2533 = vld [vmem:[%s539] sm:$0xf]
        %v2534 = vld [vmem:[%s539 + $0x4] sm:$0xf]
        %v2535 = vld [vmem:[%s539 + $0x8] sm:$0xf]
        %v2536 = vld [vmem:[%s539 + $0xc] sm:$0xf]
        %v2537 = vld [vmem:[%s637] sm:$0x1]
        %v2539 = vlaneseq
        %v2540 = vshrl.u32 %v2539, 7
        %v2541 = vsub.s32 0, %v2540
        %v2542 = vrot.slane %v2537, %v2541
        %v2548 = vunpack.c.l.b16 %v2533
        %v2549 = vunpack.c.l.b16 %v2534
        %v2550 = vunpack.c.l.b16 %v2535
        %v2551 = vunpack.c.l.b16 %v2536
        %v2552 = vpack.c.b16 %v2549, %v2548
        %v2553 = vpack.c.b16 %v2551, %v2550
        %v2557 = vsel %vm671, %v2532, 0
        %2559 = vmatprep.subr.bf16.mxu0 0
        %2560 = vmatpush1.bf16.msra.mxu0 %v2552
        %2561 = vmatprep.subr.bf16.mxu0 0
        %2562 = vmatpush1.bf16.msra.mxu0 %v2553
        %2563 = vmatprep.subr.bf16.mxu0 0
        %2564 = vmatpush1.bf16.msra.mxu0 0
        %2565 = vmatprep.subr.bf16.mxu0 0
        %2566 = vmatpush1.bf16.msra.mxu0 0
        %2567 = vmatprep.subr.bf16.mxu0 0
        %2568 = vmatpush1.bf16.msra.mxu0 0
        %2569 = vmatprep.subr.bf16.mxu0 0
        %2570 = vmatpush1.bf16.msra.mxu0 0
        %2571 = vmatprep.subr.bf16.mxu0 0
        %2572 = vmatpush1.bf16.msra.mxu0 0
        %2573 = vmatprep.subr.bf16.mxu0 0
        %2574 = vmatpush1.bf16.msra.mxu0 0
        %2575 = vmatprep.subr.bf16.mxu0 0
        %2576 = vmatpush1.bf16.msra.mxu0 0
        %2577 = vmatprep.subr.bf16.mxu0 0
        %2578 = vmatpush1.bf16.msra.mxu0 0
        %2579 = vmatprep.subr.bf16.mxu0 0
        %2580 = vmatpush1.bf16.msra.mxu0 0
        %2581 = vmatprep.subr.bf16.mxu0 0
        %2582 = vmatpush1.bf16.msra.mxu0 0
        %2583 = vmatprep.subr.bf16.mxu0 0
        %2584 = vmatpush1.bf16.msra.mxu0 0
        %2585 = vmatprep.subr.bf16.mxu0 0
        %2586 = vmatpush1.bf16.msra.mxu0 0
        %2587 = vmatprep.subr.bf16.mxu0 0
        %2588 = vmatpush1.bf16.msra.mxu0 0
        %2589 = vmatprep.subr.bf16.mxu0 0
        %2590 = vmatpush1.bf16.msra.mxu0 0
        %2591 = vmatprep.mubr.bf16.mxu0 0
        %2592 = vmatmul.mubr.bf16.gmra.mrb[0].mxu0 %v2557
        %v2593 = vpop.f32.mrb[0].mxu0
        %v2594 = vadd.f32 %v2542, %v2593
        %v2595 = vpop.f32.mrb[0].mxu0
        %v2596 = vpop.f32.mrb[0].mxu0
        %v2597 = vadd.f32 %v2542, %v2596
        %v2598 = vpop.f32.mrb[0].mxu0
        %2599 = vdwg.mxu0
        %v2600 = vadd.f32 %v667, %v2594
        %v2601 = vadd.f32 %v668, %v2597
        %v2602 = vld [vmem:[%s646] sm:$0x1]
        %v2603 = vld [vmem:[%s649] sm:$0x1]
        %v2604 = vsel %vm671, %v2600, 0.0
        %2605 = vadd.xlane.f32.xlu0 %v2604
        %v2606 = vpop.xlane.xlu0 %2605
        %v2607 = vsel %vm671, %v2601, 0.0
        %2608 = vadd.xlane.f32.xlu0 %v2607
        %v2609 = vpop.xlane.xlu0 %2608
        %v2610 = vmul.f32 %v2606, %v678
        %v2611 = vmul.f32 %v2609, %v678
        %v2612 = vsub.f32 %v2600, %v2610
        %v2613 = vsub.f32 %v2601, %v2611
        %v2614 = vmul.f32 %v2612, %v2612
        %v2615 = vmul.f32 %v2613, %v2613
        %v2616 = vsel %vm671, %v2614, 0.0
        %2617 = vadd.xlane.f32.xlu0 %v2616
        %v2618 = vpop.xlane.xlu0 %2617
        %v2619 = vsel %vm671, %v2615, 0.0
        %2620 = vadd.xlane.f32.xlu0 %v2619
        %v2621 = vpop.xlane.xlu0 %2620
        %v2622 = vmul.f32 %v2618, %v678
        %v2623 = vmul.f32 %v2621, %v678
        %v2624 = vadd.f32 %v2622, 1e-05
        %v2625 = vadd.f32 %v2623, 1e-05
        %v2626 = vrsqrt.pop %v2624
        %v2627 = vrsqrt.pop %v2625
        %v2628 = vmul.f32 %v2612, %v2626
        %v2629 = vmul.f32 %v2613, %v2627
        %v2631 = vlaneseq
        %v2632 = vshrl.u32 %v2631, 7
        %v2633 = vsub.s32 0, %v2632
        %v2634 = vrot.slane %v2602, %v2633
        %v2636 = vmul.f32 %v2628, %v2634
        %v2637 = vmul.f32 %v2629, %v2634
        %v2639 = vlaneseq
        %v2640 = vshrl.u32 %v2639, 7
        %v2641 = vsub.s32 0, %v2640
        %v2642 = vrot.slane %v2603, %v2641
        %v2644 = vadd.f32 %v2636, %v2642
        %v2645 = vadd.f32 %v2637, %v2642
        %v2646 = vpack.c.bf16 %v2645, %v2644
        %v2647 = vld [vmem:[%s548] sm:$0xf]
        %v2648 = vld [vmem:[%s548 + $0x4] sm:$0xf]
        %v2649 = vld [vmem:[%s548 + $0x8] sm:$0xf]
        %v2650 = vld [vmem:[%s548 + $0xc] sm:$0xf]
        %v2651 = vld [vmem:[%s652] sm:$0x1]
        %v2653 = vlaneseq
        %v2654 = vshrl.u32 %v2653, 7
        %v2655 = vsub.s32 0, %v2654
        %v2656 = vrot.slane %v2651, %v2655
        %v2662 = vunpack.c.l.b16 %v2647
        %v2663 = vunpack.c.l.b16 %v2648
        %v2664 = vunpack.c.l.b16 %v2649
        %v2665 = vunpack.c.l.b16 %v2650
        %v2666 = vpack.c.b16 %v2663, %v2662
        %v2667 = vpack.c.b16 %v2665, %v2664
        %v2671 = vsel %vm671, %v2646, 0
        %2673 = vmatprep.subr.bf16.mxu0 0
        %2674 = vmatpush1.bf16.msra.mxu0 %v2666
        %2675 = vmatprep.subr.bf16.mxu0 0
        %2676 = vmatpush1.bf16.msra.mxu0 %v2667
        %2677 = vmatprep.subr.bf16.mxu0 0
        %2678 = vmatpush1.bf16.msra.mxu0 0
        %2679 = vmatprep.subr.bf16.mxu0 0
        %2680 = vmatpush1.bf16.msra.mxu0 0
        %2681 = vmatprep.subr.bf16.mxu0 0
        %2682 = vmatpush1.bf16.msra.mxu0 0
        %2683 = vmatprep.subr.bf16.mxu0 0
        %2684 = vmatpush1.bf16.msra.mxu0 0
        %2685 = vmatprep.subr.bf16.mxu0 0
        %2686 = vmatpush1.bf16.msra.mxu0 0
        %2687 = vmatprep.subr.bf16.mxu0 0
        %2688 = vmatpush1.bf16.msra.mxu0 0
        %2689 = vmatprep.subr.bf16.mxu0 0
        %2690 = vmatpush1.bf16.msra.mxu0 0
        %2691 = vmatprep.subr.bf16.mxu0 0
        %2692 = vmatpush1.bf16.msra.mxu0 0
        %2693 = vmatprep.subr.bf16.mxu0 0
        %2694 = vmatpush1.bf16.msra.mxu0 0
        %2695 = vmatprep.subr.bf16.mxu0 0
        %2696 = vmatpush1.bf16.msra.mxu0 0
        %2697 = vmatprep.subr.bf16.mxu0 0
        %2698 = vmatpush1.bf16.msra.mxu0 0
        %2699 = vmatprep.subr.bf16.mxu0 0
        %2700 = vmatpush1.bf16.msra.mxu0 0
        %2701 = vmatprep.subr.bf16.mxu0 0
        %2702 = vmatpush1.bf16.msra.mxu0 0
        %2703 = vmatprep.subr.bf16.mxu0 0
        %2704 = vmatpush1.bf16.msra.mxu0 0
        %2705 = vmatprep.mubr.bf16.mxu0 0
        %2706 = vmatmul.mubr.bf16.gmra.mrb[0].mxu0 %v2671
        %v2707 = vpop.f32.mrb[0].mxu0
        %v2708 = vadd.f32 %v2656, %v2707
        %v2709 = vpop.f32.mrb[0].mxu0
        %v2710 = vpop.f32.mrb[0].mxu0
        %v2711 = vadd.f32 %v2656, %v2710
        %v2712 = vpop.f32.mrb[0].mxu0
        %2713 = vdwg.mxu0
        %v2714 = vmul.f32 %v2708, 0.5
        %v2715 = vmul.f32 %v2711, 0.5
        %v2716 = vmul.f32 %v2708, 0.70710677
        %v2717 = vmul.f32 %v2711, 0.70710677
        %vm2718 = vcmp.lt.f32.partialorder %v2716, 0.0
        %vm2719 = vcmp.lt.f32.partialorder %v2717, 0.0
        %v2720 = vsel %vm2718, -1.0, 1.0
        %v2721 = vsel %vm2719, -1.0, 1.0
        %v2722 = vand.u32 2147483647, %v2716
        %v2723 = vand.u32 2147483647, %v2717
        %v2724 = vmul.f32 %v2722, 0.3275911
        %v2725 = vmul.f32 %v2723, 0.3275911
        %v2726 = vadd.f32 %v2724, 1.0
        %v2727 = vadd.f32 %v2725, 1.0
        %v2728 = vrcp.pop %v2726
        %v2729 = vmul.f32 1.0, %v2728
        %v2730 = vrcp.pop %v2727
        %v2731 = vmul.f32 1.0, %v2730
        %v2732 = vmul.f32 %v2729, 1.0614054
        %v2733 = vmul.f32 %v2731, 1.0614054
        %v2734 = vadd.f32 %v2732, -1.4531521
        %v2735 = vadd.f32 %v2733, -1.4531521
        %v2736 = vmul.f32 %v2734, %v2729
        %v2737 = vmul.f32 %v2735, %v2731
        %v2738 = vadd.f32 %v2736, 1.4214138
        %v2739 = vadd.f32 %v2737, 1.4214138
        %v2740 = vmul.f32 %v2738, %v2729
        %v2741 = vmul.f32 %v2739, %v2731
        %v2742 = vadd.f32 %v2740, -0.28449672
        %v2743 = vadd.f32 %v2741, -0.28449672
        %v2744 = vmul.f32 %v2742, %v2729
        %v2745 = vmul.f32 %v2743, %v2731
        %v2746 = vadd.f32 %v2744, 0.2548296
        %v2747 = vadd.f32 %v2745, 0.2548296
        %v2748 = vmul.f32 %v2746, %v2729
        %v2749 = vmul.f32 %v2747, %v2731
        %v2750 = vsub.f32 0.0, %v2722
        %v2751 = vsub.f32 0.0, %v2723
        %v2752 = vmul.f32 %v2750, %v2722
        %v2753 = vmul.f32 %v2751, %v2723
        %v2754 = vmul.f32 %v2752, 1.442695
        %v2755 = vpow.pop %v2754
        %v2756 = vmul.f32 %v2753, 1.442695
        %v2757 = vpow.pop %v2756
        %v2758 = vmul.f32 %v2748, %v2755
        %v2759 = vmul.f32 %v2749, %v2757
        %v2760 = vsub.f32 1.0, %v2758
        %v2761 = vsub.f32 1.0, %v2759
        %v2762 = vmul.f32 %v2720, %v2760
        %v2763 = vmul.f32 %v2721, %v2761
        %v2764 = vadd.f32 %v2762, 1.0
        %v2765 = vadd.f32 %v2763, 1.0
        %v2766 = vmul.f32 %v2714, %v2764
        %v2767 = vmul.f32 %v2715, %v2765
        %v2768 = vpack.c.bf16 %v2767, %v2766
        %v2769 = vld [vmem:[%s557] sm:$0xf]
        %v2770 = vld [vmem:[%s557 + $0x4] sm:$0xf]
        %v2771 = vld [vmem:[%s557 + $0x8] sm:$0xf]
        %v2772 = vld [vmem:[%s557 + $0xc] sm:$0xf]
        %v2773 = vld [vmem:[%s557 + $0x10] sm:$0xf]
        %v2774 = vld [vmem:[%s557 + $0x14] sm:$0xf]
        %v2775 = vld [vmem:[%s557 + $0x18] sm:$0xf]
        %v2776 = vld [vmem:[%s557 + $0x1c] sm:$0xf]
        %v2777 = vld [vmem:[%s557 + $0x20] sm:$0xf]
        %v2778 = vld [vmem:[%s557 + $0x24] sm:$0xf]
        %v2779 = vld [vmem:[%s557 + $0x28] sm:$0xf]
        %v2780 = vld [vmem:[%s557 + $0x2c] sm:$0xf]
        %v2781 = vld [vmem:[%s557 + $0x30] sm:$0xf]
        %v2782 = vld [vmem:[%s557 + $0x34] sm:$0xf]
        %v2783 = vld [vmem:[%s557 + $0x38] sm:$0xf]
        %v2784 = vld [vmem:[%s557 + $0x3c] sm:$0xf]
        %v2801 = vunpack.c.l.b16 %v2769
        %v2802 = vunpack.c.l.b16 %v2770
        %v2803 = vunpack.c.l.b16 %v2771
        %v2804 = vunpack.c.l.b16 %v2772
        %v2805 = vunpack.c.l.b16 %v2773
        %v2806 = vunpack.c.l.b16 %v2774
        %v2807 = vunpack.c.l.b16 %v2775
        %v2808 = vunpack.c.l.b16 %v2776
        %v2809 = vunpack.c.l.b16 %v2777
        %v2810 = vunpack.c.l.b16 %v2778
        %v2811 = vunpack.c.l.b16 %v2779
        %v2812 = vunpack.c.l.b16 %v2780
        %v2813 = vunpack.c.l.b16 %v2781
        %v2814 = vunpack.c.l.b16 %v2782
        %v2815 = vunpack.c.l.b16 %v2783
        %v2816 = vunpack.c.l.b16 %v2784
        %v2817 = vpack.c.b16 %v2802, %v2801
        %v2818 = vpack.c.b16 %v2804, %v2803
        %v2819 = vpack.c.b16 %v2806, %v2805
        %v2820 = vpack.c.b16 %v2808, %v2807
        %v2821 = vpack.c.b16 %v2810, %v2809
        %v2822 = vpack.c.b16 %v2812, %v2811
        %v2823 = vpack.c.b16 %v2814, %v2813
        %v2824 = vpack.c.b16 %v2816, %v2815
        %2833 = vmatprep.subr.bf16.mxu0 0
        %2834 = vmatpush1.bf16.msra.mxu0 %v2817
        %2835 = vmatprep.subr.bf16.mxu0 0
        %2836 = vmatpush1.bf16.msra.mxu0 %v2818
        %2837 = vmatprep.subr.bf16.mxu0 0
        %2838 = vmatpush1.bf16.msra.mxu0 %v2819
        %2839 = vmatprep.subr.bf16.mxu0 0
        %2840 = vmatpush1.bf16.msra.mxu0 %v2820
        %2841 = vmatprep.subr.bf16.mxu0 0
        %2842 = vmatpush1.bf16.msra.mxu0 %v2821
        %2843 = vmatprep.subr.bf16.mxu0 0
        %2844 = vmatpush1.bf16.msra.mxu0 %v2822
        %2845 = vmatprep.subr.bf16.mxu0 0
        %2846 = vmatpush1.bf16.msra.mxu0 %v2823
        %2847 = vmatprep.subr.bf16.mxu0 0
        %2848 = vmatpush1.bf16.msra.mxu0 %v2824
        %2849 = vmatprep.subr.bf16.mxu0 0
        %2850 = vmatpush1.bf16.msra.mxu0 0
        %2851 = vmatprep.subr.bf16.mxu0 0
        %2852 = vmatpush1.bf16.msra.mxu0 0
        %2853 = vmatprep.subr.bf16.mxu0 0
        %2854 = vmatpush1.bf16.msra.mxu0 0
        %2855 = vmatprep.subr.bf16.mxu0 0
        %2856 = vmatpush1.bf16.msra.mxu0 0
        %2857 = vmatprep.subr.bf16.mxu0 0
        %2858 = vmatpush1.bf16.msra.mxu0 0
        %2859 = vmatprep.subr.bf16.mxu0 0
        %2860 = vmatpush1.bf16.msra.mxu0 0
        %2861 = vmatprep.subr.bf16.mxu0 0
        %2862 = vmatpush1.bf16.msra.mxu0 0
        %2863 = vmatprep.subr.bf16.mxu0 0
        %2864 = vmatpush1.bf16.msra.mxu0 0
        %2865 = vmatprep.mubr.bf16.mxu0 0
        %2866 = vmatmul.mubr.bf16.gmra.mrb[0].mxu0 %v2768
        %v2867 = vpop.f32.mrb[0].mxu0
        %v2868 = vadd.f32 0.0, %v2867
        %v2869 = vpop.f32.mrb[0].mxu0
        %v2870 = vpop.f32.mrb[0].mxu0
        %v2871 = vadd.f32 0.0, %v2870
        %v2872 = vpop.f32.mrb[0].mxu0
        %2873 = vdwg.mxu0
        %v2874 = vadd.f32 %v2600, %v2868
        %v2875 = vadd.f32 %v2601, %v2871
        %v2876 = vld [vmem:[%s655] sm:$0x1]
        %v2878 = vlaneseq
        %v2879 = vshrl.u32 %v2878, 7
        %v2880 = vsub.s32 0, %v2879
        %v2881 = vrot.slane %v2876, %v2880
        %v2883 = vadd.f32 %v2874, %v2881
        %v2884 = vadd.f32 %v2875, %v2881
        %2885 = vst.msk [vmem:[#allocation10] sm:$0xff] %vm671, %v2883
        %2886 = vst.msk [vmem:[#allocation10 + $0x8] sm:$0xff] %vm671, %v2884
        // Predicated region
        $region89: #{fwd.1} parent=67 // pred_check
          %p2887 = pneg %p373
        $region90: #{fwd.1} parent=67 // pred_check_branch
          %2889 = sbr.rel (%p2887) target = $region92
        $region91: #{fwd.1} parent=67 // pred_region
          %s2890 = smul.u32 2, %s35
          %s2892 = ssub.s32 256, 256
          %2893 = vsyncadd [#allocation4], %s2892
          %s2894 = smul.addr %s2890, 128
          %s2895 = scalar_lea.hbm %s12, %s2894
          %s2896 = sshll.u32 [#allocation10], 4
          %s2897 = int_to_ptr.vmem [resolvable:$true] %s2896
          %2902 = dma.vmem_to_hbm [thread:$0]  %s2897, 256, %s2895, [#allocation4], 128, 128, 8
        $region92: #{fwd.1} parent=67 // pred_fallthru
          _
        // Predicated region
        $region93: #{fwd.1} parent=67 // pred_check
          %p2903 = pneg %p373
        $region94: #{fwd.1} parent=67 // pred_check_branch
          %2905 = sbr.rel (%p2903) target = $region96
        $region95: #{fwd.1} parent=67 // pred_region
          %2906 = dma.done [#allocation4], 256
        $region96: #{fwd.1} parent=67 // pred_fallthru
          _
      $region68: #{fwd.1} parent=5 // pred_fallthru
        _
      %p2907 = scmp.le.s32.totalorder 2, %s26
      // Predicated region
      $region97: #{fwd.1} parent=5 // pred_check
        %p2908 = pneg %p2907
      $region98: #{fwd.1} parent=5 // pred_check_branch
        %2910 = sbr.rel (%p2908) target = $region100
      $region99: #{fwd.1} parent=5 // pred_region
        %s2911 = ssub.s32 %s26, 2
      $region100: #{fwd.1} parent=5 // pred_fallthru
        _
    $region6: #{fwd.1} parent=1 // loop_footer
      %s30 = sadd.s32 1, %s26
    $region7: #{fwd.1} parent=1 // loop_footer_branch
      %25 = sbr.rel target = $region3
    $region8: #{fwd.1} parent=1 // loop_exit
      _
    %2912 = vsyncpa [#allocation3], 1
    %s2913 = scalar_lea.sflag [#allocation3], 1
    %2914 = vsyncpa %s2913, 1
    %2915 = vsyncpa [#allocation6], 1
    %s2916 = scalar_lea.sflag [#allocation6], 1
    %2917 = vsyncpa %s2916, 1
    %2918 = vsyncpa [#allocation9], 1
    %s2919 = scalar_lea.sflag [#allocation9], 1
    %2920 = vsyncpa %s2919, 1
    %2921 = vsyncpa [#allocation4], 1
    %s2922 = scalar_lea.sflag [#allocation4], 1
    %2923 = vsyncpa %s2922, 1

</llo_original>
